<compile_context>
chip_gen: v7x
topology: tpu7x:2x2x1
jax: 0.10.0
libtpu: 0.0.40
codegen_flags: <defaults>
</compile_context>

<pallas_src>
import math
import jax
import jax.numpy as jnp
from jax import lax
from jax.experimental import pallas as pl
from jax.experimental.pallas import tpu as pltpu

KH = KW = 7
PAD = 3
CIN = 64
COUT = 3
COUT_PAD = 8                  # small lane padding of the 3 output channels
KDIM = KH * KW * CIN          # 3136-deep contraction (fills the MXU K dim)


def _im2col_matmul_kernel(a_ref, w_ref, b_ref, o_ref):
    # a_ref: (TM, KDIM)      bf16  im2col patches for TM output pixels
    # w_ref: (KDIM, COUT_PAD) bf16 reshaped conv weight
    # b_ref: (1, COUT_PAD)   f32   bias
    # o_ref: (TM, COUT_PAD)  f32
    acc = jnp.dot(a_ref[...], w_ref[...], preferred_element_type=jnp.float32)
    o_ref[...] = acc + b_ref[...]


def final_convolution(x_nchw, weight_oihw, bias, *, tile_m=256):
    """x_nchw: (N, 64, H, W) f32; weight_oihw: (3, 64, 7, 7); bias: (3,).
    Returns (N, 3, H, W) f32, same forward semantics as the PyTorch module
    (MXU operands are rounded to bf16, accumulation is f32)."""
    N, C, H, W = x_nchw.shape
    assert C == CIN

    # NCHW -> NHWC, zero-pad spatial dims ('same' padding for k=7, s=1, p=3).
    # TODO(synk): accept NHWC activations upstream to avoid this wrapper transpose.
    x_nhwc = jnp.transpose(x_nchw, (0, 2, 3, 1)).astype(jnp.float32)
    x_pad = jnp.pad(x_nhwc, ((0, 0), (PAD, PAD), (PAD, PAD), (0, 0)))

    # im2col patches, last dim ordered (kh, kw, cin) -> (N*H*W, 3136) in bf16.
    cols = jnp.stack(
        [x_pad[:, kh:kh + H, kw:kw + W, :] for kh in range(KH) for kw in range(KW)],
        axis=3)                                            # (N, H, W, 49, CIN)
    patches = cols.reshape(N * H * W, KDIM).astype(jnp.bfloat16)

    # Pad the pixel (M) dim to a multiple of the tile size; extra rows are zeros
    # and get discarded after the kernel.
    M = N * H * W
    M_pad = pl.cdiv(M, tile_m) * tile_m
    if M_pad != M:
        patches = jnp.pad(patches, ((0, M_pad - M), (0, 0)))

    # OIHW -> (KH, KW, CIN, COUT) -> (KDIM, COUT_PAD), matching the im2col order.
    w_mat = jnp.transpose(weight_oihw.astype(jnp.float32), (2, 3, 1, 0))
    w_mat = w_mat.reshape(KDIM, COUT)
    w_mat = jnp.pad(w_mat, ((0, 0), (0, COUT_PAD - COUT))).astype(jnp.bfloat16)
    b_pad = jnp.pad(bias.astype(jnp.float32), (0, COUT_PAD - COUT)).reshape(1, COUT_PAD)

    out_flat = pl.pallas_call(
        _im2col_matmul_kernel,
        out_shape=jax.ShapeDtypeStruct((M_pad, COUT_PAD), jnp.float32),
        grid_spec=pltpu.PrefetchScalarGridSpec(
            num_scalar_prefetch=0,
            grid=(M_pad // tile_m,),
            in_specs=[
                pl.BlockSpec((tile_m, KDIM), lambda i: (i, 0)),
                pl.BlockSpec((KDIM, COUT_PAD), lambda i: (0, 0)),
                pl.BlockSpec((1, COUT_PAD), lambda i: (0, 0)),
            ],
            out_specs=pl.BlockSpec((tile_m, COUT_PAD), lambda i: (i, 0)),
        ),
        compiler_params=pltpu.CompilerParams(
            dimension_semantics=("parallel",)),
    )(patches, w_mat, b_pad)

    # Drop padded rows / channels and convert back to NCHW.
    out_nhwc = out_flat[:M, :COUT].reshape(N, H, W, COUT)
    return jnp.transpose(out_nhwc, (0, 3, 1, 2))


def init_params(key):
    """Matches the PyTorch module's `initial()`:
    weight ~ N(0, sqrt(2 / (kh * kw * out_channels))); bias uses PyTorch's
    default Conv2d init U(-1/sqrt(fan_in), 1/sqrt(fan_in))."""
    w_key, b_key = jax.random.split(key)
    std = math.sqrt(2.0 / (KH * KW * COUT))
    weight = std * jax.random.normal(w_key, (COUT, CIN, KH, KW), jnp.float32)
    bound = 1.0 / math.sqrt(CIN * KH * KW)
    bias = jax.random.uniform(b_key, (COUT,), jnp.float32, -bound, bound)
    return weight, bias


if __name__ == "__main__":
    key = jax.random.PRNGKey(0)
    pkey, xkey = jax.random.split(key)
    weight, bias = init_params(pkey)

    # Small NCHW input consistent with the module: (batch=2, channels=64, 16x16).
    x = jax.random.normal(xkey, (2, CIN, 16, 16), jnp.float32)

    out = jax.block_until_ready(final_convolution(x, weight, bias))
    assert out.shape == (2, COUT, 16, 16)

    # Tight check vs a reference using the SAME bf16-rounded operands
    # (isolates any kernel bug from the intentional bf16 rounding).
    x_bf = x.astype(jnp.bfloat16).astype(jnp.float32)
    w_bf = weight.astype(jnp.bfloat16).astype(jnp.float32)
    ref_bf = lax.conv_general_dilated(
        x_bf, w_bf, window_strides=(1, 1), padding=[(PAD, PAD), (PAD, PAD)],
        dimension_numbers=("NCHW", "OIHW", "NCHW"),
        precision=lax.Precision.HIGHEST) + bias.reshape(1, COUT, 1, 1)
    assert jnp.allclose(out, ref_bf, atol=5e-3, rtol=5e-3), (
        float(jnp.max(jnp.abs(out - ref_bf))))

    # Loose semantic check vs the exact f32 PyTorch-equivalent reference
    # (bf16 MXU operands over a 3136-deep contraction => ~1e-2 relative error).
    ref = lax.conv_general_dilated(
        x, weight, window_strides=(1, 1), padding=[(PAD, PAD), (PAD, PAD)],
        dimension_numbers=("NCHW", "OIHW", "NCHW"),
        precision=lax.Precision.HIGHEST) + bias.reshape(1, COUT, 1, 1)
    assert jnp.allclose(out, ref, atol=1e-1, rtol=5e-2), (
        float(jnp.max(jnp.abs(out - ref))))

    print("KERNEL_OK")
</pallas_src>

<mosaic_0001>
module attributes {stable_mosaic.version = 11 : i64} {
  func.func @_im2col_matmul_kernel(%arg0: i32, %arg1: memref<256x3136xbf16, #tpu.memory_space<vmem>>, %arg2: memref<3136x8xbf16, #tpu.memory_space<vmem>>, %arg3: memref<1x8xf32, #tpu.memory_space<vmem>>, %arg4: memref<256x8xf32, #tpu.memory_space<vmem>>) attributes {dimension_semantics = [#tpu.dimension_semantics<parallel>], iteration_bounds = array<i64: 2>, scalar_prefetch = 0 : i64, scratch_operands = 0 : i64, tpu.core_type = #tpu.core_type<tc>, window_params = [{transform_indices = @transform_0, window_bounds = array<i64: 256, 3136>}, {pipeline_mode = #tpu.pipeline_mode<synchronous>, transform_indices = @transform_1, window_bounds = array<i64: 3136, 8>}, {pipeline_mode = #tpu.pipeline_mode<synchronous>, transform_indices = @transform_2, window_bounds = array<i64: 1, 8>}, {transform_indices = @transform_3, window_bounds = array<i64: 256, 8>}]} {
    %c0 = arith.constant 0 : index
    %c0_0 = arith.constant 0 : index
    %0 = vector.load %arg1[%c0, %c0_0] : memref<256x3136xbf16, #tpu.memory_space<vmem>>, vector<256x3136xbf16>
    %c0_1 = arith.constant 0 : index
    %c0_2 = arith.constant 0 : index
    %1 = vector.load %arg2[%c0_1, %c0_2] : memref<3136x8xbf16, #tpu.memory_space<vmem>>, vector<3136x8xbf16>
    %cst = arith.constant dense<0.000000e+00> : vector<256x8xf32>
    %2 = tpu.matmul %0, %1, %cst {dimension_numbers = #tpu.dot_dimension_numbers<[1], [0], [0], [1], [0, 0, 1, 1], [], []>} : vector<256x3136xbf16>, vector<3136x8xbf16>, vector<256x8xf32> -> vector<256x8xf32>
    %c0_3 = arith.constant 0 : index
    %c0_4 = arith.constant 0 : index
    %3 = vector.load %arg3[%c0_3, %c0_4] : memref<1x8xf32, #tpu.memory_space<vmem>>, vector<1x8xf32>
    %4 = vector.broadcast %3 : vector<1x8xf32> to vector<256x8xf32>
    %5 = arith.addf %2, %4 : vector<256x8xf32>
    %c0_5 = arith.constant 0 : index
    %c0_6 = arith.constant 0 : index
    %6 = vector.load %arg4[%c0_5, %c0_6] : memref<256x8xf32, #tpu.memory_space<vmem>>, vector<256x8xf32>
    tpu.vector_store %arg4[%c0_5, %c0_6], %5 {strides = array<i32>} : memref<256x8xf32, #tpu.memory_space<vmem>>, vector<256x8xf32>,
    return
  }
  func.func @transform_0(%arg0: i32) -> (i32, i32) {
    %c0_i32 = arith.constant 0 : i32
    %c0_i32_0 = arith.constant 0 : i32
    return %arg0, %c0_i32 : i32, i32
  }
  func.func @transform_1(%arg0: i32) -> (i32, i32) {
    %c0_i32 = arith.constant 0 : i32
    %c0_i32_0 = arith.constant 0 : i32
    %c0_i32_1 = arith.constant 0 : i32
    return %c0_i32, %c0_i32_0 : i32, i32
  }
  func.func @transform_2(%arg0: i32) -> (i32, i32) {
    %c0_i32 = arith.constant 0 : i32
    %c0_i32_0 = arith.constant 0 : i32
    %c0_i32_1 = arith.constant 0 : i32
    return %c0_i32, %c0_i32_0 : i32, i32
  }
  func.func @transform_3(%arg0: i32) -> (i32, i32) {
    %c0_i32 = arith.constant 0 : i32
    %c0_i32_0 = arith.constant 0 : i32
    return %arg0, %c0_i32 : i32, i32
  }
}

</mosaic_0001>

<llo_original>
// kernel: tpu_custom_call.1
$region0: #{tpu_custom_call.1}
  #allocation0 [shape = 'u32[]', space=smem, size = 0x4, offset = 0x4, fixed_abs, tag = 'smem constant byte address 0x4 - core index']
  #allocation1 [shape = 'u32[144,128]{1,0:T(1,128)}', space=vmem, size = 0x12000, scoped, tag = 'internal scratch']
  %s0 = inlined_call_operand.vmem [shape: bf16[512,3136], index: 0, kind: input, shape index: {}]
  %s1 = inlined_call_operand.vmem [shape: bf16[3136,8], index: 1, kind: input, shape index: {}]
  %s2 = inlined_call_operand.vmem [shape: f32[1,8], index: 2, kind: input, shape index: {}]
  %s3 = inlined_call_operand.vmem [shape: f32[512,8], index: 3, kind: output, shape index: {}]
  %s4 = sld [smem:[#allocation0]]
  $region45: #{tpu_custom_call.1} parent=0
    _
  %s6 = ssub.s32 1, %s4
  %s7 = scalar_select 0, %s6, %s4
  loop: start=0, step=1, limit=4
  $region2: #{tpu_custom_call.1} parent=0 // loop_pre_header
    _
  $region3: #{tpu_custom_call.1} parent=0 // loop_header
    %s9 = sphi 0, %s13
    %p10 = scmp.ge.s32.totalorder %s9, 4
    %s19 = sphi 0, %s21
    %s22 = sphi 0, %s19
    %s23 = sphi 0, %s22
    %s39 = sphi 0, %s23
    %s43 = sphi 0, %s43
    %s45 = sphi 0, %s43
    %s46 = sphi 0, %s45
    %s60 = sphi 0, %s46
    %s64 = sphi 0, %s64
    %s66 = sphi 0, %s64
    %s67 = sphi 0, %s66
    %s81 = sphi 0, %s67
    %s87 = sphi 0, %s89
    %s90 = sphi 0, %s87
    %s91 = sphi 0, %s90
    %s107 = sphi 0, %s91
  $region4: #{tpu_custom_call.1} parent=0 // loop_header_branch
    %12 = sbr.rel (%p10) target = $region8
  $region5: #{tpu_custom_call.1} parent=0 // loop_body
    %s14 = ssub.s32 %s9, 1
    %s15 = ssub.s32 %s9, 2
    %s16 = sadd.s32 %s9, 1
    %s17 = ssub.s32 %s9, %s16
    %p18 = scmp.eq.s32.totalorder %s17, 0
    %s20 = sadd.s32 %s19, 1
    %s21 = scalar_select %p18, %s19, %s20
    %p24 = pneg %p18
    %p25 = scmp.eq.s32.totalorder %s9, 1
    %p26 = por %p24, %p25
    %p27 = scmp.ne.s32.totalorder %s19, %s22
    %p28 = scmp.eq.s32.totalorder %s9, 0
    %p29 = por %p27, %p28
    %p30 = scmp.ne.s32.totalorder %s19, %s22
    %p31 = scmp.eq.s32.totalorder %s14, 1
    %p32 = por %p30, %p31
    %p33 = scmp.ne.s32.totalorder %s22, %s23
    %p34 = scmp.eq.s32.totalorder %s14, 0
    %p35 = por %p33, %p34
    %p36 = scmp.ne.s32.totalorder %s22, %s23
    %p37 = scmp.eq.s32.totalorder %s15, 1
    %p38 = por %p36, %p37
    %p40 = scmp.ne.s32.totalorder %s23, %s39
    %p41 = scmp.eq.s32.totalorder %s15, 0
    %p42 = por %p40, %p41
    %s44 = sadd.s32 %s43, 1
    %p47 = scmp.eq.s32.totalorder %s9, 1
    %p48 = scmp.ne.s32.totalorder %s43, %s45
    %p49 = scmp.eq.s32.totalorder %s9, 0
    %p50 = por %p48, %p49
    %p51 = scmp.ne.s32.totalorder %s43, %s45
    %p52 = scmp.eq.s32.totalorder %s14, 1
    %p53 = por %p51, %p52
    %p54 = scmp.ne.s32.totalorder %s45, %s46
    %p55 = scmp.eq.s32.totalorder %s14, 0
    %p56 = por %p54, %p55
    %p57 = scmp.ne.s32.totalorder %s45, %s46
    %p58 = scmp.eq.s32.totalorder %s15, 1
    %p59 = por %p57, %p58
    %p61 = scmp.ne.s32.totalorder %s46, %s60
    %p62 = scmp.eq.s32.totalorder %s15, 0
    %p63 = por %p61, %p62
    %s65 = sadd.s32 %s64, 1
    %p68 = scmp.eq.s32.totalorder %s9, 1
    %p69 = scmp.ne.s32.totalorder %s64, %s66
    %p70 = scmp.eq.s32.totalorder %s9, 0
    %p71 = por %p69, %p70
    %p72 = scmp.ne.s32.totalorder %s64, %s66
    %p73 = scmp.eq.s32.totalorder %s14, 1
    %p74 = por %p72, %p73
    %p75 = scmp.ne.s32.totalorder %s66, %s67
    %p76 = scmp.eq.s32.totalorder %s14, 0
    %p77 = por %p75, %p76
    %p78 = scmp.ne.s32.totalorder %s66, %s67
    %p79 = scmp.eq.s32.totalorder %s15, 1
    %p80 = por %p78, %p79
    %p82 = scmp.ne.s32.totalorder %s67, %s81
    %p83 = scmp.eq.s32.totalorder %s15, 0
    %p84 = por %p82, %p83
    %s85 = ssub.s32 %s9, %s16
    %p86 = scmp.eq.s32.totalorder %s85, 0
    %s88 = sadd.s32 %s87, 1
    %s89 = scalar_select %p86, %s87, %s88
    %p92 = pneg %p86
    %p93 = scmp.eq.s32.totalorder %s9, 1
    %p94 = por %p92, %p93
    %p95 = scmp.ne.s32.totalorder %s87, %s90
    %p96 = scmp.eq.s32.totalorder %s9, 0
    %p97 = por %p95, %p96
    %p98 = scmp.ne.s32.totalorder %s87, %s90
    %p99 = scmp.eq.s32.totalorder %s14, 1
    %p100 = por %p98, %p99
    %p101 = scmp.ne.s32.totalorder %s90, %s91
    %p102 = scmp.eq.s32.totalorder %s14, 0
    %p103 = por %p101, %p102
    %p104 = scmp.ne.s32.totalorder %s90, %s91
    %p105 = scmp.eq.s32.totalorder %s15, 1
    %p106 = por %p104, %p105
    %p108 = scmp.ne.s32.totalorder %s91, %s107
    %p109 = scmp.eq.s32.totalorder %s15, 0
    %p110 = por %p108, %p109
    %p111 = scmp.le.s32.totalorder 1, %s9
    %p112 = scmp.lt.s32.totalorder %s9, 3
    %p113 = pnand %p111, %p112
    %p114 = pneg %p113
    // Predicated region
    $region9: #{tpu_custom_call.1} parent=5 // pred_check
      _
    $region10: #{tpu_custom_call.1} parent=5 // pred_check_branch
      %116 = sbr.rel (%p113) target = $region12
    $region11: #{tpu_custom_call.1} parent=5 // pred_region
      %s117 = ssub.s32 %s9, 1
      // Predicated region
      $region13: #{tpu_custom_call.1} parent=11 // pred_check
        %p118 = pneg %p56
      $region14: #{tpu_custom_call.1} parent=11 // pred_check_branch
        %120 = sbr.rel (%p118) target = $region16
      $region15: #{tpu_custom_call.1} parent=11 // pred_region
        _
      $region16: #{tpu_custom_call.1} parent=11 // pred_fallthru
        _
      // Predicated region
      $region17: #{tpu_custom_call.1} parent=11 // pred_check
        %p121 = pneg %p77
      $region18: #{tpu_custom_call.1} parent=11 // pred_check_branch
        %123 = sbr.rel (%p121) target = $region20
      $region19: #{tpu_custom_call.1} parent=11 // pred_region
        _
      $region20: #{tpu_custom_call.1} parent=11 // pred_fallthru
        _
    $region12: #{tpu_custom_call.1} parent=5 // pred_fallthru
      _
    %p124 = scmp.lt.s32.totalorder %s9, 2
    // Predicated region
    $region21: #{tpu_custom_call.1} parent=5 // pred_check
      %p125 = pneg %p124
    $region22: #{tpu_custom_call.1} parent=5 // pred_check_branch
      %127 = sbr.rel (%p125) target = $region24
    $region23: #{tpu_custom_call.1} parent=5 // pred_region
      // Predicated region
      $region25: #{tpu_custom_call.1} parent=23 // pred_check
        %p128 = pneg %p29
      $region26: #{tpu_custom_call.1} parent=23 // pred_check_branch
        %130 = sbr.rel (%p128) target = $region28
      $region27: #{tpu_custom_call.1} parent=23 // pred_region
        %s131 = smul.u32 32, %s9
        %p132 = scmp.lt.s32.totalorder %s131, 63
        %s133 = scalar_select %p132, %s131, 63
        %s134 = smul.addr %s133, 25
        %s135 = smul.addr %s134, 4
        %s136 = scalar_lea.vmem %s0, %s135
        %s137 = smul.u32 32, %s9
      $region28: #{tpu_custom_call.1} parent=23 // pred_fallthru
        _
    $region24: #{tpu_custom_call.1} parent=5 // pred_fallthru
      _
    %p138 = scmp.le.s32.totalorder 1, %s9
    %p139 = scmp.lt.s32.totalorder %s9, 3
    %p140 = pnand %p138, %p139
    %p141 = pneg %p140
    // Predicated region
    $region29: #{tpu_custom_call.1} parent=5 // pred_check
      _
    $region30: #{tpu_custom_call.1} parent=5 // pred_check_branch
      %143 = sbr.rel (%p140) target = $region32
    $region31: #{tpu_custom_call.1} parent=5 // pred_region
      %s144 = ssub.s32 %s9, 1
      %s145 = smul.u32 32, %s14
      %p146 = scmp.lt.s32.totalorder %s145, 63
      %s147 = scalar_select %p146, %s145, 63
      %s148 = smul.addr %s147, 25
      %s149 = smul.addr %s148, 4
      %s150 = scalar_lea.vmem %s0, %s149
      %p151 = pneg %p35
      %p152 = pneg %p32
      %p153 = pneg %p56
      %p154 = pneg %p53
      %p155 = pneg %p77
      %p156 = pneg %p74
      %p157 = pneg %p103
      %p158 = pneg %p100
      %s159 = smul.u32 32, %s14
      %p160 = scmp.lt.s32.totalorder %s159, 63
      %s161 = scalar_select %p160, %s159, 63
      %s162 = smul.addr %s161, 8
      %s163 = scalar_lea.vmem %s3, %s162
      %s164 = smul.u32 32, %s14
      %p165 = scmp.lt.s32.totalorder %s164, 63
      %s166 = scalar_select %p165, %s164, 63
      %s167 = smul.addr %s166, 25
      %s168 = smul.addr %s167, 4
      %s169 = scalar_lea.vmem %s0, %s168
      %s170 = smul.u32 32, %s14
      %s171 = smul.u32 32, %s14
      %p172 = scmp.lt.s32.totalorder %s171, 63
      %s173 = scalar_select %p172, %s171, 63
      %s174 = smul.addr %s173, 8
      %s175 = scalar_lea.vmem %s3, %s174
      %s176 = smul.u32 32, %s14
      %v178 = vld [vmem:[%s169] sm:$0xff]
      %v179 = vld [vmem:[%s169 + $0x8] sm:$0xff]
      %v180 = vld [vmem:[%s169 + $0x10] sm:$0xff]
      %v181 = vld [vmem:[%s169 + $0x18] sm:$0xff]
      %v182 = vld [vmem:[%s169 + $0x20] sm:$0xff]
      %v183 = vld [vmem:[%s169 + $0x28] sm:$0xff]
      %v184 = vld [vmem:[%s169 + $0x30] sm:$0xff]
      %v185 = vld [vmem:[%s169 + $0x38] sm:$0xff]
      %v186 = vld [vmem:[%s169 + $0x40] sm:$0xff]
      %v187 = vld [vmem:[%s169 + $0x48] sm:$0xff]
      %v188 = vld [vmem:[%s169 + $0x50] sm:$0xff]
      %v189 = vld [vmem:[%s169 + $0x58] sm:$0xff]
      %v190 = vld [vmem:[%s169 + $0x60] sm:$0xf]
      %v191 = vld [vmem:[%s169 + $0x64] sm:$0xff]
      %v192 = vld [vmem:[%s169 + $0x6c] sm:$0xff]
      %v193 = vld [vmem:[%s169 + $0x74] sm:$0xff]
      %v194 = vld [vmem:[%s169 + $0x7c] sm:$0xff]
      %v195 = vld [vmem:[%s169 + $0x84] sm:$0xff]
      %v196 = vld [vmem:[%s169 + $0x8c] sm:$0xff]
      %v197 = vld [vmem:[%s169 + $0x94] sm:$0xff]
      %v198 = vld [vmem:[%s169 + $0x9c] sm:$0xff]
      %v199 = vld [vmem:[%s169 + $0xa4] sm:$0xff]
      %v200 = vld [vmem:[%s169 + $0xac] sm:$0xff]
      %v201 = vld [vmem:[%s169 + $0xb4] sm:$0xff]
      %v202 = vld [vmem:[%s169 + $0xbc] sm:$0xff]
      %v203 = vld [vmem:[%s169 + $0xc4] sm:$0xf]
      %v204 = vld [vmem:[%s169 + $0xc8] sm:$0xff]
      %v205 = vld [vmem:[%s169 + $0xd0] sm:$0xff]
      %v206 = vld [vmem:[%s169 + $0xd8] sm:$0xff]
      %v207 = vld [vmem:[%s169 + $0xe0] sm:$0xff]
      %v208 = vld [vmem:[%s169 + $0xe8] sm:$0xff]
      %v209 = vld [vmem:[%s169 + $0xf0] sm:$0xff]
      %v210 = vld [vmem:[%s169 + $0xf8] sm:$0xff]
      %v211 = vld [vmem:[%s169 + $0x100] sm:$0xff]
      %v212 = vld [vmem:[%s169 + $0x108] sm:$0xff]
      %v213 = vld [vmem:[%s169 + $0x110] sm:$0xff]
      %v214 = vld [vmem:[%s169 + $0x118] sm:$0xff]
      %v215 = vld [vmem:[%s169 + $0x120] sm:$0xff]
      %v216 = vld [vmem:[%s169 + $0x128] sm:$0xf]
      %v217 = vld [vmem:[%s169 + $0x12c] sm:$0xff]
      %v218 = vld [vmem:[%s169 + $0x134] sm:$0xff]
      %v219 = vld [vmem:[%s169 + $0x13c] sm:$0xff]
      %v220 = vld [vmem:[%s169 + $0x144] sm:$0xff]
      %v221 = vld [vmem:[%s169 + $0x14c] sm:$0xff]
      %v222 = vld [vmem:[%s169 + $0x154] sm:$0xff]
      %v223 = vld [vmem:[%s169 + $0x15c] sm:$0xff]
      %v224 = vld [vmem:[%s169 + $0x164] sm:$0xff]
      %v225 = vld [vmem:[%s169 + $0x16c] sm:$0xff]
      %v226 = vld [vmem:[%s169 + $0x174] sm:$0xff]
      %v227 = vld [vmem:[%s169 + $0x17c] sm:$0xff]
      %v228 = vld [vmem:[%s169 + $0x184] sm:$0xff]
      %v229 = vld [vmem:[%s169 + $0x18c] sm:$0xf]
      %v230 = vld [vmem:[%s169 + $0x190] sm:$0xff]
      %v231 = vld [vmem:[%s169 + $0x198] sm:$0xff]
      %v232 = vld [vmem:[%s169 + $0x1a0] sm:$0xff]
      %v233 = vld [vmem:[%s169 + $0x1a8] sm:$0xff]
      %v234 = vld [vmem:[%s169 + $0x1b0] sm:$0xff]
      %v235 = vld [vmem:[%s169 + $0x1b8] sm:$0xff]
      %v236 = vld [vmem:[%s169 + $0x1c0] sm:$0xff]
      %v237 = vld [vmem:[%s169 + $0x1c8] sm:$0xff]
      %v238 = vld [vmem:[%s169 + $0x1d0] sm:$0xff]
      %v239 = vld [vmem:[%s169 + $0x1d8] sm:$0xff]
      %v240 = vld [vmem:[%s169 + $0x1e0] sm:$0xff]
      %v241 = vld [vmem:[%s169 + $0x1e8] sm:$0xff]
      %v242 = vld [vmem:[%s169 + $0x1f0] sm:$0xf]
      %v243 = vld [vmem:[%s169 + $0x1f4] sm:$0xff]
      %v244 = vld [vmem:[%s169 + $0x1fc] sm:$0xff]
      %v245 = vld [vmem:[%s169 + $0x204] sm:$0xff]
      %v246 = vld [vmem:[%s169 + $0x20c] sm:$0xff]
      %v247 = vld [vmem:[%s169 + $0x214] sm:$0xff]
      %v248 = vld [vmem:[%s169 + $0x21c] sm:$0xff]
      %v249 = vld [vmem:[%s169 + $0x224] sm:$0xff]
      %v250 = vld [vmem:[%s169 + $0x22c] sm:$0xff]
      %v251 = vld [vmem:[%s169 + $0x234] sm:$0xff]
      %v252 = vld [vmem:[%s169 + $0x23c] sm:$0xff]
      %v253 = vld [vmem:[%s169 + $0x244] sm:$0xff]
      %v254 = vld [vmem:[%s169 + $0x24c] sm:$0xff]
      %v255 = vld [vmem:[%s169 + $0x254] sm:$0xf]
      %v256 = vld [vmem:[%s169 + $0x258] sm:$0xff]
      %v257 = vld [vmem:[%s169 + $0x260] sm:$0xff]
      %v258 = vld [vmem:[%s169 + $0x268] sm:$0xff]
      %v259 = vld [vmem:[%s169 + $0x270] sm:$0xff]
      %v260 = vld [vmem:[%s169 + $0x278] sm:$0xff]
      %v261 = vld [vmem:[%s169 + $0x280] sm:$0xff]
      %v262 = vld [vmem:[%s169 + $0x288] sm:$0xff]
      %v263 = vld [vmem:[%s169 + $0x290] sm:$0xff]
      %v264 = vld [vmem:[%s169 + $0x298] sm:$0xff]
      %v265 = vld [vmem:[%s169 + $0x2a0] sm:$0xff]
      %v266 = vld [vmem:[%s169 + $0x2a8] sm:$0xff]
      %v267 = vld [vmem:[%s169 + $0x2b0] sm:$0xff]
      %v268 = vld [vmem:[%s169 + $0x2b8] sm:$0xf]
      %v269 = vld [vmem:[%s169 + $0x2bc] sm:$0xff]
      %v270 = vld [vmem:[%s169 + $0x2c4] sm:$0xff]
      %v271 = vld [vmem:[%s169 + $0x2cc] sm:$0xff]
      %v272 = vld [vmem:[%s169 + $0x2d4] sm:$0xff]
      %v273 = vld [vmem:[%s169 + $0x2dc] sm:$0xff]
      %v274 = vld [vmem:[%s169 + $0x2e4] sm:$0xff]
      %v275 = vld [vmem:[%s169 + $0x2ec] sm:$0xff]
      %v276 = vld [vmem:[%s169 + $0x2f4] sm:$0xff]
      %v277 = vld [vmem:[%s169 + $0x2fc] sm:$0xff]
      %v278 = vld [vmem:[%s169 + $0x304] sm:$0xff]
      %v279 = vld [vmem:[%s169 + $0x30c] sm:$0xff]
      %v280 = vld [vmem:[%s169 + $0x314] sm:$0xff]
      %v281 = vld [vmem:[%s169 + $0x31c] sm:$0xf]
      %v282 = vld [vmem:[%s169 + $0x320] sm:$0xff]
      %v283 = vld [vmem:[%s169 + $0x328] sm:$0xff]
      %v284 = vld [vmem:[%s169 + $0x330] sm:$0xff]
      %v285 = vld [vmem:[%s169 + $0x338] sm:$0xff]
      %v286 = vld [vmem:[%s169 + $0x340] sm:$0xff]
      %v287 = vld [vmem:[%s169 + $0x348] sm:$0xff]
      %v288 = vld [vmem:[%s169 + $0x350] sm:$0xff]
      %v289 = vld [vmem:[%s169 + $0x358] sm:$0xff]
      %v290 = vld [vmem:[%s169 + $0x360] sm:$0xff]
      %v291 = vld [vmem:[%s169 + $0x368] sm:$0xff]
      %v292 = vld [vmem:[%s169 + $0x370] sm:$0xff]
      %v293 = vld [vmem:[%s169 + $0x378] sm:$0xff]
      %v294 = vld [vmem:[%s169 + $0x380] sm:$0xf]
      %v295 = vld [vmem:[%s169 + $0x384] sm:$0xff]
      %v296 = vld [vmem:[%s169 + $0x38c] sm:$0xff]
      %v297 = vld [vmem:[%s169 + $0x394] sm:$0xff]
      %v298 = vld [vmem:[%s169 + $0x39c] sm:$0xff]
      %v299 = vld [vmem:[%s169 + $0x3a4] sm:$0xff]
      %v300 = vld [vmem:[%s169 + $0x3ac] sm:$0xff]
      %v301 = vld [vmem:[%s169 + $0x3b4] sm:$0xff]
      %v302 = vld [vmem:[%s169 + $0x3bc] sm:$0xff]
      %v303 = vld [vmem:[%s169 + $0x3c4] sm:$0xff]
      %v304 = vld [vmem:[%s169 + $0x3cc] sm:$0xff]
      %v305 = vld [vmem:[%s169 + $0x3d4] sm:$0xff]
      %v306 = vld [vmem:[%s169 + $0x3dc] sm:$0xff]
      %v307 = vld [vmem:[%s169 + $0x3e4] sm:$0xf]
      %v308 = vld [vmem:[%s169 + $0x3e8] sm:$0xff]
      %v309 = vld [vmem:[%s169 + $0x3f0] sm:$0xff]
      %v310 = vld [vmem:[%s169 + $0x3f8] sm:$0xff]
      %v311 = vld [vmem:[%s169 + $0x400] sm:$0xff]
      %v312 = vld [vmem:[%s169 + $0x408] sm:$0xff]
      %v313 = vld [vmem:[%s169 + $0x410] sm:$0xff]
      %v314 = vld [vmem:[%s169 + $0x418] sm:$0xff]
      %v315 = vld [vmem:[%s169 + $0x420] sm:$0xff]
      %v316 = vld [vmem:[%s169 + $0x428] sm:$0xff]
      %v317 = vld [vmem:[%s169 + $0x430] sm:$0xff]
      %v318 = vld [vmem:[%s169 + $0x438] sm:$0xff]
      %v319 = vld [vmem:[%s169 + $0x440] sm:$0xff]
      %v320 = vld [vmem:[%s169 + $0x448] sm:$0xf]
      %v321 = vld [vmem:[%s169 + $0x44c] sm:$0xff]
      %v322 = vld [vmem:[%s169 + $0x454] sm:$0xff]
      %v323 = vld [vmem:[%s169 + $0x45c] sm:$0xff]
      %v324 = vld [vmem:[%s169 + $0x464] sm:$0xff]
      %v325 = vld [vmem:[%s169 + $0x46c] sm:$0xff]
      %v326 = vld [vmem:[%s169 + $0x474] sm:$0xff]
      %v327 = vld [vmem:[%s169 + $0x47c] sm:$0xff]
      %v328 = vld [vmem:[%s169 + $0x484] sm:$0xff]
      %v329 = vld [vmem:[%s169 + $0x48c] sm:$0xff]
      %v330 = vld [vmem:[%s169 + $0x494] sm:$0xff]
      %v331 = vld [vmem:[%s169 + $0x49c] sm:$0xff]
      %v332 = vld [vmem:[%s169 + $0x4a4] sm:$0xff]
      %v333 = vld [vmem:[%s169 + $0x4ac] sm:$0xf]
      %v334 = vld [vmem:[%s169 + $0x4b0] sm:$0xff]
      %v335 = vld [vmem:[%s169 + $0x4b8] sm:$0xff]
      %v336 = vld [vmem:[%s169 + $0x4c0] sm:$0xff]
      %v337 = vld [vmem:[%s169 + $0x4c8] sm:$0xff]
      %v338 = vld [vmem:[%s169 + $0x4d0] sm:$0xff]
      %v339 = vld [vmem:[%s169 + $0x4d8] sm:$0xff]
      %v340 = vld [vmem:[%s169 + $0x4e0] sm:$0xff]
      %v341 = vld [vmem:[%s169 + $0x4e8] sm:$0xff]
      %v342 = vld [vmem:[%s169 + $0x4f0] sm:$0xff]
      %v343 = vld [vmem:[%s169 + $0x4f8] sm:$0xff]
      %v344 = vld [vmem:[%s169 + $0x500] sm:$0xff]
      %v345 = vld [vmem:[%s169 + $0x508] sm:$0xff]
      %v346 = vld [vmem:[%s169 + $0x510] sm:$0xf]
      %v347 = vld [vmem:[%s169 + $0x514] sm:$0xff]
      %v348 = vld [vmem:[%s169 + $0x51c] sm:$0xff]
      %v349 = vld [vmem:[%s169 + $0x524] sm:$0xff]
      %v350 = vld [vmem:[%s169 + $0x52c] sm:$0xff]
      %v351 = vld [vmem:[%s169 + $0x534] sm:$0xff]
      %v352 = vld [vmem:[%s169 + $0x53c] sm:$0xff]
      %v353 = vld [vmem:[%s169 + $0x544] sm:$0xff]
      %v354 = vld [vmem:[%s169 + $0x54c] sm:$0xff]
      %v355 = vld [vmem:[%s169 + $0x554] sm:$0xff]
      %v356 = vld [vmem:[%s169 + $0x55c] sm:$0xff]
      %v357 = vld [vmem:[%s169 + $0x564] sm:$0xff]
      %v358 = vld [vmem:[%s169 + $0x56c] sm:$0xff]
      %v359 = vld [vmem:[%s169 + $0x574] sm:$0xf]
      %v360 = vld [vmem:[%s169 + $0x578] sm:$0xff]
      %v361 = vld [vmem:[%s169 + $0x580] sm:$0xff]
      %v362 = vld [vmem:[%s169 + $0x588] sm:$0xff]
      %v363 = vld [vmem:[%s169 + $0x590] sm:$0xff]
      %v364 = vld [vmem:[%s169 + $0x598] sm:$0xff]
      %v365 = vld [vmem:[%s169 + $0x5a0] sm:$0xff]
      %v366 = vld [vmem:[%s169 + $0x5a8] sm:$0xff]
      %v367 = vld [vmem:[%s169 + $0x5b0] sm:$0xff]
      %v368 = vld [vmem:[%s169 + $0x5b8] sm:$0xff]
      %v369 = vld [vmem:[%s169 + $0x5c0] sm:$0xff]
      %v370 = vld [vmem:[%s169 + $0x5c8] sm:$0xff]
      %v371 = vld [vmem:[%s169 + $0x5d0] sm:$0xff]
      %v372 = vld [vmem:[%s169 + $0x5d8] sm:$0xf]
      %v373 = vld [vmem:[%s169 + $0x5dc] sm:$0xff]
      %v374 = vld [vmem:[%s169 + $0x5e4] sm:$0xff]
      %v375 = vld [vmem:[%s169 + $0x5ec] sm:$0xff]
      %v376 = vld [vmem:[%s169 + $0x5f4] sm:$0xff]
      %v377 = vld [vmem:[%s169 + $0x5fc] sm:$0xff]
      %v378 = vld [vmem:[%s169 + $0x604] sm:$0xff]
      %v379 = vld [vmem:[%s169 + $0x60c] sm:$0xff]
      %v380 = vld [vmem:[%s169 + $0x614] sm:$0xff]
      %v381 = vld [vmem:[%s169 + $0x61c] sm:$0xff]
      %v382 = vld [vmem:[%s169 + $0x624] sm:$0xff]
      %v383 = vld [vmem:[%s169 + $0x62c] sm:$0xff]
      %v384 = vld [vmem:[%s169 + $0x634] sm:$0xff]
      %v385 = vld [vmem:[%s169 + $0x63c] sm:$0xf]
      %v386 = vld [vmem:[%s169 + $0x640] sm:$0xff]
      %v387 = vld [vmem:[%s169 + $0x648] sm:$0xff]
      %v388 = vld [vmem:[%s169 + $0x650] sm:$0xff]
      %v389 = vld [vmem:[%s169 + $0x658] sm:$0xff]
      %v390 = vld [vmem:[%s169 + $0x660] sm:$0xff]
      %v391 = vld [vmem:[%s169 + $0x668] sm:$0xff]
      %v392 = vld [vmem:[%s169 + $0x670] sm:$0xff]
      %v393 = vld [vmem:[%s169 + $0x678] sm:$0xff]
      %v394 = vld [vmem:[%s169 + $0x680] sm:$0xff]
      %v395 = vld [vmem:[%s169 + $0x688] sm:$0xff]
      %v396 = vld [vmem:[%s169 + $0x690] sm:$0xff]
      %v397 = vld [vmem:[%s169 + $0x698] sm:$0xff]
      %v398 = vld [vmem:[%s169 + $0x6a0] sm:$0xf]
      %v399 = vld [vmem:[%s169 + $0x6a4] sm:$0xff]
      %v400 = vld [vmem:[%s169 + $0x6ac] sm:$0xff]
      %v401 = vld [vmem:[%s169 + $0x6b4] sm:$0xff]
      %v402 = vld [vmem:[%s169 + $0x6bc] sm:$0xff]
      %v403 = vld [vmem:[%s169 + $0x6c4] sm:$0xff]
      %v404 = vld [vmem:[%s169 + $0x6cc] sm:$0xff]
      %v405 = vld [vmem:[%s169 + $0x6d4] sm:$0xff]
      %v406 = vld [vmem:[%s169 + $0x6dc] sm:$0xff]
      %v407 = vld [vmem:[%s169 + $0x6e4] sm:$0xff]
      %v408 = vld [vmem:[%s169 + $0x6ec] sm:$0xff]
      %v409 = vld [vmem:[%s169 + $0x6f4] sm:$0xff]
      %v410 = vld [vmem:[%s169 + $0x6fc] sm:$0xff]
      %v411 = vld [vmem:[%s169 + $0x704] sm:$0xf]
      %v412 = vld [vmem:[%s169 + $0x708] sm:$0xff]
      %v413 = vld [vmem:[%s169 + $0x710] sm:$0xff]
      %v414 = vld [vmem:[%s169 + $0x718] sm:$0xff]
      %v415 = vld [vmem:[%s169 + $0x720] sm:$0xff]
      %v416 = vld [vmem:[%s169 + $0x728] sm:$0xff]
      %v417 = vld [vmem:[%s169 + $0x730] sm:$0xff]
      %v418 = vld [vmem:[%s169 + $0x738] sm:$0xff]
      %v419 = vld [vmem:[%s169 + $0x740] sm:$0xff]
      %v420 = vld [vmem:[%s169 + $0x748] sm:$0xff]
      %v421 = vld [vmem:[%s169 + $0x750] sm:$0xff]
      %v422 = vld [vmem:[%s169 + $0x758] sm:$0xff]
      %v423 = vld [vmem:[%s169 + $0x760] sm:$0xff]
      %v424 = vld [vmem:[%s169 + $0x768] sm:$0xf]
      %v425 = vld [vmem:[%s169 + $0x76c] sm:$0xff]
      %v426 = vld [vmem:[%s169 + $0x774] sm:$0xff]
      %v427 = vld [vmem:[%s169 + $0x77c] sm:$0xff]
      %v428 = vld [vmem:[%s169 + $0x784] sm:$0xff]
      %v429 = vld [vmem:[%s169 + $0x78c] sm:$0xff]
      %v430 = vld [vmem:[%s169 + $0x794] sm:$0xff]
      %v431 = vld [vmem:[%s169 + $0x79c] sm:$0xff]
      %v432 = vld [vmem:[%s169 + $0x7a4] sm:$0xff]
      %v433 = vld [vmem:[%s169 + $0x7ac] sm:$0xff]
      %v434 = vld [vmem:[%s169 + $0x7b4] sm:$0xff]
      %v435 = vld [vmem:[%s169 + $0x7bc] sm:$0xff]
      %v436 = vld [vmem:[%s169 + $0x7c4] sm:$0xff]
      %v437 = vld [vmem:[%s169 + $0x7cc] sm:$0xf]
      %v438 = vld [vmem:[%s169 + $0x7d0] sm:$0xff]
      %v439 = vld [vmem:[%s169 + $0x7d8] sm:$0xff]
      %v440 = vld [vmem:[%s169 + $0x7e0] sm:$0xff]
      %v441 = vld [vmem:[%s169 + $0x7e8] sm:$0xff]
      %v442 = vld [vmem:[%s169 + $0x7f0] sm:$0xff]
      %v443 = vld [vmem:[%s169 + $0x7f8] sm:$0xff]
      %v444 = vld [vmem:[%s169 + $0x800] sm:$0xff]
      %v445 = vld [vmem:[%s169 + $0x808] sm:$0xff]
      %v446 = vld [vmem:[%s169 + $0x810] sm:$0xff]
      %v447 = vld [vmem:[%s169 + $0x818] sm:$0xff]
      %v448 = vld [vmem:[%s169 + $0x820] sm:$0xff]
      %v449 = vld [vmem:[%s169 + $0x828] sm:$0xff]
      %v450 = vld [vmem:[%s169 + $0x830] sm:$0xf]
      %v451 = vld [vmem:[%s169 + $0x834] sm:$0xff]
      %v452 = vld [vmem:[%s169 + $0x83c] sm:$0xff]
      %v453 = vld [vmem:[%s169 + $0x844] sm:$0xff]
      %v454 = vld [vmem:[%s169 + $0x84c] sm:$0xff]
      %v455 = vld [vmem:[%s169 + $0x854] sm:$0xff]
      %v456 = vld [vmem:[%s169 + $0x85c] sm:$0xff]
      %v457 = vld [vmem:[%s169 + $0x864] sm:$0xff]
      %v458 = vld [vmem:[%s169 + $0x86c] sm:$0xff]
      %v459 = vld [vmem:[%s169 + $0x874] sm:$0xff]
      %v460 = vld [vmem:[%s169 + $0x87c] sm:$0xff]
      %v461 = vld [vmem:[%s169 + $0x884] sm:$0xff]
      %v462 = vld [vmem:[%s169 + $0x88c] sm:$0xff]
      %v463 = vld [vmem:[%s169 + $0x894] sm:$0xf]
      %v464 = vld [vmem:[%s169 + $0x898] sm:$0xff]
      %v465 = vld [vmem:[%s169 + $0x8a0] sm:$0xff]
      %v466 = vld [vmem:[%s169 + $0x8a8] sm:$0xff]
      %v467 = vld [vmem:[%s169 + $0x8b0] sm:$0xff]
      %v468 = vld [vmem:[%s169 + $0x8b8] sm:$0xff]
      %v469 = vld [vmem:[%s169 + $0x8c0] sm:$0xff]
      %v470 = vld [vmem:[%s169 + $0x8c8] sm:$0xff]
      %v471 = vld [vmem:[%s169 + $0x8d0] sm:$0xff]
      %v472 = vld [vmem:[%s169 + $0x8d8] sm:$0xff]
      %v473 = vld [vmem:[%s169 + $0x8e0] sm:$0xff]
      %v474 = vld [vmem:[%s169 + $0x8e8] sm:$0xff]
      %v475 = vld [vmem:[%s169 + $0x8f0] sm:$0xff]
      %v476 = vld [vmem:[%s169 + $0x8f8] sm:$0xf]
      %v477 = vld [vmem:[%s169 + $0x8fc] sm:$0xff]
      %v478 = vld [vmem:[%s169 + $0x904] sm:$0xff]
      %v479 = vld [vmem:[%s169 + $0x90c] sm:$0xff]
      %v480 = vld [vmem:[%s169 + $0x914] sm:$0xff]
      %v481 = vld [vmem:[%s169 + $0x91c] sm:$0xff]
      %v482 = vld [vmem:[%s169 + $0x924] sm:$0xff]
      %v483 = vld [vmem:[%s169 + $0x92c] sm:$0xff]
      %v484 = vld [vmem:[%s169 + $0x934] sm:$0xff]
      %v485 = vld [vmem:[%s169 + $0x93c] sm:$0xff]
      %v486 = vld [vmem:[%s169 + $0x944] sm:$0xff]
      %v487 = vld [vmem:[%s169 + $0x94c] sm:$0xff]
      %v488 = vld [vmem:[%s169 + $0x954] sm:$0xff]
      %v489 = vld [vmem:[%s169 + $0x95c] sm:$0xf]
      %v490 = vld [vmem:[%s169 + $0x960] sm:$0xff]
      %v491 = vld [vmem:[%s169 + $0x968] sm:$0xff]
      %v492 = vld [vmem:[%s169 + $0x970] sm:$0xff]
      %v493 = vld [vmem:[%s169 + $0x978] sm:$0xff]
      %v494 = vld [vmem:[%s169 + $0x980] sm:$0xff]
      %v495 = vld [vmem:[%s169 + $0x988] sm:$0xff]
      %v496 = vld [vmem:[%s169 + $0x990] sm:$0xff]
      %v497 = vld [vmem:[%s169 + $0x998] sm:$0xff]
      %v498 = vld [vmem:[%s169 + $0x9a0] sm:$0xff]
      %v499 = vld [vmem:[%s169 + $0x9a8] sm:$0xff]
      %v500 = vld [vmem:[%s169 + $0x9b0] sm:$0xff]
      %v501 = vld [vmem:[%s169 + $0x9b8] sm:$0xff]
      %v502 = vld [vmem:[%s169 + $0x9c0] sm:$0xf]
      %v503 = vld [vmem:[%s169 + $0x9c4] sm:$0xff]
      %v504 = vld [vmem:[%s169 + $0x9cc] sm:$0xff]
      %v505 = vld [vmem:[%s169 + $0x9d4] sm:$0xff]
      %v506 = vld [vmem:[%s169 + $0x9dc] sm:$0xff]
      %v507 = vld [vmem:[%s169 + $0x9e4] sm:$0xff]
      %v508 = vld [vmem:[%s169 + $0x9ec] sm:$0xff]
      %v509 = vld [vmem:[%s169 + $0x9f4] sm:$0xff]
      %v510 = vld [vmem:[%s169 + $0x9fc] sm:$0xff]
      %v511 = vld [vmem:[%s169 + $0xa04] sm:$0xff]
      %v512 = vld [vmem:[%s169 + $0xa0c] sm:$0xff]
      %v513 = vld [vmem:[%s169 + $0xa14] sm:$0xff]
      %v514 = vld [vmem:[%s169 + $0xa1c] sm:$0xff]
      %v515 = vld [vmem:[%s169 + $0xa24] sm:$0xf]
      %v516 = vld [vmem:[%s169 + $0xa28] sm:$0xff]
      %v517 = vld [vmem:[%s169 + $0xa30] sm:$0xff]
      %v518 = vld [vmem:[%s169 + $0xa38] sm:$0xff]
      %v519 = vld [vmem:[%s169 + $0xa40] sm:$0xff]
      %v520 = vld [vmem:[%s169 + $0xa48] sm:$0xff]
      %v521 = vld [vmem:[%s169 + $0xa50] sm:$0xff]
      %v522 = vld [vmem:[%s169 + $0xa58] sm:$0xff]
      %v523 = vld [vmem:[%s169 + $0xa60] sm:$0xff]
      %v524 = vld [vmem:[%s169 + $0xa68] sm:$0xff]
      %v525 = vld [vmem:[%s169 + $0xa70] sm:$0xff]
      %v526 = vld [vmem:[%s169 + $0xa78] sm:$0xff]
      %v527 = vld [vmem:[%s169 + $0xa80] sm:$0xff]
      %v528 = vld [vmem:[%s169 + $0xa88] sm:$0xf]
      %v529 = vld [vmem:[%s169 + $0xa8c] sm:$0xff]
      %v530 = vld [vmem:[%s169 + $0xa94] sm:$0xff]
      %v531 = vld [vmem:[%s169 + $0xa9c] sm:$0xff]
      %v532 = vld [vmem:[%s169 + $0xaa4] sm:$0xff]
      %v533 = vld [vmem:[%s169 + $0xaac] sm:$0xff]
      %v534 = vld [vmem:[%s169 + $0xab4] sm:$0xff]
      %v535 = vld [vmem:[%s169 + $0xabc] sm:$0xff]
      %v536 = vld [vmem:[%s169 + $0xac4] sm:$0xff]
      %v537 = vld [vmem:[%s169 + $0xacc] sm:$0xff]
      %v538 = vld [vmem:[%s169 + $0xad4] sm:$0xff]
      %v539 = vld [vmem:[%s169 + $0xadc] sm:$0xff]
      %v540 = vld [vmem:[%s169 + $0xae4] sm:$0xff]
      %v541 = vld [vmem:[%s169 + $0xaec] sm:$0xf]
      %v542 = vld [vmem:[%s169 + $0xaf0] sm:$0xff]
      %v543 = vld [vmem:[%s169 + $0xaf8] sm:$0xff]
      %v544 = vld [vmem:[%s169 + $0xb00] sm:$0xff]
      %v545 = vld [vmem:[%s169 + $0xb08] sm:$0xff]
      %v546 = vld [vmem:[%s169 + $0xb10] sm:$0xff]
      %v547 = vld [vmem:[%s169 + $0xb18] sm:$0xff]
      %v548 = vld [vmem:[%s169 + $0xb20] sm:$0xff]
      %v549 = vld [vmem:[%s169 + $0xb28] sm:$0xff]
      %v550 = vld [vmem:[%s169 + $0xb30] sm:$0xff]
      %v551 = vld [vmem:[%s169 + $0xb38] sm:$0xff]
      %v552 = vld [vmem:[%s169 + $0xb40] sm:$0xff]
      %v553 = vld [vmem:[%s169 + $0xb48] sm:$0xff]
      %v554 = vld [vmem:[%s169 + $0xb50] sm:$0xf]
      %v555 = vld [vmem:[%s169 + $0xb54] sm:$0xff]
      %v556 = vld [vmem:[%s169 + $0xb5c] sm:$0xff]
      %v557 = vld [vmem:[%s169 + $0xb64] sm:$0xff]
      %v558 = vld [vmem:[%s169 + $0xb6c] sm:$0xff]
      %v559 = vld [vmem:[%s169 + $0xb74] sm:$0xff]
      %v560 = vld [vmem:[%s169 + $0xb7c] sm:$0xff]
      %v561 = vld [vmem:[%s169 + $0xb84] sm:$0xff]
      %v562 = vld [vmem:[%s169 + $0xb8c] sm:$0xff]
      %v563 = vld [vmem:[%s169 + $0xb94] sm:$0xff]
      %v564 = vld [vmem:[%s169 + $0xb9c] sm:$0xff]
      %v565 = vld [vmem:[%s169 + $0xba4] sm:$0xff]
      %v566 = vld [vmem:[%s169 + $0xbac] sm:$0xff]
      %v567 = vld [vmem:[%s169 + $0xbb4] sm:$0xf]
      %v568 = vld [vmem:[%s169 + $0xbb8] sm:$0xff]
      %v569 = vld [vmem:[%s169 + $0xbc0] sm:$0xff]
      %v570 = vld [vmem:[%s169 + $0xbc8] sm:$0xff]
      %v571 = vld [vmem:[%s169 + $0xbd0] sm:$0xff]
      %v572 = vld [vmem:[%s169 + $0xbd8] sm:$0xff]
      %v573 = vld [vmem:[%s169 + $0xbe0] sm:$0xff]
      %v574 = vld [vmem:[%s169 + $0xbe8] sm:$0xff]
      %v575 = vld [vmem:[%s169 + $0xbf0] sm:$0xff]
      %v576 = vld [vmem:[%s169 + $0xbf8] sm:$0xff]
      %v577 = vld [vmem:[%s169 + $0xc00] sm:$0xff]
      %v578 = vld [vmem:[%s169 + $0xc08] sm:$0xff]
      %v579 = vld [vmem:[%s169 + $0xc10] sm:$0xff]
      %v580 = vld [vmem:[%s169 + $0xc18] sm:$0xf]
      %v581 = vld [vmem:[%s169 + $0xc1c] sm:$0xff]
      %v582 = vld [vmem:[%s169 + $0xc24] sm:$0xff]
      %v583 = vld [vmem:[%s169 + $0xc2c] sm:$0xff]
      %v584 = vld [vmem:[%s169 + $0xc34] sm:$0xff]
      %v585 = vld [vmem:[%s169 + $0xc3c] sm:$0xff]
      %v586 = vld [vmem:[%s169 + $0xc44] sm:$0xff]
      %v587 = vld [vmem:[%s169 + $0xc4c] sm:$0xff]
      %v588 = vld [vmem:[%s169 + $0xc54] sm:$0xff]
      %v589 = vld [vmem:[%s169 + $0xc5c] sm:$0xff]
      %v590 = vld [vmem:[%s169 + $0xc64] sm:$0xff]
      %v591 = vld [vmem:[%s169 + $0xc6c] sm:$0xff]
      %v592 = vld [vmem:[%s169 + $0xc74] sm:$0xff]
      %v593 = vld [vmem:[%s169 + $0xc7c] sm:$0xf]
      %v594 = vld [vmem:[%s1] sm:$0xf]
      %v595 = vld [vmem:[%s1 + $0x4] sm:$0xf]
      %v596 = vld [vmem:[%s1 + $0x8] sm:$0xf]
      %v597 = vld [vmem:[%s1 + $0xc] sm:$0xf]
      %v598 = vld [vmem:[%s1 + $0x10] sm:$0xf]
      %v599 = vld [vmem:[%s1 + $0x14] sm:$0xf]
      %v600 = vld [vmem:[%s1 + $0x18] sm:$0xf]
      %v601 = vld [vmem:[%s1 + $0x1c] sm:$0xf]
      %v602 = vld [vmem:[%s1 + $0x20] sm:$0xf]
      %v603 = vld [vmem:[%s1 + $0x24] sm:$0xf]
      %v604 = vld [vmem:[%s1 + $0x28] sm:$0xf]
      %v605 = vld [vmem:[%s1 + $0x2c] sm:$0xf]
      %v606 = vld [vmem:[%s1 + $0x30] sm:$0xf]
      %v607 = vld [vmem:[%s1 + $0x34] sm:$0xf]
      %v608 = vld [vmem:[%s1 + $0x38] sm:$0xf]
      %v609 = vld [vmem:[%s1 + $0x3c] sm:$0xf]
      %v610 = vld [vmem:[%s1 + $0x40] sm:$0xf]
      %v611 = vld [vmem:[%s1 + $0x44] sm:$0xf]
      %v612 = vld [vmem:[%s1 + $0x48] sm:$0xf]
      %v613 = vld [vmem:[%s1 + $0x4c] sm:$0xf]
      %v614 = vld [vmem:[%s1 + $0x50] sm:$0xf]
      %v615 = vld [vmem:[%s1 + $0x54] sm:$0xf]
      %v616 = vld [vmem:[%s1 + $0x58] sm:$0xf]
      %v617 = vld [vmem:[%s1 + $0x5c] sm:$0xf]
      %v618 = vld [vmem:[%s1 + $0x60] sm:$0xf]
      %v619 = vld [vmem:[%s1 + $0x64] sm:$0xf]
      %v620 = vld [vmem:[%s1 + $0x68] sm:$0xf]
      %v621 = vld [vmem:[%s1 + $0x6c] sm:$0xf]
      %v622 = vld [vmem:[%s1 + $0x70] sm:$0xf]
      %v623 = vld [vmem:[%s1 + $0x74] sm:$0xf]
      %v624 = vld [vmem:[%s1 + $0x78] sm:$0xf]
      %v625 = vld [vmem:[%s1 + $0x7c] sm:$0xf]
      %v626 = vld [vmem:[%s1 + $0x80] sm:$0xf]
      %v627 = vld [vmem:[%s1 + $0x84] sm:$0xf]
      %v628 = vld [vmem:[%s1 + $0x88] sm:$0xf]
      %v629 = vld [vmem:[%s1 + $0x8c] sm:$0xf]
      %v630 = vld [vmem:[%s1 + $0x90] sm:$0xf]
      %v631 = vld [vmem:[%s1 + $0x94] sm:$0xf]
      %v632 = vld [vmem:[%s1 + $0x98] sm:$0xf]
      %v633 = vld [vmem:[%s1 + $0x9c] sm:$0xf]
      %v634 = vld [vmem:[%s1 + $0xa0] sm:$0xf]
      %v635 = vld [vmem:[%s1 + $0xa4] sm:$0xf]
      %v636 = vld [vmem:[%s1 + $0xa8] sm:$0xf]
      %v637 = vld [vmem:[%s1 + $0xac] sm:$0xf]
      %v638 = vld [vmem:[%s1 + $0xb0] sm:$0xf]
      %v639 = vld [vmem:[%s1 + $0xb4] sm:$0xf]
      %v640 = vld [vmem:[%s1 + $0xb8] sm:$0xf]
      %v641 = vld [vmem:[%s1 + $0xbc] sm:$0xf]
      %v642 = vld [vmem:[%s1 + $0xc0] sm:$0xf]
      %v643 = vld [vmem:[%s1 + $0xc4] sm:$0xf]
      %v644 = vld [vmem:[%s1 + $0xc8] sm:$0xf]
      %v645 = vld [vmem:[%s1 + $0xcc] sm:$0xf]
      %v646 = vld [vmem:[%s1 + $0xd0] sm:$0xf]
      %v647 = vld [vmem:[%s1 + $0xd4] sm:$0xf]
      %v648 = vld [vmem:[%s1 + $0xd8] sm:$0xf]
      %v649 = vld [vmem:[%s1 + $0xdc] sm:$0xf]
      %v650 = vld [vmem:[%s1 + $0xe0] sm:$0xf]
      %v651 = vld [vmem:[%s1 + $0xe4] sm:$0xf]
      %v652 = vld [vmem:[%s1 + $0xe8] sm:$0xf]
      %v653 = vld [vmem:[%s1 + $0xec] sm:$0xf]
      %v654 = vld [vmem:[%s1 + $0xf0] sm:$0xf]
      %v655 = vld [vmem:[%s1 + $0xf4] sm:$0xf]
      %v656 = vld [vmem:[%s1 + $0xf8] sm:$0xf]
      %v657 = vld [vmem:[%s1 + $0xfc] sm:$0xf]
      %v658 = vld [vmem:[%s1 + $0x100] sm:$0xf]
      %v659 = vld [vmem:[%s1 + $0x104] sm:$0xf]
      %v660 = vld [vmem:[%s1 + $0x108] sm:$0xf]
      %v661 = vld [vmem:[%s1 + $0x10c] sm:$0xf]
      %v662 = vld [vmem:[%s1 + $0x110] sm:$0xf]
      %v663 = vld [vmem:[%s1 + $0x114] sm:$0xf]
      %v664 = vld [vmem:[%s1 + $0x118] sm:$0xf]
      %v665 = vld [vmem:[%s1 + $0x11c] sm:$0xf]
      %v666 = vld [vmem:[%s1 + $0x120] sm:$0xf]
      %v667 = vld [vmem:[%s1 + $0x124] sm:$0xf]
      %v668 = vld [vmem:[%s1 + $0x128] sm:$0xf]
      %v669 = vld [vmem:[%s1 + $0x12c] sm:$0xf]
      %v670 = vld [vmem:[%s1 + $0x130] sm:$0xf]
      %v671 = vld [vmem:[%s1 + $0x134] sm:$0xf]
      %v672 = vld [vmem:[%s1 + $0x138] sm:$0xf]
      %v673 = vld [vmem:[%s1 + $0x13c] sm:$0xf]
      %v674 = vld [vmem:[%s1 + $0x140] sm:$0xf]
      %v675 = vld [vmem:[%s1 + $0x144] sm:$0xf]
      %v676 = vld [vmem:[%s1 + $0x148] sm:$0xf]
      %v677 = vld [vmem:[%s1 + $0x14c] sm:$0xf]
      %v678 = vld [vmem:[%s1 + $0x150] sm:$0xf]
      %v679 = vld [vmem:[%s1 + $0x154] sm:$0xf]
      %v680 = vld [vmem:[%s1 + $0x158] sm:$0xf]
      %v681 = vld [vmem:[%s1 + $0x15c] sm:$0xf]
      %v682 = vld [vmem:[%s1 + $0x160] sm:$0xf]
      %v683 = vld [vmem:[%s1 + $0x164] sm:$0xf]
      %v684 = vld [vmem:[%s1 + $0x168] sm:$0xf]
      %v685 = vld [vmem:[%s1 + $0x16c] sm:$0xf]
      %v686 = vld [vmem:[%s1 + $0x170] sm:$0xf]
      %v687 = vld [vmem:[%s1 + $0x174] sm:$0xf]
      %v688 = vld [vmem:[%s1 + $0x178] sm:$0xf]
      %v689 = vld [vmem:[%s1 + $0x17c] sm:$0xf]
      %v690 = vld [vmem:[%s1 + $0x180] sm:$0xf]
      %v691 = vld [vmem:[%s1 + $0x184] sm:$0xf]
      %v692 = vld [vmem:[%s1 + $0x188] sm:$0xf]
      %v693 = vld [vmem:[%s1 + $0x18c] sm:$0xf]
      %v694 = vld [vmem:[%s1 + $0x190] sm:$0xf]
      %v695 = vld [vmem:[%s1 + $0x194] sm:$0xf]
      %v696 = vld [vmem:[%s1 + $0x198] sm:$0xf]
      %v697 = vld [vmem:[%s1 + $0x19c] sm:$0xf]
      %v698 = vld [vmem:[%s1 + $0x1a0] sm:$0xf]
      %v699 = vld [vmem:[%s1 + $0x1a4] sm:$0xf]
      %v700 = vld [vmem:[%s1 + $0x1a8] sm:$0xf]
      %v701 = vld [vmem:[%s1 + $0x1ac] sm:$0xf]
      %v702 = vld [vmem:[%s1 + $0x1b0] sm:$0xf]
      %v703 = vld [vmem:[%s1 + $0x1b4] sm:$0xf]
      %v704 = vld [vmem:[%s1 + $0x1b8] sm:$0xf]
      %v705 = vld [vmem:[%s1 + $0x1bc] sm:$0xf]
      %v706 = vld [vmem:[%s1 + $0x1c0] sm:$0xf]
      %v707 = vld [vmem:[%s1 + $0x1c4] sm:$0xf]
      %v708 = vld [vmem:[%s1 + $0x1c8] sm:$0xf]
      %v709 = vld [vmem:[%s1 + $0x1cc] sm:$0xf]
      %v710 = vld [vmem:[%s1 + $0x1d0] sm:$0xf]
      %v711 = vld [vmem:[%s1 + $0x1d4] sm:$0xf]
      %v712 = vld [vmem:[%s1 + $0x1d8] sm:$0xf]
      %v713 = vld [vmem:[%s1 + $0x1dc] sm:$0xf]
      %v714 = vld [vmem:[%s1 + $0x1e0] sm:$0xf]
      %v715 = vld [vmem:[%s1 + $0x1e4] sm:$0xf]
      %v716 = vld [vmem:[%s1 + $0x1e8] sm:$0xf]
      %v717 = vld [vmem:[%s1 + $0x1ec] sm:$0xf]
      %v718 = vld [vmem:[%s1 + $0x1f0] sm:$0xf]
      %v719 = vld [vmem:[%s1 + $0x1f4] sm:$0xf]
      %v720 = vld [vmem:[%s1 + $0x1f8] sm:$0xf]
      %v721 = vld [vmem:[%s1 + $0x1fc] sm:$0xf]
      %v722 = vld [vmem:[%s1 + $0x200] sm:$0xf]
      %v723 = vld [vmem:[%s1 + $0x204] sm:$0xf]
      %v724 = vld [vmem:[%s1 + $0x208] sm:$0xf]
      %v725 = vld [vmem:[%s1 + $0x20c] sm:$0xf]
      %v726 = vld [vmem:[%s1 + $0x210] sm:$0xf]
      %v727 = vld [vmem:[%s1 + $0x214] sm:$0xf]
      %v728 = vld [vmem:[%s1 + $0x218] sm:$0xf]
      %v729 = vld [vmem:[%s1 + $0x21c] sm:$0xf]
      %v730 = vld [vmem:[%s1 + $0x220] sm:$0xf]
      %v731 = vld [vmem:[%s1 + $0x224] sm:$0xf]
      %v732 = vld [vmem:[%s1 + $0x228] sm:$0xf]
      %v733 = vld [vmem:[%s1 + $0x22c] sm:$0xf]
      %v734 = vld [vmem:[%s1 + $0x230] sm:$0xf]
      %v735 = vld [vmem:[%s1 + $0x234] sm:$0xf]
      %v736 = vld [vmem:[%s1 + $0x238] sm:$0xf]
      %v737 = vld [vmem:[%s1 + $0x23c] sm:$0xf]
      %v738 = vld [vmem:[%s1 + $0x240] sm:$0xf]
      %v739 = vld [vmem:[%s1 + $0x244] sm:$0xf]
      %v740 = vld [vmem:[%s1 + $0x248] sm:$0xf]
      %v741 = vld [vmem:[%s1 + $0x24c] sm:$0xf]
      %v742 = vld [vmem:[%s1 + $0x250] sm:$0xf]
      %v743 = vld [vmem:[%s1 + $0x254] sm:$0xf]
      %v744 = vld [vmem:[%s1 + $0x258] sm:$0xf]
      %v745 = vld [vmem:[%s1 + $0x25c] sm:$0xf]
      %v746 = vld [vmem:[%s1 + $0x260] sm:$0xf]
      %v747 = vld [vmem:[%s1 + $0x264] sm:$0xf]
      %v748 = vld [vmem:[%s1 + $0x268] sm:$0xf]
      %v749 = vld [vmem:[%s1 + $0x26c] sm:$0xf]
      %v750 = vld [vmem:[%s1 + $0x270] sm:$0xf]
      %v751 = vld [vmem:[%s1 + $0x274] sm:$0xf]
      %v752 = vld [vmem:[%s1 + $0x278] sm:$0xf]
      %v753 = vld [vmem:[%s1 + $0x27c] sm:$0xf]
      %v754 = vld [vmem:[%s1 + $0x280] sm:$0xf]
      %v755 = vld [vmem:[%s1 + $0x284] sm:$0xf]
      %v756 = vld [vmem:[%s1 + $0x288] sm:$0xf]
      %v757 = vld [vmem:[%s1 + $0x28c] sm:$0xf]
      %v758 = vld [vmem:[%s1 + $0x290] sm:$0xf]
      %v759 = vld [vmem:[%s1 + $0x294] sm:$0xf]
      %v760 = vld [vmem:[%s1 + $0x298] sm:$0xf]
      %v761 = vld [vmem:[%s1 + $0x29c] sm:$0xf]
      %v762 = vld [vmem:[%s1 + $0x2a0] sm:$0xf]
      %v763 = vld [vmem:[%s1 + $0x2a4] sm:$0xf]
      %v764 = vld [vmem:[%s1 + $0x2a8] sm:$0xf]
      %v765 = vld [vmem:[%s1 + $0x2ac] sm:$0xf]
      %v766 = vld [vmem:[%s1 + $0x2b0] sm:$0xf]
      %v767 = vld [vmem:[%s1 + $0x2b4] sm:$0xf]
      %v768 = vld [vmem:[%s1 + $0x2b8] sm:$0xf]
      %v769 = vld [vmem:[%s1 + $0x2bc] sm:$0xf]
      %v770 = vld [vmem:[%s1 + $0x2c0] sm:$0xf]
      %v771 = vld [vmem:[%s1 + $0x2c4] sm:$0xf]
      %v772 = vld [vmem:[%s1 + $0x2c8] sm:$0xf]
      %v773 = vld [vmem:[%s1 + $0x2cc] sm:$0xf]
      %v774 = vld [vmem:[%s1 + $0x2d0] sm:$0xf]
      %v775 = vld [vmem:[%s1 + $0x2d4] sm:$0xf]
      %v776 = vld [vmem:[%s1 + $0x2d8] sm:$0xf]
      %v777 = vld [vmem:[%s1 + $0x2dc] sm:$0xf]
      %v778 = vld [vmem:[%s1 + $0x2e0] sm:$0xf]
      %v779 = vld [vmem:[%s1 + $0x2e4] sm:$0xf]
      %v780 = vld [vmem:[%s1 + $0x2e8] sm:$0xf]
      %v781 = vld [vmem:[%s1 + $0x2ec] sm:$0xf]
      %v782 = vld [vmem:[%s1 + $0x2f0] sm:$0xf]
      %v783 = vld [vmem:[%s1 + $0x2f4] sm:$0xf]
      %v784 = vld [vmem:[%s1 + $0x2f8] sm:$0xf]
      %v785 = vld [vmem:[%s1 + $0x2fc] sm:$0xf]
      %v786 = vld [vmem:[%s1 + $0x300] sm:$0xf]
      %v787 = vld [vmem:[%s1 + $0x304] sm:$0xf]
      %v788 = vld [vmem:[%s1 + $0x308] sm:$0xf]
      %v789 = vld [vmem:[%s1 + $0x30c] sm:$0xf]
      %v790 = vld [vmem:[%s1 + $0x310] sm:$0xf]
      %v791 = vld [vmem:[%s1 + $0x314] sm:$0xf]
      %v792 = vld [vmem:[%s1 + $0x318] sm:$0xf]
      %v793 = vld [vmem:[%s1 + $0x31c] sm:$0xf]
      %v794 = vld [vmem:[%s1 + $0x320] sm:$0xf]
      %v795 = vld [vmem:[%s1 + $0x324] sm:$0xf]
      %v796 = vld [vmem:[%s1 + $0x328] sm:$0xf]
      %v797 = vld [vmem:[%s1 + $0x32c] sm:$0xf]
      %v798 = vld [vmem:[%s1 + $0x330] sm:$0xf]
      %v799 = vld [vmem:[%s1 + $0x334] sm:$0xf]
      %v800 = vld [vmem:[%s1 + $0x338] sm:$0xf]
      %v801 = vld [vmem:[%s1 + $0x33c] sm:$0xf]
      %v802 = vld [vmem:[%s1 + $0x340] sm:$0xf]
      %v803 = vld [vmem:[%s1 + $0x344] sm:$0xf]
      %v804 = vld [vmem:[%s1 + $0x348] sm:$0xf]
      %v805 = vld [vmem:[%s1 + $0x34c] sm:$0xf]
      %v806 = vld [vmem:[%s1 + $0x350] sm:$0xf]
      %v807 = vld [vmem:[%s1 + $0x354] sm:$0xf]
      %v808 = vld [vmem:[%s1 + $0x358] sm:$0xf]
      %v809 = vld [vmem:[%s1 + $0x35c] sm:$0xf]
      %v810 = vld [vmem:[%s1 + $0x360] sm:$0xf]
      %v811 = vld [vmem:[%s1 + $0x364] sm:$0xf]
      %v812 = vld [vmem:[%s1 + $0x368] sm:$0xf]
      %v813 = vld [vmem:[%s1 + $0x36c] sm:$0xf]
      %v814 = vld [vmem:[%s1 + $0x370] sm:$0xf]
      %v815 = vld [vmem:[%s1 + $0x374] sm:$0xf]
      %v816 = vld [vmem:[%s1 + $0x378] sm:$0xf]
      %v817 = vld [vmem:[%s1 + $0x37c] sm:$0xf]
      %v818 = vld [vmem:[%s1 + $0x380] sm:$0xf]
      %v819 = vld [vmem:[%s1 + $0x384] sm:$0xf]
      %v820 = vld [vmem:[%s1 + $0x388] sm:$0xf]
      %v821 = vld [vmem:[%s1 + $0x38c] sm:$0xf]
      %v822 = vld [vmem:[%s1 + $0x390] sm:$0xf]
      %v823 = vld [vmem:[%s1 + $0x394] sm:$0xf]
      %v824 = vld [vmem:[%s1 + $0x398] sm:$0xf]
      %v825 = vld [vmem:[%s1 + $0x39c] sm:$0xf]
      %v826 = vld [vmem:[%s1 + $0x3a0] sm:$0xf]
      %v827 = vld [vmem:[%s1 + $0x3a4] sm:$0xf]
      %v828 = vld [vmem:[%s1 + $0x3a8] sm:$0xf]
      %v829 = vld [vmem:[%s1 + $0x3ac] sm:$0xf]
      %v830 = vld [vmem:[%s1 + $0x3b0] sm:$0xf]
      %v831 = vld [vmem:[%s1 + $0x3b4] sm:$0xf]
      %v832 = vld [vmem:[%s1 + $0x3b8] sm:$0xf]
      %v833 = vld [vmem:[%s1 + $0x3bc] sm:$0xf]
      %v834 = vld [vmem:[%s1 + $0x3c0] sm:$0xf]
      %v835 = vld [vmem:[%s1 + $0x3c4] sm:$0xf]
      %v836 = vld [vmem:[%s1 + $0x3c8] sm:$0xf]
      %v837 = vld [vmem:[%s1 + $0x3cc] sm:$0xf]
      %v838 = vld [vmem:[%s1 + $0x3d0] sm:$0xf]
      %v839 = vld [vmem:[%s1 + $0x3d4] sm:$0xf]
      %v840 = vld [vmem:[%s1 + $0x3d8] sm:$0xf]
      %v841 = vld [vmem:[%s1 + $0x3dc] sm:$0xf]
      %v842 = vld [vmem:[%s1 + $0x3e0] sm:$0xf]
      %v843 = vld [vmem:[%s1 + $0x3e4] sm:$0xf]
      %v844 = vld [vmem:[%s1 + $0x3e8] sm:$0xf]
      %v845 = vld [vmem:[%s1 + $0x3ec] sm:$0xf]
      %v846 = vld [vmem:[%s1 + $0x3f0] sm:$0xf]
      %v847 = vld [vmem:[%s1 + $0x3f4] sm:$0xf]
      %v848 = vld [vmem:[%s1 + $0x3f8] sm:$0xf]
      %v849 = vld [vmem:[%s1 + $0x3fc] sm:$0xf]
      %v850 = vld [vmem:[%s1 + $0x400] sm:$0xf]
      %v851 = vld [vmem:[%s1 + $0x404] sm:$0xf]
      %v852 = vld [vmem:[%s1 + $0x408] sm:$0xf]
      %v853 = vld [vmem:[%s1 + $0x40c] sm:$0xf]
      %v854 = vld [vmem:[%s1 + $0x410] sm:$0xf]
      %v855 = vld [vmem:[%s1 + $0x414] sm:$0xf]
      %v856 = vld [vmem:[%s1 + $0x418] sm:$0xf]
      %v857 = vld [vmem:[%s1 + $0x41c] sm:$0xf]
      %v858 = vld [vmem:[%s1 + $0x420] sm:$0xf]
      %v859 = vld [vmem:[%s1 + $0x424] sm:$0xf]
      %v860 = vld [vmem:[%s1 + $0x428] sm:$0xf]
      %v861 = vld [vmem:[%s1 + $0x42c] sm:$0xf]
      %v862 = vld [vmem:[%s1 + $0x430] sm:$0xf]
      %v863 = vld [vmem:[%s1 + $0x434] sm:$0xf]
      %v864 = vld [vmem:[%s1 + $0x438] sm:$0xf]
      %v865 = vld [vmem:[%s1 + $0x43c] sm:$0xf]
      %v866 = vld [vmem:[%s1 + $0x440] sm:$0xf]
      %v867 = vld [vmem:[%s1 + $0x444] sm:$0xf]
      %v868 = vld [vmem:[%s1 + $0x448] sm:$0xf]
      %v869 = vld [vmem:[%s1 + $0x44c] sm:$0xf]
      %v870 = vld [vmem:[%s1 + $0x450] sm:$0xf]
      %v871 = vld [vmem:[%s1 + $0x454] sm:$0xf]
      %v872 = vld [vmem:[%s1 + $0x458] sm:$0xf]
      %v873 = vld [vmem:[%s1 + $0x45c] sm:$0xf]
      %v874 = vld [vmem:[%s1 + $0x460] sm:$0xf]
      %v875 = vld [vmem:[%s1 + $0x464] sm:$0xf]
      %v876 = vld [vmem:[%s1 + $0x468] sm:$0xf]
      %v877 = vld [vmem:[%s1 + $0x46c] sm:$0xf]
      %v878 = vld [vmem:[%s1 + $0x470] sm:$0xf]
      %v879 = vld [vmem:[%s1 + $0x474] sm:$0xf]
      %v880 = vld [vmem:[%s1 + $0x478] sm:$0xf]
      %v881 = vld [vmem:[%s1 + $0x47c] sm:$0xf]
      %v882 = vld [vmem:[%s1 + $0x480] sm:$0xf]
      %v883 = vld [vmem:[%s1 + $0x484] sm:$0xf]
      %v884 = vld [vmem:[%s1 + $0x488] sm:$0xf]
      %v885 = vld [vmem:[%s1 + $0x48c] sm:$0xf]
      %v886 = vld [vmem:[%s1 + $0x490] sm:$0xf]
      %v887 = vld [vmem:[%s1 + $0x494] sm:$0xf]
      %v888 = vld [vmem:[%s1 + $0x498] sm:$0xf]
      %v889 = vld [vmem:[%s1 + $0x49c] sm:$0xf]
      %v890 = vld [vmem:[%s1 + $0x4a0] sm:$0xf]
      %v891 = vld [vmem:[%s1 + $0x4a4] sm:$0xf]
      %v892 = vld [vmem:[%s1 + $0x4a8] sm:$0xf]
      %v893 = vld [vmem:[%s1 + $0x4ac] sm:$0xf]
      %v894 = vld [vmem:[%s1 + $0x4b0] sm:$0xf]
      %v895 = vld [vmem:[%s1 + $0x4b4] sm:$0xf]
      %v896 = vld [vmem:[%s1 + $0x4b8] sm:$0xf]
      %v897 = vld [vmem:[%s1 + $0x4bc] sm:$0xf]
      %v898 = vld [vmem:[%s1 + $0x4c0] sm:$0xf]
      %v899 = vld [vmem:[%s1 + $0x4c4] sm:$0xf]
      %v900 = vld [vmem:[%s1 + $0x4c8] sm:$0xf]
      %v901 = vld [vmem:[%s1 + $0x4cc] sm:$0xf]
      %v902 = vld [vmem:[%s1 + $0x4d0] sm:$0xf]
      %v903 = vld [vmem:[%s1 + $0x4d4] sm:$0xf]
      %v904 = vld [vmem:[%s1 + $0x4d8] sm:$0xf]
      %v905 = vld [vmem:[%s1 + $0x4dc] sm:$0xf]
      %v906 = vld [vmem:[%s1 + $0x4e0] sm:$0xf]
      %v907 = vld [vmem:[%s1 + $0x4e4] sm:$0xf]
      %v908 = vld [vmem:[%s1 + $0x4e8] sm:$0xf]
      %v909 = vld [vmem:[%s1 + $0x4ec] sm:$0xf]
      %v910 = vld [vmem:[%s1 + $0x4f0] sm:$0xf]
      %v911 = vld [vmem:[%s1 + $0x4f4] sm:$0xf]
      %v912 = vld [vmem:[%s1 + $0x4f8] sm:$0xf]
      %v913 = vld [vmem:[%s1 + $0x4fc] sm:$0xf]
      %v914 = vld [vmem:[%s1 + $0x500] sm:$0xf]
      %v915 = vld [vmem:[%s1 + $0x504] sm:$0xf]
      %v916 = vld [vmem:[%s1 + $0x508] sm:$0xf]
      %v917 = vld [vmem:[%s1 + $0x50c] sm:$0xf]
      %v918 = vld [vmem:[%s1 + $0x510] sm:$0xf]
      %v919 = vld [vmem:[%s1 + $0x514] sm:$0xf]
      %v920 = vld [vmem:[%s1 + $0x518] sm:$0xf]
      %v921 = vld [vmem:[%s1 + $0x51c] sm:$0xf]
      %v922 = vld [vmem:[%s1 + $0x520] sm:$0xf]
      %v923 = vld [vmem:[%s1 + $0x524] sm:$0xf]
      %v924 = vld [vmem:[%s1 + $0x528] sm:$0xf]
      %v925 = vld [vmem:[%s1 + $0x52c] sm:$0xf]
      %v926 = vld [vmem:[%s1 + $0x530] sm:$0xf]
      %v927 = vld [vmem:[%s1 + $0x534] sm:$0xf]
      %v928 = vld [vmem:[%s1 + $0x538] sm:$0xf]
      %v929 = vld [vmem:[%s1 + $0x53c] sm:$0xf]
      %v930 = vld [vmem:[%s1 + $0x540] sm:$0xf]
      %v931 = vld [vmem:[%s1 + $0x544] sm:$0xf]
      %v932 = vld [vmem:[%s1 + $0x548] sm:$0xf]
      %v933 = vld [vmem:[%s1 + $0x54c] sm:$0xf]
      %v934 = vld [vmem:[%s1 + $0x550] sm:$0xf]
      %v935 = vld [vmem:[%s1 + $0x554] sm:$0xf]
      %v936 = vld [vmem:[%s1 + $0x558] sm:$0xf]
      %v937 = vld [vmem:[%s1 + $0x55c] sm:$0xf]
      %v938 = vld [vmem:[%s1 + $0x560] sm:$0xf]
      %v939 = vld [vmem:[%s1 + $0x564] sm:$0xf]
      %v940 = vld [vmem:[%s1 + $0x568] sm:$0xf]
      %v941 = vld [vmem:[%s1 + $0x56c] sm:$0xf]
      %v942 = vld [vmem:[%s1 + $0x570] sm:$0xf]
      %v943 = vld [vmem:[%s1 + $0x574] sm:$0xf]
      %v944 = vld [vmem:[%s1 + $0x578] sm:$0xf]
      %v945 = vld [vmem:[%s1 + $0x57c] sm:$0xf]
      %v946 = vld [vmem:[%s1 + $0x580] sm:$0xf]
      %v947 = vld [vmem:[%s1 + $0x584] sm:$0xf]
      %v948 = vld [vmem:[%s1 + $0x588] sm:$0xf]
      %v949 = vld [vmem:[%s1 + $0x58c] sm:$0xf]
      %v950 = vld [vmem:[%s1 + $0x590] sm:$0xf]
      %v951 = vld [vmem:[%s1 + $0x594] sm:$0xf]
      %v952 = vld [vmem:[%s1 + $0x598] sm:$0xf]
      %v953 = vld [vmem:[%s1 + $0x59c] sm:$0xf]
      %v954 = vld [vmem:[%s1 + $0x5a0] sm:$0xf]
      %v955 = vld [vmem:[%s1 + $0x5a4] sm:$0xf]
      %v956 = vld [vmem:[%s1 + $0x5a8] sm:$0xf]
      %v957 = vld [vmem:[%s1 + $0x5ac] sm:$0xf]
      %v958 = vld [vmem:[%s1 + $0x5b0] sm:$0xf]
      %v959 = vld [vmem:[%s1 + $0x5b4] sm:$0xf]
      %v960 = vld [vmem:[%s1 + $0x5b8] sm:$0xf]
      %v961 = vld [vmem:[%s1 + $0x5bc] sm:$0xf]
      %v962 = vld [vmem:[%s1 + $0x5c0] sm:$0xf]
      %v963 = vld [vmem:[%s1 + $0x5c4] sm:$0xf]
      %v964 = vld [vmem:[%s1 + $0x5c8] sm:$0xf]
      %v965 = vld [vmem:[%s1 + $0x5cc] sm:$0xf]
      %v966 = vld [vmem:[%s1 + $0x5d0] sm:$0xf]
      %v967 = vld [vmem:[%s1 + $0x5d4] sm:$0xf]
      %v968 = vld [vmem:[%s1 + $0x5d8] sm:$0xf]
      %v969 = vld [vmem:[%s1 + $0x5dc] sm:$0xf]
      %v970 = vld [vmem:[%s1 + $0x5e0] sm:$0xf]
      %v971 = vld [vmem:[%s1 + $0x5e4] sm:$0xf]
      %v972 = vld [vmem:[%s1 + $0x5e8] sm:$0xf]
      %v973 = vld [vmem:[%s1 + $0x5ec] sm:$0xf]
      %v974 = vld [vmem:[%s1 + $0x5f0] sm:$0xf]
      %v975 = vld [vmem:[%s1 + $0x5f4] sm:$0xf]
      %v976 = vld [vmem:[%s1 + $0x5f8] sm:$0xf]
      %v977 = vld [vmem:[%s1 + $0x5fc] sm:$0xf]
      %v978 = vld [vmem:[%s1 + $0x600] sm:$0xf]
      %v979 = vld [vmem:[%s1 + $0x604] sm:$0xf]
      %v980 = vld [vmem:[%s1 + $0x608] sm:$0xf]
      %v981 = vld [vmem:[%s1 + $0x60c] sm:$0xf]
      %v982 = vld [vmem:[%s1 + $0x610] sm:$0xf]
      %v983 = vld [vmem:[%s1 + $0x614] sm:$0xf]
      %v984 = vld [vmem:[%s1 + $0x618] sm:$0xf]
      %v985 = vld [vmem:[%s1 + $0x61c] sm:$0xf]
      %v986 = vld [vmem:[%s2] sm:$0x1]
      %v988 = vlaneseq
      %v989 = vshrl.u32 %v988, 7
      %v990 = vsub.s32 0, %v989
      %v991 = vrot.slane %v986, %v990
      %v1409 = vunpack.c.l.b16 %v178
      %v1410 = vunpack.c.h.b16 %v178
      %v1411 = vunpack.c.l.b16 %v179
      %v1412 = vunpack.c.h.b16 %v179
      %v1413 = vunpack.c.l.b16 %v180
      %v1414 = vunpack.c.h.b16 %v180
      %v1415 = vunpack.c.l.b16 %v181
      %v1416 = vunpack.c.h.b16 %v181
      %v1417 = vunpack.c.l.b16 %v182
      %v1418 = vunpack.c.h.b16 %v182
      %v1419 = vunpack.c.l.b16 %v183
      %v1420 = vunpack.c.h.b16 %v183
      %v1421 = vunpack.c.l.b16 %v184
      %v1422 = vunpack.c.h.b16 %v184
      %v1423 = vunpack.c.l.b16 %v185
      %v1424 = vunpack.c.h.b16 %v185
      %v1425 = vunpack.c.l.b16 %v186
      %v1426 = vunpack.c.h.b16 %v186
      %v1427 = vunpack.c.l.b16 %v187
      %v1428 = vunpack.c.h.b16 %v187
      %v1429 = vunpack.c.l.b16 %v188
      %v1430 = vunpack.c.h.b16 %v188
      %v1431 = vunpack.c.l.b16 %v189
      %v1432 = vunpack.c.h.b16 %v189
      %v1433 = vunpack.c.l.b16 %v190
      %v1434 = vunpack.c.l.b16 %v191
      %v1435 = vunpack.c.h.b16 %v191
      %v1436 = vunpack.c.l.b16 %v192
      %v1437 = vunpack.c.h.b16 %v192
      %v1438 = vunpack.c.l.b16 %v193
      %v1439 = vunpack.c.h.b16 %v193
      %v1440 = vunpack.c.l.b16 %v194
      %v1441 = vunpack.c.h.b16 %v194
      %v1442 = vunpack.c.l.b16 %v195
      %v1443 = vunpack.c.h.b16 %v195
      %v1444 = vunpack.c.l.b16 %v196
      %v1445 = vunpack.c.h.b16 %v196
      %v1446 = vunpack.c.l.b16 %v197
      %v1447 = vunpack.c.h.b16 %v197
      %v1448 = vunpack.c.l.b16 %v198
      %v1449 = vunpack.c.h.b16 %v198
      %v1450 = vunpack.c.l.b16 %v199
      %v1451 = vunpack.c.h.b16 %v199
      %v1452 = vunpack.c.l.b16 %v200
      %v1453 = vunpack.c.h.b16 %v200
      %v1454 = vunpack.c.l.b16 %v201
      %v1455 = vunpack.c.h.b16 %v201
      %v1456 = vunpack.c.l.b16 %v202
      %v1457 = vunpack.c.h.b16 %v202
      %v1458 = vunpack.c.l.b16 %v203
      %v1459 = vunpack.c.l.b16 %v204
      %v1460 = vunpack.c.h.b16 %v204
      %v1461 = vunpack.c.l.b16 %v205
      %v1462 = vunpack.c.h.b16 %v205
      %v1463 = vunpack.c.l.b16 %v206
      %v1464 = vunpack.c.h.b16 %v206
      %v1465 = vunpack.c.l.b16 %v207
      %v1466 = vunpack.c.h.b16 %v207
      %v1467 = vunpack.c.l.b16 %v208
      %v1468 = vunpack.c.h.b16 %v208
      %v1469 = vunpack.c.l.b16 %v209
      %v1470 = vunpack.c.h.b16 %v209
      %v1471 = vunpack.c.l.b16 %v210
      %v1472 = vunpack.c.h.b16 %v210
      %v1473 = vunpack.c.l.b16 %v211
      %v1474 = vunpack.c.h.b16 %v211
      %v1475 = vunpack.c.l.b16 %v212
      %v1476 = vunpack.c.h.b16 %v212
      %v1477 = vunpack.c.l.b16 %v213
      %v1478 = vunpack.c.h.b16 %v213
      %v1479 = vunpack.c.l.b16 %v214
      %v1480 = vunpack.c.h.b16 %v214
      %v1481 = vunpack.c.l.b16 %v215
      %v1482 = vunpack.c.h.b16 %v215
      %v1483 = vunpack.c.l.b16 %v216
      %v1484 = vunpack.c.l.b16 %v217
      %v1485 = vunpack.c.h.b16 %v217
      %v1486 = vunpack.c.l.b16 %v218
      %v1487 = vunpack.c.h.b16 %v218
      %v1488 = vunpack.c.l.b16 %v219
      %v1489 = vunpack.c.h.b16 %v219
      %v1490 = vunpack.c.l.b16 %v220
      %v1491 = vunpack.c.h.b16 %v220
      %v1492 = vunpack.c.l.b16 %v221
      %v1493 = vunpack.c.h.b16 %v221
      %v1494 = vunpack.c.l.b16 %v222
      %v1495 = vunpack.c.h.b16 %v222
      %v1496 = vunpack.c.l.b16 %v223
      %v1497 = vunpack.c.h.b16 %v223
      %v1498 = vunpack.c.l.b16 %v224
      %v1499 = vunpack.c.h.b16 %v224
      %v1500 = vunpack.c.l.b16 %v225
      %v1501 = vunpack.c.h.b16 %v225
      %v1502 = vunpack.c.l.b16 %v226
      %v1503 = vunpack.c.h.b16 %v226
      %v1504 = vunpack.c.l.b16 %v227
      %v1505 = vunpack.c.h.b16 %v227
      %v1506 = vunpack.c.l.b16 %v228
      %v1507 = vunpack.c.h.b16 %v228
      %v1508 = vunpack.c.l.b16 %v229
      %v1509 = vunpack.c.l.b16 %v230
      %v1510 = vunpack.c.h.b16 %v230
      %v1511 = vunpack.c.l.b16 %v231
      %v1512 = vunpack.c.h.b16 %v231
      %v1513 = vunpack.c.l.b16 %v232
      %v1514 = vunpack.c.h.b16 %v232
      %v1515 = vunpack.c.l.b16 %v233
      %v1516 = vunpack.c.h.b16 %v233
      %v1517 = vunpack.c.l.b16 %v234
      %v1518 = vunpack.c.h.b16 %v234
      %v1519 = vunpack.c.l.b16 %v235
      %v1520 = vunpack.c.h.b16 %v235
      %v1521 = vunpack.c.l.b16 %v236
      %v1522 = vunpack.c.h.b16 %v236
      %v1523 = vunpack.c.l.b16 %v237
      %v1524 = vunpack.c.h.b16 %v237
      %v1525 = vunpack.c.l.b16 %v238
      %v1526 = vunpack.c.h.b16 %v238
      %v1527 = vunpack.c.l.b16 %v239
      %v1528 = vunpack.c.h.b16 %v239
      %v1529 = vunpack.c.l.b16 %v240
      %v1530 = vunpack.c.h.b16 %v240
      %v1531 = vunpack.c.l.b16 %v241
      %v1532 = vunpack.c.h.b16 %v241
      %v1533 = vunpack.c.l.b16 %v242
      %v1534 = vunpack.c.l.b16 %v243
      %v1535 = vunpack.c.h.b16 %v243
      %v1536 = vunpack.c.l.b16 %v244
      %v1537 = vunpack.c.h.b16 %v244
      %v1538 = vunpack.c.l.b16 %v245
      %v1539 = vunpack.c.h.b16 %v245
      %v1540 = vunpack.c.l.b16 %v246
      %v1541 = vunpack.c.h.b16 %v246
      %v1542 = vunpack.c.l.b16 %v247
      %v1543 = vunpack.c.h.b16 %v247
      %v1544 = vunpack.c.l.b16 %v248
      %v1545 = vunpack.c.h.b16 %v248
      %v1546 = vunpack.c.l.b16 %v249
      %v1547 = vunpack.c.h.b16 %v249
      %v1548 = vunpack.c.l.b16 %v250
      %v1549 = vunpack.c.h.b16 %v250
      %v1550 = vunpack.c.l.b16 %v251
      %v1551 = vunpack.c.h.b16 %v251
      %v1552 = vunpack.c.l.b16 %v252
      %v1553 = vunpack.c.h.b16 %v252
      %v1554 = vunpack.c.l.b16 %v253
      %v1555 = vunpack.c.h.b16 %v253
      %v1556 = vunpack.c.l.b16 %v254
      %v1557 = vunpack.c.h.b16 %v254
      %v1558 = vunpack.c.l.b16 %v255
      %v1559 = vunpack.c.l.b16 %v256
      %v1560 = vunpack.c.h.b16 %v256
      %v1561 = vunpack.c.l.b16 %v257
      %v1562 = vunpack.c.h.b16 %v257
      %v1563 = vunpack.c.l.b16 %v258
      %v1564 = vunpack.c.h.b16 %v258
      %v1565 = vunpack.c.l.b16 %v259
      %v1566 = vunpack.c.h.b16 %v259
      %v1567 = vunpack.c.l.b16 %v260
      %v1568 = vunpack.c.h.b16 %v260
      %v1569 = vunpack.c.l.b16 %v261
      %v1570 = vunpack.c.h.b16 %v261
      %v1571 = vunpack.c.l.b16 %v262
      %v1572 = vunpack.c.h.b16 %v262
      %v1573 = vunpack.c.l.b16 %v263
      %v1574 = vunpack.c.h.b16 %v263
      %v1575 = vunpack.c.l.b16 %v264
      %v1576 = vunpack.c.h.b16 %v264
      %v1577 = vunpack.c.l.b16 %v265
      %v1578 = vunpack.c.h.b16 %v265
      %v1579 = vunpack.c.l.b16 %v266
      %v1580 = vunpack.c.h.b16 %v266
      %v1581 = vunpack.c.l.b16 %v267
      %v1582 = vunpack.c.h.b16 %v267
      %v1583 = vunpack.c.l.b16 %v268
      %v1584 = vunpack.c.l.b16 %v269
      %v1585 = vunpack.c.h.b16 %v269
      %v1586 = vunpack.c.l.b16 %v270
      %v1587 = vunpack.c.h.b16 %v270
      %v1588 = vunpack.c.l.b16 %v271
      %v1589 = vunpack.c.h.b16 %v271
      %v1590 = vunpack.c.l.b16 %v272
      %v1591 = vunpack.c.h.b16 %v272
      %v1592 = vunpack.c.l.b16 %v273
      %v1593 = vunpack.c.h.b16 %v273
      %v1594 = vunpack.c.l.b16 %v274
      %v1595 = vunpack.c.h.b16 %v274
      %v1596 = vunpack.c.l.b16 %v275
      %v1597 = vunpack.c.h.b16 %v275
      %v1598 = vunpack.c.l.b16 %v276
      %v1599 = vunpack.c.h.b16 %v276
      %v1600 = vunpack.c.l.b16 %v277
      %v1601 = vunpack.c.h.b16 %v277
      %v1602 = vunpack.c.l.b16 %v278
      %v1603 = vunpack.c.h.b16 %v278
      %v1604 = vunpack.c.l.b16 %v279
      %v1605 = vunpack.c.h.b16 %v279
      %v1606 = vunpack.c.l.b16 %v280
      %v1607 = vunpack.c.h.b16 %v280
      %v1608 = vunpack.c.l.b16 %v281
      %v1609 = vunpack.c.l.b16 %v282
      %v1610 = vunpack.c.h.b16 %v282
      %v1611 = vunpack.c.l.b16 %v283
      %v1612 = vunpack.c.h.b16 %v283
      %v1613 = vunpack.c.l.b16 %v284
      %v1614 = vunpack.c.h.b16 %v284
      %v1615 = vunpack.c.l.b16 %v285
      %v1616 = vunpack.c.h.b16 %v285
      %v1617 = vunpack.c.l.b16 %v286
      %v1618 = vunpack.c.h.b16 %v286
      %v1619 = vunpack.c.l.b16 %v287
      %v1620 = vunpack.c.h.b16 %v287
      %v1621 = vunpack.c.l.b16 %v288
      %v1622 = vunpack.c.h.b16 %v288
      %v1623 = vunpack.c.l.b16 %v289
      %v1624 = vunpack.c.h.b16 %v289
      %v1625 = vunpack.c.l.b16 %v290
      %v1626 = vunpack.c.h.b16 %v290
      %v1627 = vunpack.c.l.b16 %v291
      %v1628 = vunpack.c.h.b16 %v291
      %v1629 = vunpack.c.l.b16 %v292
      %v1630 = vunpack.c.h.b16 %v292
      %v1631 = vunpack.c.l.b16 %v293
      %v1632 = vunpack.c.h.b16 %v293
      %v1633 = vunpack.c.l.b16 %v294
      %v1634 = vunpack.c.l.b16 %v295
      %v1635 = vunpack.c.h.b16 %v295
      %v1636 = vunpack.c.l.b16 %v296
      %v1637 = vunpack.c.h.b16 %v296
      %v1638 = vunpack.c.l.b16 %v297
      %v1639 = vunpack.c.h.b16 %v297
      %v1640 = vunpack.c.l.b16 %v298
      %v1641 = vunpack.c.h.b16 %v298
      %v1642 = vunpack.c.l.b16 %v299
      %v1643 = vunpack.c.h.b16 %v299
      %v1644 = vunpack.c.l.b16 %v300
      %v1645 = vunpack.c.h.b16 %v300
      %v1646 = vunpack.c.l.b16 %v301
      %v1647 = vunpack.c.h.b16 %v301
      %v1648 = vunpack.c.l.b16 %v302
      %v1649 = vunpack.c.h.b16 %v302
      %v1650 = vunpack.c.l.b16 %v303
      %v1651 = vunpack.c.h.b16 %v303
      %v1652 = vunpack.c.l.b16 %v304
      %v1653 = vunpack.c.h.b16 %v304
      %v1654 = vunpack.c.l.b16 %v305
      %v1655 = vunpack.c.h.b16 %v305
      %v1656 = vunpack.c.l.b16 %v306
      %v1657 = vunpack.c.h.b16 %v306
      %v1658 = vunpack.c.l.b16 %v307
      %v1659 = vunpack.c.l.b16 %v308
      %v1660 = vunpack.c.h.b16 %v308
      %v1661 = vunpack.c.l.b16 %v309
      %v1662 = vunpack.c.h.b16 %v309
      %v1663 = vunpack.c.l.b16 %v310
      %v1664 = vunpack.c.h.b16 %v310
      %v1665 = vunpack.c.l.b16 %v311
      %v1666 = vunpack.c.h.b16 %v311
      %v1667 = vunpack.c.l.b16 %v312
      %v1668 = vunpack.c.h.b16 %v312
      %v1669 = vunpack.c.l.b16 %v313
      %v1670 = vunpack.c.h.b16 %v313
      %v1671 = vunpack.c.l.b16 %v314
      %v1672 = vunpack.c.h.b16 %v314
      %v1673 = vunpack.c.l.b16 %v315
      %v1674 = vunpack.c.h.b16 %v315
      %v1675 = vunpack.c.l.b16 %v316
      %v1676 = vunpack.c.h.b16 %v316
      %v1677 = vunpack.c.l.b16 %v317
      %v1678 = vunpack.c.h.b16 %v317
      %v1679 = vunpack.c.l.b16 %v318
      %v1680 = vunpack.c.h.b16 %v318
      %v1681 = vunpack.c.l.b16 %v319
      %v1682 = vunpack.c.h.b16 %v319
      %v1683 = vunpack.c.l.b16 %v320
      %v1684 = vunpack.c.l.b16 %v321
      %v1685 = vunpack.c.h.b16 %v321
      %v1686 = vunpack.c.l.b16 %v322
      %v1687 = vunpack.c.h.b16 %v322
      %v1688 = vunpack.c.l.b16 %v323
      %v1689 = vunpack.c.h.b16 %v323
      %v1690 = vunpack.c.l.b16 %v324
      %v1691 = vunpack.c.h.b16 %v324
      %v1692 = vunpack.c.l.b16 %v325
      %v1693 = vunpack.c.h.b16 %v325
      %v1694 = vunpack.c.l.b16 %v326
      %v1695 = vunpack.c.h.b16 %v326
      %v1696 = vunpack.c.l.b16 %v327
      %v1697 = vunpack.c.h.b16 %v327
      %v1698 = vunpack.c.l.b16 %v328
      %v1699 = vunpack.c.h.b16 %v328
      %v1700 = vunpack.c.l.b16 %v329
      %v1701 = vunpack.c.h.b16 %v329
      %v1702 = vunpack.c.l.b16 %v330
      %v1703 = vunpack.c.h.b16 %v330
      %v1704 = vunpack.c.l.b16 %v331
      %v1705 = vunpack.c.h.b16 %v331
      %v1706 = vunpack.c.l.b16 %v332
      %v1707 = vunpack.c.h.b16 %v332
      %v1708 = vunpack.c.l.b16 %v333
      %v1709 = vunpack.c.l.b16 %v334
      %v1710 = vunpack.c.h.b16 %v334
      %v1711 = vunpack.c.l.b16 %v335
      %v1712 = vunpack.c.h.b16 %v335
      %v1713 = vunpack.c.l.b16 %v336
      %v1714 = vunpack.c.h.b16 %v336
      %v1715 = vunpack.c.l.b16 %v337
      %v1716 = vunpack.c.h.b16 %v337
      %v1717 = vunpack.c.l.b16 %v338
      %v1718 = vunpack.c.h.b16 %v338
      %v1719 = vunpack.c.l.b16 %v339
      %v1720 = vunpack.c.h.b16 %v339
      %v1721 = vunpack.c.l.b16 %v340
      %v1722 = vunpack.c.h.b16 %v340
      %v1723 = vunpack.c.l.b16 %v341
      %v1724 = vunpack.c.h.b16 %v341
      %v1725 = vunpack.c.l.b16 %v342
      %v1726 = vunpack.c.h.b16 %v342
      %v1727 = vunpack.c.l.b16 %v343
      %v1728 = vunpack.c.h.b16 %v343
      %v1729 = vunpack.c.l.b16 %v344
      %v1730 = vunpack.c.h.b16 %v344
      %v1731 = vunpack.c.l.b16 %v345
      %v1732 = vunpack.c.h.b16 %v345
      %v1733 = vunpack.c.l.b16 %v346
      %v1734 = vunpack.c.l.b16 %v347
      %v1735 = vunpack.c.h.b16 %v347
      %v1736 = vunpack.c.l.b16 %v348
      %v1737 = vunpack.c.h.b16 %v348
      %v1738 = vunpack.c.l.b16 %v349
      %v1739 = vunpack.c.h.b16 %v349
      %v1740 = vunpack.c.l.b16 %v350
      %v1741 = vunpack.c.h.b16 %v350
      %v1742 = vunpack.c.l.b16 %v351
      %v1743 = vunpack.c.h.b16 %v351
      %v1744 = vunpack.c.l.b16 %v352
      %v1745 = vunpack.c.h.b16 %v352
      %v1746 = vunpack.c.l.b16 %v353
      %v1747 = vunpack.c.h.b16 %v353
      %v1748 = vunpack.c.l.b16 %v354
      %v1749 = vunpack.c.h.b16 %v354
      %v1750 = vunpack.c.l.b16 %v355
      %v1751 = vunpack.c.h.b16 %v355
      %v1752 = vunpack.c.l.b16 %v356
      %v1753 = vunpack.c.h.b16 %v356
      %v1754 = vunpack.c.l.b16 %v357
      %v1755 = vunpack.c.h.b16 %v357
      %v1756 = vunpack.c.l.b16 %v358
      %v1757 = vunpack.c.h.b16 %v358
      %v1758 = vunpack.c.l.b16 %v359
      %v1759 = vunpack.c.l.b16 %v360
      %v1760 = vunpack.c.h.b16 %v360
      %v1761 = vunpack.c.l.b16 %v361
      %v1762 = vunpack.c.h.b16 %v361
      %v1763 = vunpack.c.l.b16 %v362
      %v1764 = vunpack.c.h.b16 %v362
      %v1765 = vunpack.c.l.b16 %v363
      %v1766 = vunpack.c.h.b16 %v363
      %v1767 = vunpack.c.l.b16 %v364
      %v1768 = vunpack.c.h.b16 %v364
      %v1769 = vunpack.c.l.b16 %v365
      %v1770 = vunpack.c.h.b16 %v365
      %v1771 = vunpack.c.l.b16 %v366
      %v1772 = vunpack.c.h.b16 %v366
      %v1773 = vunpack.c.l.b16 %v367
      %v1774 = vunpack.c.h.b16 %v367
      %v1775 = vunpack.c.l.b16 %v368
      %v1776 = vunpack.c.h.b16 %v368
      %v1777 = vunpack.c.l.b16 %v369
      %v1778 = vunpack.c.h.b16 %v369
      %v1779 = vunpack.c.l.b16 %v370
      %v1780 = vunpack.c.h.b16 %v370
      %v1781 = vunpack.c.l.b16 %v371
      %v1782 = vunpack.c.h.b16 %v371
      %v1783 = vunpack.c.l.b16 %v372
      %v1784 = vunpack.c.l.b16 %v373
      %v1785 = vunpack.c.h.b16 %v373
      %v1786 = vunpack.c.l.b16 %v374
      %v1787 = vunpack.c.h.b16 %v374
      %v1788 = vunpack.c.l.b16 %v375
      %v1789 = vunpack.c.h.b16 %v375
      %v1790 = vunpack.c.l.b16 %v376
      %v1791 = vunpack.c.h.b16 %v376
      %v1792 = vunpack.c.l.b16 %v377
      %v1793 = vunpack.c.h.b16 %v377
      %v1794 = vunpack.c.l.b16 %v378
      %v1795 = vunpack.c.h.b16 %v378
      %v1796 = vunpack.c.l.b16 %v379
      %v1797 = vunpack.c.h.b16 %v379
      %v1798 = vunpack.c.l.b16 %v380
      %v1799 = vunpack.c.h.b16 %v380
      %v1800 = vunpack.c.l.b16 %v381
      %v1801 = vunpack.c.h.b16 %v381
      %v1802 = vunpack.c.l.b16 %v382
      %v1803 = vunpack.c.h.b16 %v382
      %v1804 = vunpack.c.l.b16 %v383
      %v1805 = vunpack.c.h.b16 %v383
      %v1806 = vunpack.c.l.b16 %v384
      %v1807 = vunpack.c.h.b16 %v384
      %v1808 = vunpack.c.l.b16 %v385
      %v1809 = vunpack.c.l.b16 %v386
      %v1810 = vunpack.c.h.b16 %v386
      %v1811 = vunpack.c.l.b16 %v387
      %v1812 = vunpack.c.h.b16 %v387
      %v1813 = vunpack.c.l.b16 %v388
      %v1814 = vunpack.c.h.b16 %v388
      %v1815 = vunpack.c.l.b16 %v389
      %v1816 = vunpack.c.h.b16 %v389
      %v1817 = vunpack.c.l.b16 %v390
      %v1818 = vunpack.c.h.b16 %v390
      %v1819 = vunpack.c.l.b16 %v391
      %v1820 = vunpack.c.h.b16 %v391
      %v1821 = vunpack.c.l.b16 %v392
      %v1822 = vunpack.c.h.b16 %v392
      %v1823 = vunpack.c.l.b16 %v393
      %v1824 = vunpack.c.h.b16 %v393
      %v1825 = vunpack.c.l.b16 %v394
      %v1826 = vunpack.c.h.b16 %v394
      %v1827 = vunpack.c.l.b16 %v395
      %v1828 = vunpack.c.h.b16 %v395
      %v1829 = vunpack.c.l.b16 %v396
      %v1830 = vunpack.c.h.b16 %v396
      %v1831 = vunpack.c.l.b16 %v397
      %v1832 = vunpack.c.h.b16 %v397
      %v1833 = vunpack.c.l.b16 %v398
      %v1834 = vunpack.c.l.b16 %v399
      %v1835 = vunpack.c.h.b16 %v399
      %v1836 = vunpack.c.l.b16 %v400
      %v1837 = vunpack.c.h.b16 %v400
      %v1838 = vunpack.c.l.b16 %v401
      %v1839 = vunpack.c.h.b16 %v401
      %v1840 = vunpack.c.l.b16 %v402
      %v1841 = vunpack.c.h.b16 %v402
      %v1842 = vunpack.c.l.b16 %v403
      %v1843 = vunpack.c.h.b16 %v403
      %v1844 = vunpack.c.l.b16 %v404
      %v1845 = vunpack.c.h.b16 %v404
      %v1846 = vunpack.c.l.b16 %v405
      %v1847 = vunpack.c.h.b16 %v405
      %v1848 = vunpack.c.l.b16 %v406
      %v1849 = vunpack.c.h.b16 %v406
      %v1850 = vunpack.c.l.b16 %v407
      %v1851 = vunpack.c.h.b16 %v407
      %v1852 = vunpack.c.l.b16 %v408
      %v1853 = vunpack.c.h.b16 %v408
      %v1854 = vunpack.c.l.b16 %v409
      %v1855 = vunpack.c.h.b16 %v409
      %v1856 = vunpack.c.l.b16 %v410
      %v1857 = vunpack.c.h.b16 %v410
      %v1858 = vunpack.c.l.b16 %v411
      %v1859 = vunpack.c.l.b16 %v412
      %v1860 = vunpack.c.h.b16 %v412
      %v1861 = vunpack.c.l.b16 %v413
      %v1862 = vunpack.c.h.b16 %v413
      %v1863 = vunpack.c.l.b16 %v414
      %v1864 = vunpack.c.h.b16 %v414
      %v1865 = vunpack.c.l.b16 %v415
      %v1866 = vunpack.c.h.b16 %v415
      %v1867 = vunpack.c.l.b16 %v416
      %v1868 = vunpack.c.h.b16 %v416
      %v1869 = vunpack.c.l.b16 %v417
      %v1870 = vunpack.c.h.b16 %v417
      %v1871 = vunpack.c.l.b16 %v418
      %v1872 = vunpack.c.h.b16 %v418
      %v1873 = vunpack.c.l.b16 %v419
      %v1874 = vunpack.c.h.b16 %v419
      %v1875 = vunpack.c.l.b16 %v420
      %v1876 = vunpack.c.h.b16 %v420
      %v1877 = vunpack.c.l.b16 %v421
      %v1878 = vunpack.c.h.b16 %v421
      %v1879 = vunpack.c.l.b16 %v422
      %v1880 = vunpack.c.h.b16 %v422
      %v1881 = vunpack.c.l.b16 %v423
      %v1882 = vunpack.c.h.b16 %v423
      %v1883 = vunpack.c.l.b16 %v424
      %v1884 = vunpack.c.l.b16 %v425
      %v1885 = vunpack.c.h.b16 %v425
      %v1886 = vunpack.c.l.b16 %v426
      %v1887 = vunpack.c.h.b16 %v426
      %v1888 = vunpack.c.l.b16 %v427
      %v1889 = vunpack.c.h.b16 %v427
      %v1890 = vunpack.c.l.b16 %v428
      %v1891 = vunpack.c.h.b16 %v428
      %v1892 = vunpack.c.l.b16 %v429
      %v1893 = vunpack.c.h.b16 %v429
      %v1894 = vunpack.c.l.b16 %v430
      %v1895 = vunpack.c.h.b16 %v430
      %v1896 = vunpack.c.l.b16 %v431
      %v1897 = vunpack.c.h.b16 %v431
      %v1898 = vunpack.c.l.b16 %v432
      %v1899 = vunpack.c.h.b16 %v432
      %v1900 = vunpack.c.l.b16 %v433
      %v1901 = vunpack.c.h.b16 %v433
      %v1902 = vunpack.c.l.b16 %v434
      %v1903 = vunpack.c.h.b16 %v434
      %v1904 = vunpack.c.l.b16 %v435
      %v1905 = vunpack.c.h.b16 %v435
      %v1906 = vunpack.c.l.b16 %v436
      %v1907 = vunpack.c.h.b16 %v436
      %v1908 = vunpack.c.l.b16 %v437
      %v1909 = vunpack.c.l.b16 %v438
      %v1910 = vunpack.c.h.b16 %v438
      %v1911 = vunpack.c.l.b16 %v439
      %v1912 = vunpack.c.h.b16 %v439
      %v1913 = vunpack.c.l.b16 %v440
      %v1914 = vunpack.c.h.b16 %v440
      %v1915 = vunpack.c.l.b16 %v441
      %v1916 = vunpack.c.h.b16 %v441
      %v1917 = vunpack.c.l.b16 %v442
      %v1918 = vunpack.c.h.b16 %v442
      %v1919 = vunpack.c.l.b16 %v443
      %v1920 = vunpack.c.h.b16 %v443
      %v1921 = vunpack.c.l.b16 %v444
      %v1922 = vunpack.c.h.b16 %v444
      %v1923 = vunpack.c.l.b16 %v445
      %v1924 = vunpack.c.h.b16 %v445
      %v1925 = vunpack.c.l.b16 %v446
      %v1926 = vunpack.c.h.b16 %v446
      %v1927 = vunpack.c.l.b16 %v447
      %v1928 = vunpack.c.h.b16 %v447
      %v1929 = vunpack.c.l.b16 %v448
      %v1930 = vunpack.c.h.b16 %v448
      %v1931 = vunpack.c.l.b16 %v449
      %v1932 = vunpack.c.h.b16 %v449
      %v1933 = vunpack.c.l.b16 %v450
      %v1934 = vunpack.c.l.b16 %v451
      %v1935 = vunpack.c.h.b16 %v451
      %v1936 = vunpack.c.l.b16 %v452
      %v1937 = vunpack.c.h.b16 %v452
      %v1938 = vunpack.c.l.b16 %v453
      %v1939 = vunpack.c.h.b16 %v453
      %v1940 = vunpack.c.l.b16 %v454
      %v1941 = vunpack.c.h.b16 %v454
      %v1942 = vunpack.c.l.b16 %v455
      %v1943 = vunpack.c.h.b16 %v455
      %v1944 = vunpack.c.l.b16 %v456
      %v1945 = vunpack.c.h.b16 %v456
      %v1946 = vunpack.c.l.b16 %v457
      %v1947 = vunpack.c.h.b16 %v457
      %v1948 = vunpack.c.l.b16 %v458
      %v1949 = vunpack.c.h.b16 %v458
      %v1950 = vunpack.c.l.b16 %v459
      %v1951 = vunpack.c.h.b16 %v459
      %v1952 = vunpack.c.l.b16 %v460
      %v1953 = vunpack.c.h.b16 %v460
      %v1954 = vunpack.c.l.b16 %v461
      %v1955 = vunpack.c.h.b16 %v461
      %v1956 = vunpack.c.l.b16 %v462
      %v1957 = vunpack.c.h.b16 %v462
      %v1958 = vunpack.c.l.b16 %v463
      %v1959 = vunpack.c.l.b16 %v464
      %v1960 = vunpack.c.h.b16 %v464
      %v1961 = vunpack.c.l.b16 %v465
      %v1962 = vunpack.c.h.b16 %v465
      %v1963 = vunpack.c.l.b16 %v466
      %v1964 = vunpack.c.h.b16 %v466
      %v1965 = vunpack.c.l.b16 %v467
      %v1966 = vunpack.c.h.b16 %v467
      %v1967 = vunpack.c.l.b16 %v468
      %v1968 = vunpack.c.h.b16 %v468
      %v1969 = vunpack.c.l.b16 %v469
      %v1970 = vunpack.c.h.b16 %v469
      %v1971 = vunpack.c.l.b16 %v470
      %v1972 = vunpack.c.h.b16 %v470
      %v1973 = vunpack.c.l.b16 %v471
      %v1974 = vunpack.c.h.b16 %v471
      %v1975 = vunpack.c.l.b16 %v472
      %v1976 = vunpack.c.h.b16 %v472
      %v1977 = vunpack.c.l.b16 %v473
      %v1978 = vunpack.c.h.b16 %v473
      %v1979 = vunpack.c.l.b16 %v474
      %v1980 = vunpack.c.h.b16 %v474
      %v1981 = vunpack.c.l.b16 %v475
      %v1982 = vunpack.c.h.b16 %v475
      %v1983 = vunpack.c.l.b16 %v476
      %v1984 = vunpack.c.l.b16 %v477
      %v1985 = vunpack.c.h.b16 %v477
      %v1986 = vunpack.c.l.b16 %v478
      %v1987 = vunpack.c.h.b16 %v478
      %v1988 = vunpack.c.l.b16 %v479
      %v1989 = vunpack.c.h.b16 %v479
      %v1990 = vunpack.c.l.b16 %v480
      %v1991 = vunpack.c.h.b16 %v480
      %v1992 = vunpack.c.l.b16 %v481
      %v1993 = vunpack.c.h.b16 %v481
      %v1994 = vunpack.c.l.b16 %v482
      %v1995 = vunpack.c.h.b16 %v482
      %v1996 = vunpack.c.l.b16 %v483
      %v1997 = vunpack.c.h.b16 %v483
      %v1998 = vunpack.c.l.b16 %v484
      %v1999 = vunpack.c.h.b16 %v484
      %v2000 = vunpack.c.l.b16 %v485
      %v2001 = vunpack.c.h.b16 %v485
      %v2002 = vunpack.c.l.b16 %v486
      %v2003 = vunpack.c.h.b16 %v486
      %v2004 = vunpack.c.l.b16 %v487
      %v2005 = vunpack.c.h.b16 %v487
      %v2006 = vunpack.c.l.b16 %v488
      %v2007 = vunpack.c.h.b16 %v488
      %v2008 = vunpack.c.l.b16 %v489
      %v2009 = vunpack.c.l.b16 %v490
      %v2010 = vunpack.c.h.b16 %v490
      %v2011 = vunpack.c.l.b16 %v491
      %v2012 = vunpack.c.h.b16 %v491
      %v2013 = vunpack.c.l.b16 %v492
      %v2014 = vunpack.c.h.b16 %v492
      %v2015 = vunpack.c.l.b16 %v493
      %v2016 = vunpack.c.h.b16 %v493
      %v2017 = vunpack.c.l.b16 %v494
      %v2018 = vunpack.c.h.b16 %v494
      %v2019 = vunpack.c.l.b16 %v495
      %v2020 = vunpack.c.h.b16 %v495
      %v2021 = vunpack.c.l.b16 %v496
      %v2022 = vunpack.c.h.b16 %v496
      %v2023 = vunpack.c.l.b16 %v497
      %v2024 = vunpack.c.h.b16 %v497
      %v2025 = vunpack.c.l.b16 %v498
      %v2026 = vunpack.c.h.b16 %v498
      %v2027 = vunpack.c.l.b16 %v499
      %v2028 = vunpack.c.h.b16 %v499
      %v2029 = vunpack.c.l.b16 %v500
      %v2030 = vunpack.c.h.b16 %v500
      %v2031 = vunpack.c.l.b16 %v501
      %v2032 = vunpack.c.h.b16 %v501
      %v2033 = vunpack.c.l.b16 %v502
      %v2034 = vunpack.c.l.b16 %v503
      %v2035 = vunpack.c.h.b16 %v503
      %v2036 = vunpack.c.l.b16 %v504
      %v2037 = vunpack.c.h.b16 %v504
      %v2038 = vunpack.c.l.b16 %v505
      %v2039 = vunpack.c.h.b16 %v505
      %v2040 = vunpack.c.l.b16 %v506
      %v2041 = vunpack.c.h.b16 %v506
      %v2042 = vunpack.c.l.b16 %v507
      %v2043 = vunpack.c.h.b16 %v507
      %v2044 = vunpack.c.l.b16 %v508
      %v2045 = vunpack.c.h.b16 %v508
      %v2046 = vunpack.c.l.b16 %v509
      %v2047 = vunpack.c.h.b16 %v509
      %v2048 = vunpack.c.l.b16 %v510
      %v2049 = vunpack.c.h.b16 %v510
      %v2050 = vunpack.c.l.b16 %v511
      %v2051 = vunpack.c.h.b16 %v511
      %v2052 = vunpack.c.l.b16 %v512
      %v2053 = vunpack.c.h.b16 %v512
      %v2054 = vunpack.c.l.b16 %v513
      %v2055 = vunpack.c.h.b16 %v513
      %v2056 = vunpack.c.l.b16 %v514
      %v2057 = vunpack.c.h.b16 %v514
      %v2058 = vunpack.c.l.b16 %v515
      %v2059 = vunpack.c.l.b16 %v516
      %v2060 = vunpack.c.h.b16 %v516
      %v2061 = vunpack.c.l.b16 %v517
      %v2062 = vunpack.c.h.b16 %v517
      %v2063 = vunpack.c.l.b16 %v518
      %v2064 = vunpack.c.h.b16 %v518
      %v2065 = vunpack.c.l.b16 %v519
      %v2066 = vunpack.c.h.b16 %v519
      %v2067 = vunpack.c.l.b16 %v520
      %v2068 = vunpack.c.h.b16 %v520
      %v2069 = vunpack.c.l.b16 %v521
      %v2070 = vunpack.c.h.b16 %v521
      %v2071 = vunpack.c.l.b16 %v522
      %v2072 = vunpack.c.h.b16 %v522
      %v2073 = vunpack.c.l.b16 %v523
      %v2074 = vunpack.c.h.b16 %v523
      %v2075 = vunpack.c.l.b16 %v524
      %v2076 = vunpack.c.h.b16 %v524
      %v2077 = vunpack.c.l.b16 %v525
      %v2078 = vunpack.c.h.b16 %v525
      %v2079 = vunpack.c.l.b16 %v526
      %v2080 = vunpack.c.h.b16 %v526
      %v2081 = vunpack.c.l.b16 %v527
      %v2082 = vunpack.c.h.b16 %v527
      %v2083 = vunpack.c.l.b16 %v528
      %v2084 = vunpack.c.l.b16 %v529
      %v2085 = vunpack.c.h.b16 %v529
      %v2086 = vunpack.c.l.b16 %v530
      %v2087 = vunpack.c.h.b16 %v530
      %v2088 = vunpack.c.l.b16 %v531
      %v2089 = vunpack.c.h.b16 %v531
      %v2090 = vunpack.c.l.b16 %v532
      %v2091 = vunpack.c.h.b16 %v532
      %v2092 = vunpack.c.l.b16 %v533
      %v2093 = vunpack.c.h.b16 %v533
      %v2094 = vunpack.c.l.b16 %v534
      %v2095 = vunpack.c.h.b16 %v534
      %v2096 = vunpack.c.l.b16 %v535
      %v2097 = vunpack.c.h.b16 %v535
      %v2098 = vunpack.c.l.b16 %v536
      %v2099 = vunpack.c.h.b16 %v536
      %v2100 = vunpack.c.l.b16 %v537
      %v2101 = vunpack.c.h.b16 %v537
      %v2102 = vunpack.c.l.b16 %v538
      %v2103 = vunpack.c.h.b16 %v538
      %v2104 = vunpack.c.l.b16 %v539
      %v2105 = vunpack.c.h.b16 %v539
      %v2106 = vunpack.c.l.b16 %v540
      %v2107 = vunpack.c.h.b16 %v540
      %v2108 = vunpack.c.l.b16 %v541
      %v2109 = vunpack.c.l.b16 %v542
      %v2110 = vunpack.c.h.b16 %v542
      %v2111 = vunpack.c.l.b16 %v543
      %v2112 = vunpack.c.h.b16 %v543
      %v2113 = vunpack.c.l.b16 %v544
      %v2114 = vunpack.c.h.b16 %v544
      %v2115 = vunpack.c.l.b16 %v545
      %v2116 = vunpack.c.h.b16 %v545
      %v2117 = vunpack.c.l.b16 %v546
      %v2118 = vunpack.c.h.b16 %v546
      %v2119 = vunpack.c.l.b16 %v547
      %v2120 = vunpack.c.h.b16 %v547
      %v2121 = vunpack.c.l.b16 %v548
      %v2122 = vunpack.c.h.b16 %v548
      %v2123 = vunpack.c.l.b16 %v549
      %v2124 = vunpack.c.h.b16 %v549
      %v2125 = vunpack.c.l.b16 %v550
      %v2126 = vunpack.c.h.b16 %v550
      %v2127 = vunpack.c.l.b16 %v551
      %v2128 = vunpack.c.h.b16 %v551
      %v2129 = vunpack.c.l.b16 %v552
      %v2130 = vunpack.c.h.b16 %v552
      %v2131 = vunpack.c.l.b16 %v553
      %v2132 = vunpack.c.h.b16 %v553
      %v2133 = vunpack.c.l.b16 %v554
      %v2134 = vunpack.c.l.b16 %v555
      %v2135 = vunpack.c.h.b16 %v555
      %v2136 = vunpack.c.l.b16 %v556
      %v2137 = vunpack.c.h.b16 %v556
      %v2138 = vunpack.c.l.b16 %v557
      %v2139 = vunpack.c.h.b16 %v557
      %v2140 = vunpack.c.l.b16 %v558
      %v2141 = vunpack.c.h.b16 %v558
      %v2142 = vunpack.c.l.b16 %v559
      %v2143 = vunpack.c.h.b16 %v559
      %v2144 = vunpack.c.l.b16 %v560
      %v2145 = vunpack.c.h.b16 %v560
      %v2146 = vunpack.c.l.b16 %v561
      %v2147 = vunpack.c.h.b16 %v561
      %v2148 = vunpack.c.l.b16 %v562
      %v2149 = vunpack.c.h.b16 %v562
      %v2150 = vunpack.c.l.b16 %v563
      %v2151 = vunpack.c.h.b16 %v563
      %v2152 = vunpack.c.l.b16 %v564
      %v2153 = vunpack.c.h.b16 %v564
      %v2154 = vunpack.c.l.b16 %v565
      %v2155 = vunpack.c.h.b16 %v565
      %v2156 = vunpack.c.l.b16 %v566
      %v2157 = vunpack.c.h.b16 %v566
      %v2158 = vunpack.c.l.b16 %v567
      %v2159 = vunpack.c.l.b16 %v568
      %v2160 = vunpack.c.h.b16 %v568
      %v2161 = vunpack.c.l.b16 %v569
      %v2162 = vunpack.c.h.b16 %v569
      %v2163 = vunpack.c.l.b16 %v570
      %v2164 = vunpack.c.h.b16 %v570
      %v2165 = vunpack.c.l.b16 %v571
      %v2166 = vunpack.c.h.b16 %v571
      %v2167 = vunpack.c.l.b16 %v572
      %v2168 = vunpack.c.h.b16 %v572
      %v2169 = vunpack.c.l.b16 %v573
      %v2170 = vunpack.c.h.b16 %v573
      %v2171 = vunpack.c.l.b16 %v574
      %v2172 = vunpack.c.h.b16 %v574
      %v2173 = vunpack.c.l.b16 %v575
      %v2174 = vunpack.c.h.b16 %v575
      %v2175 = vunpack.c.l.b16 %v576
      %v2176 = vunpack.c.h.b16 %v576
      %v2177 = vunpack.c.l.b16 %v577
      %v2178 = vunpack.c.h.b16 %v577
      %v2179 = vunpack.c.l.b16 %v578
      %v2180 = vunpack.c.h.b16 %v578
      %v2181 = vunpack.c.l.b16 %v579
      %v2182 = vunpack.c.h.b16 %v579
      %v2183 = vunpack.c.l.b16 %v580
      %v2184 = vunpack.c.l.b16 %v581
      %v2185 = vunpack.c.h.b16 %v581
      %v2186 = vunpack.c.l.b16 %v582
      %v2187 = vunpack.c.h.b16 %v582
      %v2188 = vunpack.c.l.b16 %v583
      %v2189 = vunpack.c.h.b16 %v583
      %v2190 = vunpack.c.l.b16 %v584
      %v2191 = vunpack.c.h.b16 %v584
      %v2192 = vunpack.c.l.b16 %v585
      %v2193 = vunpack.c.h.b16 %v585
      %v2194 = vunpack.c.l.b16 %v586
      %v2195 = vunpack.c.h.b16 %v586
      %v2196 = vunpack.c.l.b16 %v587
      %v2197 = vunpack.c.h.b16 %v587
      %v2198 = vunpack.c.l.b16 %v588
      %v2199 = vunpack.c.h.b16 %v588
      %v2200 = vunpack.c.l.b16 %v589
      %v2201 = vunpack.c.h.b16 %v589
      %v2202 = vunpack.c.l.b16 %v590
      %v2203 = vunpack.c.h.b16 %v590
      %v2204 = vunpack.c.l.b16 %v591
      %v2205 = vunpack.c.h.b16 %v591
      %v2206 = vunpack.c.l.b16 %v592
      %v2207 = vunpack.c.h.b16 %v592
      %v2208 = vunpack.c.l.b16 %v593
      %v2209 = vpack.c.b16 %v1434, %v1409
      %v2210 = vpack.c.b16 %v1435, %v1410
      %v2211 = vpack.c.b16 %v1436, %v1411
      %v2212 = vpack.c.b16 %v1437, %v1412
      %v2213 = vpack.c.b16 %v1438, %v1413
      %v2214 = vpack.c.b16 %v1439, %v1414
      %v2215 = vpack.c.b16 %v1440, %v1415
      %v2216 = vpack.c.b16 %v1441, %v1416
      %v2217 = vpack.c.b16 %v1442, %v1417
      %v2218 = vpack.c.b16 %v1443, %v1418
      %v2219 = vpack.c.b16 %v1444, %v1419
      %v2220 = vpack.c.b16 %v1445, %v1420
      %v2221 = vpack.c.b16 %v1446, %v1421
      %v2222 = vpack.c.b16 %v1447, %v1422
      %v2223 = vpack.c.b16 %v1448, %v1423
      %v2224 = vpack.c.b16 %v1449, %v1424
      %v2225 = vpack.c.b16 %v1450, %v1425
      %v2226 = vpack.c.b16 %v1451, %v1426
      %v2227 = vpack.c.b16 %v1452, %v1427
      %v2228 = vpack.c.b16 %v1453, %v1428
      %v2229 = vpack.c.b16 %v1454, %v1429
      %v2230 = vpack.c.b16 %v1455, %v1430
      %v2231 = vpack.c.b16 %v1456, %v1431
      %v2232 = vpack.c.b16 %v1457, %v1432
      %v2233 = vpack.c.b16 %v1458, %v1433
      %v2234 = vpack.c.b16 %v1484, %v1459
      %v2235 = vpack.c.b16 %v1485, %v1460
      %v2236 = vpack.c.b16 %v1486, %v1461
      %v2237 = vpack.c.b16 %v1487, %v1462
      %v2238 = vpack.c.b16 %v1488, %v1463
      %v2239 = vpack.c.b16 %v1489, %v1464
      %v2240 = vpack.c.b16 %v1490, %v1465
      %v2241 = vpack.c.b16 %v1491, %v1466
      %v2242 = vpack.c.b16 %v1492, %v1467
      %v2243 = vpack.c.b16 %v1493, %v1468
      %v2244 = vpack.c.b16 %v1494, %v1469
      %v2245 = vpack.c.b16 %v1495, %v1470
      %v2246 = vpack.c.b16 %v1496, %v1471
      %v2247 = vpack.c.b16 %v1497, %v1472
      %v2248 = vpack.c.b16 %v1498, %v1473
      %v2249 = vpack.c.b16 %v1499, %v1474
      %v2250 = vpack.c.b16 %v1500, %v1475
      %v2251 = vpack.c.b16 %v1501, %v1476
      %v2252 = vpack.c.b16 %v1502, %v1477
      %v2253 = vpack.c.b16 %v1503, %v1478
      %v2254 = vpack.c.b16 %v1504, %v1479
      %v2255 = vpack.c.b16 %v1505, %v1480
      %v2256 = vpack.c.b16 %v1506, %v1481
      %v2257 = vpack.c.b16 %v1507, %v1482
      %v2258 = vpack.c.b16 %v1508, %v1483
      %v2259 = vpack.c.b16 %v1534, %v1509
      %v2260 = vpack.c.b16 %v1535, %v1510
      %v2261 = vpack.c.b16 %v1536, %v1511
      %v2262 = vpack.c.b16 %v1537, %v1512
      %v2263 = vpack.c.b16 %v1538, %v1513
      %v2264 = vpack.c.b16 %v1539, %v1514
      %v2265 = vpack.c.b16 %v1540, %v1515
      %v2266 = vpack.c.b16 %v1541, %v1516
      %v2267 = vpack.c.b16 %v1542, %v1517
      %v2268 = vpack.c.b16 %v1543, %v1518
      %v2269 = vpack.c.b16 %v1544, %v1519
      %v2270 = vpack.c.b16 %v1545, %v1520
      %v2271 = vpack.c.b16 %v1546, %v1521
      %v2272 = vpack.c.b16 %v1547, %v1522
      %v2273 = vpack.c.b16 %v1548, %v1523
      %v2274 = vpack.c.b16 %v1549, %v1524
      %v2275 = vpack.c.b16 %v1550, %v1525
      %v2276 = vpack.c.b16 %v1551, %v1526
      %v2277 = vpack.c.b16 %v1552, %v1527
      %v2278 = vpack.c.b16 %v1553, %v1528
      %v2279 = vpack.c.b16 %v1554, %v1529
      %v2280 = vpack.c.b16 %v1555, %v1530
      %v2281 = vpack.c.b16 %v1556, %v1531
      %v2282 = vpack.c.b16 %v1557, %v1532
      %v2283 = vpack.c.b16 %v1558, %v1533
      %v2284 = vpack.c.b16 %v1584, %v1559
      %v2285 = vpack.c.b16 %v1585, %v1560
      %v2286 = vpack.c.b16 %v1586, %v1561
      %v2287 = vpack.c.b16 %v1587, %v1562
      %v2288 = vpack.c.b16 %v1588, %v1563
      %v2289 = vpack.c.b16 %v1589, %v1564
      %v2290 = vpack.c.b16 %v1590, %v1565
      %v2291 = vpack.c.b16 %v1591, %v1566
      %v2292 = vpack.c.b16 %v1592, %v1567
      %v2293 = vpack.c.b16 %v1593, %v1568
      %v2294 = vpack.c.b16 %v1594, %v1569
      %v2295 = vpack.c.b16 %v1595, %v1570
      %v2296 = vpack.c.b16 %v1596, %v1571
      %v2297 = vpack.c.b16 %v1597, %v1572
      %v2298 = vpack.c.b16 %v1598, %v1573
      %v2299 = vpack.c.b16 %v1599, %v1574
      %v2300 = vpack.c.b16 %v1600, %v1575
      %v2301 = vpack.c.b16 %v1601, %v1576
      %v2302 = vpack.c.b16 %v1602, %v1577
      %v2303 = vpack.c.b16 %v1603, %v1578
      %v2304 = vpack.c.b16 %v1604, %v1579
      %v2305 = vpack.c.b16 %v1605, %v1580
      %v2306 = vpack.c.b16 %v1606, %v1581
      %v2307 = vpack.c.b16 %v1607, %v1582
      %v2308 = vpack.c.b16 %v1608, %v1583
      %v2309 = vpack.c.b16 %v1634, %v1609
      %v2310 = vpack.c.b16 %v1635, %v1610
      %v2311 = vpack.c.b16 %v1636, %v1611
      %v2312 = vpack.c.b16 %v1637, %v1612
      %v2313 = vpack.c.b16 %v1638, %v1613
      %v2314 = vpack.c.b16 %v1639, %v1614
      %v2315 = vpack.c.b16 %v1640, %v1615
      %v2316 = vpack.c.b16 %v1641, %v1616
      %v2317 = vpack.c.b16 %v1642, %v1617
      %v2318 = vpack.c.b16 %v1643, %v1618
      %v2319 = vpack.c.b16 %v1644, %v1619
      %v2320 = vpack.c.b16 %v1645, %v1620
      %v2321 = vpack.c.b16 %v1646, %v1621
      %v2322 = vpack.c.b16 %v1647, %v1622
      %v2323 = vpack.c.b16 %v1648, %v1623
      %v2324 = vpack.c.b16 %v1649, %v1624
      %v2325 = vpack.c.b16 %v1650, %v1625
      %v2326 = vpack.c.b16 %v1651, %v1626
      %v2327 = vpack.c.b16 %v1652, %v1627
      %v2328 = vpack.c.b16 %v1653, %v1628
      %v2329 = vpack.c.b16 %v1654, %v1629
      %v2330 = vpack.c.b16 %v1655, %v1630
      %v2331 = vpack.c.b16 %v1656, %v1631
      %v2332 = vpack.c.b16 %v1657, %v1632
      %v2333 = vpack.c.b16 %v1658, %v1633
      %v2334 = vpack.c.b16 %v1684, %v1659
      %v2335 = vpack.c.b16 %v1685, %v1660
      %v2336 = vpack.c.b16 %v1686, %v1661
      %v2337 = vpack.c.b16 %v1687, %v1662
      %v2338 = vpack.c.b16 %v1688, %v1663
      %v2339 = vpack.c.b16 %v1689, %v1664
      %v2340 = vpack.c.b16 %v1690, %v1665
      %v2341 = vpack.c.b16 %v1691, %v1666
      %v2342 = vpack.c.b16 %v1692, %v1667
      %v2343 = vpack.c.b16 %v1693, %v1668
      %v2344 = vpack.c.b16 %v1694, %v1669
      %v2345 = vpack.c.b16 %v1695, %v1670
      %v2346 = vpack.c.b16 %v1696, %v1671
      %v2347 = vpack.c.b16 %v1697, %v1672
      %v2348 = vpack.c.b16 %v1698, %v1673
      %v2349 = vpack.c.b16 %v1699, %v1674
      %v2350 = vpack.c.b16 %v1700, %v1675
      %v2351 = vpack.c.b16 %v1701, %v1676
      %v2352 = vpack.c.b16 %v1702, %v1677
      %v2353 = vpack.c.b16 %v1703, %v1678
      %v2354 = vpack.c.b16 %v1704, %v1679
      %v2355 = vpack.c.b16 %v1705, %v1680
      %v2356 = vpack.c.b16 %v1706, %v1681
      %v2357 = vpack.c.b16 %v1707, %v1682
      %v2358 = vpack.c.b16 %v1708, %v1683
      %v2359 = vpack.c.b16 %v1734, %v1709
      %v2360 = vpack.c.b16 %v1735, %v1710
      %v2361 = vpack.c.b16 %v1736, %v1711
      %v2362 = vpack.c.b16 %v1737, %v1712
      %v2363 = vpack.c.b16 %v1738, %v1713
      %v2364 = vpack.c.b16 %v1739, %v1714
      %v2365 = vpack.c.b16 %v1740, %v1715
      %v2366 = vpack.c.b16 %v1741, %v1716
      %v2367 = vpack.c.b16 %v1742, %v1717
      %v2368 = vpack.c.b16 %v1743, %v1718
      %v2369 = vpack.c.b16 %v1744, %v1719
      %v2370 = vpack.c.b16 %v1745, %v1720
      %v2371 = vpack.c.b16 %v1746, %v1721
      %v2372 = vpack.c.b16 %v1747, %v1722
      %v2373 = vpack.c.b16 %v1748, %v1723
      %v2374 = vpack.c.b16 %v1749, %v1724
      %v2375 = vpack.c.b16 %v1750, %v1725
      %v2376 = vpack.c.b16 %v1751, %v1726
      %v2377 = vpack.c.b16 %v1752, %v1727
      %v2378 = vpack.c.b16 %v1753, %v1728
      %v2379 = vpack.c.b16 %v1754, %v1729
      %v2380 = vpack.c.b16 %v1755, %v1730
      %v2381 = vpack.c.b16 %v1756, %v1731
      %v2382 = vpack.c.b16 %v1757, %v1732
      %v2383 = vpack.c.b16 %v1758, %v1733
      %v2384 = vpack.c.b16 %v1784, %v1759
      %v2385 = vpack.c.b16 %v1785, %v1760
      %v2386 = vpack.c.b16 %v1786, %v1761
      %v2387 = vpack.c.b16 %v1787, %v1762
      %v2388 = vpack.c.b16 %v1788, %v1763
      %v2389 = vpack.c.b16 %v1789, %v1764
      %v2390 = vpack.c.b16 %v1790, %v1765
      %v2391 = vpack.c.b16 %v1791, %v1766
      %v2392 = vpack.c.b16 %v1792, %v1767
      %v2393 = vpack.c.b16 %v1793, %v1768
      %v2394 = vpack.c.b16 %v1794, %v1769
      %v2395 = vpack.c.b16 %v1795, %v1770
      %v2396 = vpack.c.b16 %v1796, %v1771
      %v2397 = vpack.c.b16 %v1797, %v1772
      %v2398 = vpack.c.b16 %v1798, %v1773
      %v2399 = vpack.c.b16 %v1799, %v1774
      %v2400 = vpack.c.b16 %v1800, %v1775
      %v2401 = vpack.c.b16 %v1801, %v1776
      %v2402 = vpack.c.b16 %v1802, %v1777
      %v2403 = vpack.c.b16 %v1803, %v1778
      %v2404 = vpack.c.b16 %v1804, %v1779
      %v2405 = vpack.c.b16 %v1805, %v1780
      %v2406 = vpack.c.b16 %v1806, %v1781
      %v2407 = vpack.c.b16 %v1807, %v1782
      %v2408 = vpack.c.b16 %v1808, %v1783
      %v2409 = vpack.c.b16 %v1834, %v1809
      %v2410 = vpack.c.b16 %v1835, %v1810
      %v2411 = vpack.c.b16 %v1836, %v1811
      %v2412 = vpack.c.b16 %v1837, %v1812
      %v2413 = vpack.c.b16 %v1838, %v1813
      %v2414 = vpack.c.b16 %v1839, %v1814
      %v2415 = vpack.c.b16 %v1840, %v1815
      %v2416 = vpack.c.b16 %v1841, %v1816
      %v2417 = vpack.c.b16 %v1842, %v1817
      %v2418 = vpack.c.b16 %v1843, %v1818
      %v2419 = vpack.c.b16 %v1844, %v1819
      %v2420 = vpack.c.b16 %v1845, %v1820
      %v2421 = vpack.c.b16 %v1846, %v1821
      %v2422 = vpack.c.b16 %v1847, %v1822
      %v2423 = vpack.c.b16 %v1848, %v1823
      %v2424 = vpack.c.b16 %v1849, %v1824
      %v2425 = vpack.c.b16 %v1850, %v1825
      %v2426 = vpack.c.b16 %v1851, %v1826
      %v2427 = vpack.c.b16 %v1852, %v1827
      %v2428 = vpack.c.b16 %v1853, %v1828
      %v2429 = vpack.c.b16 %v1854, %v1829
      %v2430 = vpack.c.b16 %v1855, %v1830
      %v2431 = vpack.c.b16 %v1856, %v1831
      %v2432 = vpack.c.b16 %v1857, %v1832
      %v2433 = vpack.c.b16 %v1858, %v1833
      %v2434 = vpack.c.b16 %v1884, %v1859
      %v2435 = vpack.c.b16 %v1885, %v1860
      %v2436 = vpack.c.b16 %v1886, %v1861
      %v2437 = vpack.c.b16 %v1887, %v1862
      %v2438 = vpack.c.b16 %v1888, %v1863
      %v2439 = vpack.c.b16 %v1889, %v1864
      %v2440 = vpack.c.b16 %v1890, %v1865
      %v2441 = vpack.c.b16 %v1891, %v1866
      %v2442 = vpack.c.b16 %v1892, %v1867
      %v2443 = vpack.c.b16 %v1893, %v1868
      %v2444 = vpack.c.b16 %v1894, %v1869
      %v2445 = vpack.c.b16 %v1895, %v1870
      %v2446 = vpack.c.b16 %v1896, %v1871
      %v2447 = vpack.c.b16 %v1897, %v1872
      %v2448 = vpack.c.b16 %v1898, %v1873
      %v2449 = vpack.c.b16 %v1899, %v1874
      %v2450 = vpack.c.b16 %v1900, %v1875
      %v2451 = vpack.c.b16 %v1901, %v1876
      %v2452 = vpack.c.b16 %v1902, %v1877
      %v2453 = vpack.c.b16 %v1903, %v1878
      %v2454 = vpack.c.b16 %v1904, %v1879
      %v2455 = vpack.c.b16 %v1905, %v1880
      %v2456 = vpack.c.b16 %v1906, %v1881
      %v2457 = vpack.c.b16 %v1907, %v1882
      %v2458 = vpack.c.b16 %v1908, %v1883
      %v2459 = vpack.c.b16 %v1934, %v1909
      %v2460 = vpack.c.b16 %v1935, %v1910
      %v2461 = vpack.c.b16 %v1936, %v1911
      %v2462 = vpack.c.b16 %v1937, %v1912
      %v2463 = vpack.c.b16 %v1938, %v1913
      %v2464 = vpack.c.b16 %v1939, %v1914
      %v2465 = vpack.c.b16 %v1940, %v1915
      %v2466 = vpack.c.b16 %v1941, %v1916
      %v2467 = vpack.c.b16 %v1942, %v1917
      %v2468 = vpack.c.b16 %v1943, %v1918
      %v2469 = vpack.c.b16 %v1944, %v1919
      %v2470 = vpack.c.b16 %v1945, %v1920
      %v2471 = vpack.c.b16 %v1946, %v1921
      %v2472 = vpack.c.b16 %v1947, %v1922
      %v2473 = vpack.c.b16 %v1948, %v1923
      %v2474 = vpack.c.b16 %v1949, %v1924
      %v2475 = vpack.c.b16 %v1950, %v1925
      %v2476 = vpack.c.b16 %v1951, %v1926
      %v2477 = vpack.c.b16 %v1952, %v1927
      %v2478 = vpack.c.b16 %v1953, %v1928
      %v2479 = vpack.c.b16 %v1954, %v1929
      %v2480 = vpack.c.b16 %v1955, %v1930
      %v2481 = vpack.c.b16 %v1956, %v1931
      %v2482 = vpack.c.b16 %v1957, %v1932
      %v2483 = vpack.c.b16 %v1958, %v1933
      %v2484 = vpack.c.b16 %v1984, %v1959
      %v2485 = vpack.c.b16 %v1985, %v1960
      %v2486 = vpack.c.b16 %v1986, %v1961
      %v2487 = vpack.c.b16 %v1987, %v1962
      %v2488 = vpack.c.b16 %v1988, %v1963
      %v2489 = vpack.c.b16 %v1989, %v1964
      %v2490 = vpack.c.b16 %v1990, %v1965
      %v2491 = vpack.c.b16 %v1991, %v1966
      %v2492 = vpack.c.b16 %v1992, %v1967
      %v2493 = vpack.c.b16 %v1993, %v1968
      %v2494 = vpack.c.b16 %v1994, %v1969
      %v2495 = vpack.c.b16 %v1995, %v1970
      %v2496 = vpack.c.b16 %v1996, %v1971
      %v2497 = vpack.c.b16 %v1997, %v1972
      %v2498 = vpack.c.b16 %v1998, %v1973
      %v2499 = vpack.c.b16 %v1999, %v1974
      %v2500 = vpack.c.b16 %v2000, %v1975
      %v2501 = vpack.c.b16 %v2001, %v1976
      %v2502 = vpack.c.b16 %v2002, %v1977
      %v2503 = vpack.c.b16 %v2003, %v1978
      %v2504 = vpack.c.b16 %v2004, %v1979
      %v2505 = vpack.c.b16 %v2005, %v1980
      %v2506 = vpack.c.b16 %v2006, %v1981
      %v2507 = vpack.c.b16 %v2007, %v1982
      %v2508 = vpack.c.b16 %v2008, %v1983
      %v2509 = vpack.c.b16 %v2034, %v2009
      %v2510 = vpack.c.b16 %v2035, %v2010
      %v2511 = vpack.c.b16 %v2036, %v2011
      %v2512 = vpack.c.b16 %v2037, %v2012
      %v2513 = vpack.c.b16 %v2038, %v2013
      %v2514 = vpack.c.b16 %v2039, %v2014
      %v2515 = vpack.c.b16 %v2040, %v2015
      %v2516 = vpack.c.b16 %v2041, %v2016
      %v2517 = vpack.c.b16 %v2042, %v2017
      %v2518 = vpack.c.b16 %v2043, %v2018
      %v2519 = vpack.c.b16 %v2044, %v2019
      %v2520 = vpack.c.b16 %v2045, %v2020
      %v2521 = vpack.c.b16 %v2046, %v2021
      %v2522 = vpack.c.b16 %v2047, %v2022
      %v2523 = vpack.c.b16 %v2048, %v2023
      %v2524 = vpack.c.b16 %v2049, %v2024
      %v2525 = vpack.c.b16 %v2050, %v2025
      %v2526 = vpack.c.b16 %v2051, %v2026
      %v2527 = vpack.c.b16 %v2052, %v2027
      %v2528 = vpack.c.b16 %v2053, %v2028
      %v2529 = vpack.c.b16 %v2054, %v2029
      %v2530 = vpack.c.b16 %v2055, %v2030
      %v2531 = vpack.c.b16 %v2056, %v2031
      %v2532 = vpack.c.b16 %v2057, %v2032
      %v2533 = vpack.c.b16 %v2058, %v2033
      %v2534 = vpack.c.b16 %v2084, %v2059
      %v2535 = vpack.c.b16 %v2085, %v2060
      %v2536 = vpack.c.b16 %v2086, %v2061
      %v2537 = vpack.c.b16 %v2087, %v2062
      %v2538 = vpack.c.b16 %v2088, %v2063
      %v2539 = vpack.c.b16 %v2089, %v2064
      %v2540 = vpack.c.b16 %v2090, %v2065
      %v2541 = vpack.c.b16 %v2091, %v2066
      %v2542 = vpack.c.b16 %v2092, %v2067
      %v2543 = vpack.c.b16 %v2093, %v2068
      %v2544 = vpack.c.b16 %v2094, %v2069
      %v2545 = vpack.c.b16 %v2095, %v2070
      %v2546 = vpack.c.b16 %v2096, %v2071
      %v2547 = vpack.c.b16 %v2097, %v2072
      %v2548 = vpack.c.b16 %v2098, %v2073
      %v2549 = vpack.c.b16 %v2099, %v2074
      %v2550 = vpack.c.b16 %v2100, %v2075
      %v2551 = vpack.c.b16 %v2101, %v2076
      %v2552 = vpack.c.b16 %v2102, %v2077
      %v2553 = vpack.c.b16 %v2103, %v2078
      %v2554 = vpack.c.b16 %v2104, %v2079
      %v2555 = vpack.c.b16 %v2105, %v2080
      %v2556 = vpack.c.b16 %v2106, %v2081
      %v2557 = vpack.c.b16 %v2107, %v2082
      %v2558 = vpack.c.b16 %v2108, %v2083
      %v2559 = vpack.c.b16 %v2134, %v2109
      %v2560 = vpack.c.b16 %v2135, %v2110
      %v2561 = vpack.c.b16 %v2136, %v2111
      %v2562 = vpack.c.b16 %v2137, %v2112
      %v2563 = vpack.c.b16 %v2138, %v2113
      %v2564 = vpack.c.b16 %v2139, %v2114
      %v2565 = vpack.c.b16 %v2140, %v2115
      %v2566 = vpack.c.b16 %v2141, %v2116
      %v2567 = vpack.c.b16 %v2142, %v2117
      %v2568 = vpack.c.b16 %v2143, %v2118
      %v2569 = vpack.c.b16 %v2144, %v2119
      %v2570 = vpack.c.b16 %v2145, %v2120
      %v2571 = vpack.c.b16 %v2146, %v2121
      %v2572 = vpack.c.b16 %v2147, %v2122
      %v2573 = vpack.c.b16 %v2148, %v2123
      %v2574 = vpack.c.b16 %v2149, %v2124
      %v2575 = vpack.c.b16 %v2150, %v2125
      %v2576 = vpack.c.b16 %v2151, %v2126
      %v2577 = vpack.c.b16 %v2152, %v2127
      %v2578 = vpack.c.b16 %v2153, %v2128
      %v2579 = vpack.c.b16 %v2154, %v2129
      %v2580 = vpack.c.b16 %v2155, %v2130
      %v2581 = vpack.c.b16 %v2156, %v2131
      %v2582 = vpack.c.b16 %v2157, %v2132
      %v2583 = vpack.c.b16 %v2158, %v2133
      %v2584 = vpack.c.b16 %v2184, %v2159
      %v2585 = vpack.c.b16 %v2185, %v2160
      %v2586 = vpack.c.b16 %v2186, %v2161
      %v2587 = vpack.c.b16 %v2187, %v2162
      %v2588 = vpack.c.b16 %v2188, %v2163
      %v2589 = vpack.c.b16 %v2189, %v2164
      %v2590 = vpack.c.b16 %v2190, %v2165
      %v2591 = vpack.c.b16 %v2191, %v2166
      %v2592 = vpack.c.b16 %v2192, %v2167
      %v2593 = vpack.c.b16 %v2193, %v2168
      %v2594 = vpack.c.b16 %v2194, %v2169
      %v2595 = vpack.c.b16 %v2195, %v2170
      %v2596 = vpack.c.b16 %v2196, %v2171
      %v2597 = vpack.c.b16 %v2197, %v2172
      %v2598 = vpack.c.b16 %v2198, %v2173
      %v2599 = vpack.c.b16 %v2199, %v2174
      %v2600 = vpack.c.b16 %v2200, %v2175
      %v2601 = vpack.c.b16 %v2201, %v2176
      %v2602 = vpack.c.b16 %v2202, %v2177
      %v2603 = vpack.c.b16 %v2203, %v2178
      %v2604 = vpack.c.b16 %v2204, %v2179
      %v2605 = vpack.c.b16 %v2205, %v2180
      %v2606 = vpack.c.b16 %v2206, %v2181
      %v2607 = vpack.c.b16 %v2207, %v2182
      %v2608 = vpack.c.b16 %v2208, %v2183
      %v3385 = vunpack.c.l.b16 %v594
      %v3386 = vunpack.c.l.b16 %v595
      %v3387 = vunpack.c.l.b16 %v596
      %v3388 = vunpack.c.l.b16 %v597
      %v3389 = vunpack.c.l.b16 %v598
      %v3390 = vunpack.c.l.b16 %v599
      %v3391 = vunpack.c.l.b16 %v600
      %v3392 = vunpack.c.l.b16 %v601
      %v3393 = vunpack.c.l.b16 %v602
      %v3394 = vunpack.c.l.b16 %v603
      %v3395 = vunpack.c.l.b16 %v604
      %v3396 = vunpack.c.l.b16 %v605
      %v3397 = vunpack.c.l.b16 %v606
      %v3398 = vunpack.c.l.b16 %v607
      %v3399 = vunpack.c.l.b16 %v608
      %v3400 = vunpack.c.l.b16 %v609
      %v3401 = vunpack.c.l.b16 %v610
      %v3402 = vunpack.c.l.b16 %v611
      %v3403 = vunpack.c.l.b16 %v612
      %v3404 = vunpack.c.l.b16 %v613
      %v3405 = vunpack.c.l.b16 %v614
      %v3406 = vunpack.c.l.b16 %v615
      %v3407 = vunpack.c.l.b16 %v616
      %v3408 = vunpack.c.l.b16 %v617
      %v3409 = vunpack.c.l.b16 %v618
      %v3410 = vunpack.c.l.b16 %v619
      %v3411 = vunpack.c.l.b16 %v620
      %v3412 = vunpack.c.l.b16 %v621
      %v3413 = vunpack.c.l.b16 %v622
      %v3414 = vunpack.c.l.b16 %v623
      %v3415 = vunpack.c.l.b16 %v624
      %v3416 = vunpack.c.l.b16 %v625
      %v3417 = vunpack.c.l.b16 %v626
      %v3418 = vunpack.c.l.b16 %v627
      %v3419 = vunpack.c.l.b16 %v628
      %v3420 = vunpack.c.l.b16 %v629
      %v3421 = vunpack.c.l.b16 %v630
      %v3422 = vunpack.c.l.b16 %v631
      %v3423 = vunpack.c.l.b16 %v632
      %v3424 = vunpack.c.l.b16 %v633
      %v3425 = vunpack.c.l.b16 %v634
      %v3426 = vunpack.c.l.b16 %v635
      %v3427 = vunpack.c.l.b16 %v636
      %v3428 = vunpack.c.l.b16 %v637
      %v3429 = vunpack.c.l.b16 %v638
      %v3430 = vunpack.c.l.b16 %v639
      %v3431 = vunpack.c.l.b16 %v640
      %v3432 = vunpack.c.l.b16 %v641
      %v3433 = vunpack.c.l.b16 %v642
      %v3434 = vunpack.c.l.b16 %v643
      %v3435 = vunpack.c.l.b16 %v644
      %v3436 = vunpack.c.l.b16 %v645
      %v3437 = vunpack.c.l.b16 %v646
      %v3438 = vunpack.c.l.b16 %v647
      %v3439 = vunpack.c.l.b16 %v648
      %v3440 = vunpack.c.l.b16 %v649
      %v3441 = vunpack.c.l.b16 %v650
      %v3442 = vunpack.c.l.b16 %v651
      %v3443 = vunpack.c.l.b16 %v652
      %v3444 = vunpack.c.l.b16 %v653
      %v3445 = vunpack.c.l.b16 %v654
      %v3446 = vunpack.c.l.b16 %v655
      %v3447 = vunpack.c.l.b16 %v656
      %v3448 = vunpack.c.l.b16 %v657
      %v3449 = vunpack.c.l.b16 %v658
      %v3450 = vunpack.c.l.b16 %v659
      %v3451 = vunpack.c.l.b16 %v660
      %v3452 = vunpack.c.l.b16 %v661
      %v3453 = vunpack.c.l.b16 %v662
      %v3454 = vunpack.c.l.b16 %v663
      %v3455 = vunpack.c.l.b16 %v664
      %v3456 = vunpack.c.l.b16 %v665
      %v3457 = vunpack.c.l.b16 %v666
      %v3458 = vunpack.c.l.b16 %v667
      %v3459 = vunpack.c.l.b16 %v668
      %v3460 = vunpack.c.l.b16 %v669
      %v3461 = vunpack.c.l.b16 %v670
      %v3462 = vunpack.c.l.b16 %v671
      %v3463 = vunpack.c.l.b16 %v672
      %v3464 = vunpack.c.l.b16 %v673
      %v3465 = vunpack.c.l.b16 %v674
      %v3466 = vunpack.c.l.b16 %v675
      %v3467 = vunpack.c.l.b16 %v676
      %v3468 = vunpack.c.l.b16 %v677
      %v3469 = vunpack.c.l.b16 %v678
      %v3470 = vunpack.c.l.b16 %v679
      %v3471 = vunpack.c.l.b16 %v680
      %v3472 = vunpack.c.l.b16 %v681
      %v3473 = vunpack.c.l.b16 %v682
      %v3474 = vunpack.c.l.b16 %v683
      %v3475 = vunpack.c.l.b16 %v684
      %v3476 = vunpack.c.l.b16 %v685
      %v3477 = vunpack.c.l.b16 %v686
      %v3478 = vunpack.c.l.b16 %v687
      %v3479 = vunpack.c.l.b16 %v688
      %v3480 = vunpack.c.l.b16 %v689
      %v3481 = vunpack.c.l.b16 %v690
      %v3482 = vunpack.c.l.b16 %v691
      %v3483 = vunpack.c.l.b16 %v692
      %v3484 = vunpack.c.l.b16 %v693
      %v3485 = vunpack.c.l.b16 %v694
      %v3486 = vunpack.c.l.b16 %v695
      %v3487 = vunpack.c.l.b16 %v696
      %v3488 = vunpack.c.l.b16 %v697
      %v3489 = vunpack.c.l.b16 %v698
      %v3490 = vunpack.c.l.b16 %v699
      %v3491 = vunpack.c.l.b16 %v700
      %v3492 = vunpack.c.l.b16 %v701
      %v3493 = vunpack.c.l.b16 %v702
      %v3494 = vunpack.c.l.b16 %v703
      %v3495 = vunpack.c.l.b16 %v704
      %v3496 = vunpack.c.l.b16 %v705
      %v3497 = vunpack.c.l.b16 %v706
      %v3498 = vunpack.c.l.b16 %v707
      %v3499 = vunpack.c.l.b16 %v708
      %v3500 = vunpack.c.l.b16 %v709
      %v3501 = vunpack.c.l.b16 %v710
      %v3502 = vunpack.c.l.b16 %v711
      %v3503 = vunpack.c.l.b16 %v712
      %v3504 = vunpack.c.l.b16 %v713
      %v3505 = vunpack.c.l.b16 %v714
      %v3506 = vunpack.c.l.b16 %v715
      %v3507 = vunpack.c.l.b16 %v716
      %v3508 = vunpack.c.l.b16 %v717
      %v3509 = vunpack.c.l.b16 %v718
      %v3510 = vunpack.c.l.b16 %v719
      %v3511 = vunpack.c.l.b16 %v720
      %v3512 = vunpack.c.l.b16 %v721
      %v3513 = vunpack.c.l.b16 %v722
      %v3514 = vunpack.c.l.b16 %v723
      %v3515 = vunpack.c.l.b16 %v724
      %v3516 = vunpack.c.l.b16 %v725
      %v3517 = vunpack.c.l.b16 %v726
      %v3518 = vunpack.c.l.b16 %v727
      %v3519 = vunpack.c.l.b16 %v728
      %v3520 = vunpack.c.l.b16 %v729
      %v3521 = vunpack.c.l.b16 %v730
      %v3522 = vunpack.c.l.b16 %v731
      %v3523 = vunpack.c.l.b16 %v732
      %v3524 = vunpack.c.l.b16 %v733
      %v3525 = vunpack.c.l.b16 %v734
      %v3526 = vunpack.c.l.b16 %v735
      %v3527 = vunpack.c.l.b16 %v736
      %v3528 = vunpack.c.l.b16 %v737
      %v3529 = vunpack.c.l.b16 %v738
      %v3530 = vunpack.c.l.b16 %v739
      %v3531 = vunpack.c.l.b16 %v740
      %v3532 = vunpack.c.l.b16 %v741
      %v3533 = vunpack.c.l.b16 %v742
      %v3534 = vunpack.c.l.b16 %v743
      %v3535 = vunpack.c.l.b16 %v744
      %v3536 = vunpack.c.l.b16 %v745
      %v3537 = vunpack.c.l.b16 %v746
      %v3538 = vunpack.c.l.b16 %v747
      %v3539 = vunpack.c.l.b16 %v748
      %v3540 = vunpack.c.l.b16 %v749
      %v3541 = vunpack.c.l.b16 %v750
      %v3542 = vunpack.c.l.b16 %v751
      %v3543 = vunpack.c.l.b16 %v752
      %v3544 = vunpack.c.l.b16 %v753
      %v3545 = vunpack.c.l.b16 %v754
      %v3546 = vunpack.c.l.b16 %v755
      %v3547 = vunpack.c.l.b16 %v756
      %v3548 = vunpack.c.l.b16 %v757
      %v3549 = vunpack.c.l.b16 %v758
      %v3550 = vunpack.c.l.b16 %v759
      %v3551 = vunpack.c.l.b16 %v760
      %v3552 = vunpack.c.l.b16 %v761
      %v3553 = vunpack.c.l.b16 %v762
      %v3554 = vunpack.c.l.b16 %v763
      %v3555 = vunpack.c.l.b16 %v764
      %v3556 = vunpack.c.l.b16 %v765
      %v3557 = vunpack.c.l.b16 %v766
      %v3558 = vunpack.c.l.b16 %v767
      %v3559 = vunpack.c.l.b16 %v768
      %v3560 = vunpack.c.l.b16 %v769
      %v3561 = vunpack.c.l.b16 %v770
      %v3562 = vunpack.c.l.b16 %v771
      %v3563 = vunpack.c.l.b16 %v772
      %v3564 = vunpack.c.l.b16 %v773
      %v3565 = vunpack.c.l.b16 %v774
      %v3566 = vunpack.c.l.b16 %v775
      %v3567 = vunpack.c.l.b16 %v776
      %v3568 = vunpack.c.l.b16 %v777
      %v3569 = vunpack.c.l.b16 %v778
      %v3570 = vunpack.c.l.b16 %v779
      %v3571 = vunpack.c.l.b16 %v780
      %v3572 = vunpack.c.l.b16 %v781
      %v3573 = vunpack.c.l.b16 %v782
      %v3574 = vunpack.c.l.b16 %v783
      %v3575 = vunpack.c.l.b16 %v784
      %v3576 = vunpack.c.l.b16 %v785
      %v3577 = vunpack.c.l.b16 %v786
      %v3578 = vunpack.c.l.b16 %v787
      %v3579 = vunpack.c.l.b16 %v788
      %v3580 = vunpack.c.l.b16 %v789
      %v3581 = vunpack.c.l.b16 %v790
      %v3582 = vunpack.c.l.b16 %v791
      %v3583 = vunpack.c.l.b16 %v792
      %v3584 = vunpack.c.l.b16 %v793
      %v3585 = vunpack.c.l.b16 %v794
      %v3586 = vunpack.c.l.b16 %v795
      %v3587 = vunpack.c.l.b16 %v796
      %v3588 = vunpack.c.l.b16 %v797
      %v3589 = vunpack.c.l.b16 %v798
      %v3590 = vunpack.c.l.b16 %v799
      %v3591 = vunpack.c.l.b16 %v800
      %v3592 = vunpack.c.l.b16 %v801
      %v3593 = vunpack.c.l.b16 %v802
      %v3594 = vunpack.c.l.b16 %v803
      %v3595 = vunpack.c.l.b16 %v804
      %v3596 = vunpack.c.l.b16 %v805
      %v3597 = vunpack.c.l.b16 %v806
      %v3598 = vunpack.c.l.b16 %v807
      %v3599 = vunpack.c.l.b16 %v808
      %v3600 = vunpack.c.l.b16 %v809
      %v3601 = vunpack.c.l.b16 %v810
      %v3602 = vunpack.c.l.b16 %v811
      %v3603 = vunpack.c.l.b16 %v812
      %v3604 = vunpack.c.l.b16 %v813
      %v3605 = vunpack.c.l.b16 %v814
      %v3606 = vunpack.c.l.b16 %v815
      %v3607 = vunpack.c.l.b16 %v816
      %v3608 = vunpack.c.l.b16 %v817
      %v3609 = vunpack.c.l.b16 %v818
      %v3610 = vunpack.c.l.b16 %v819
      %v3611 = vunpack.c.l.b16 %v820
      %v3612 = vunpack.c.l.b16 %v821
      %v3613 = vunpack.c.l.b16 %v822
      %v3614 = vunpack.c.l.b16 %v823
      %v3615 = vunpack.c.l.b16 %v824
      %v3616 = vunpack.c.l.b16 %v825
      %v3617 = vunpack.c.l.b16 %v826
      %v3618 = vunpack.c.l.b16 %v827
      %v3619 = vunpack.c.l.b16 %v828
      %v3620 = vunpack.c.l.b16 %v829
      %v3621 = vunpack.c.l.b16 %v830
      %v3622 = vunpack.c.l.b16 %v831
      %v3623 = vunpack.c.l.b16 %v832
      %v3624 = vunpack.c.l.b16 %v833
      %v3625 = vunpack.c.l.b16 %v834
      %v3626 = vunpack.c.l.b16 %v835
      %v3627 = vunpack.c.l.b16 %v836
      %v3628 = vunpack.c.l.b16 %v837
      %v3629 = vunpack.c.l.b16 %v838
      %v3630 = vunpack.c.l.b16 %v839
      %v3631 = vunpack.c.l.b16 %v840
      %v3632 = vunpack.c.l.b16 %v841
      %v3633 = vunpack.c.l.b16 %v842
      %v3634 = vunpack.c.l.b16 %v843
      %v3635 = vunpack.c.l.b16 %v844
      %v3636 = vunpack.c.l.b16 %v845
      %v3637 = vunpack.c.l.b16 %v846
      %v3638 = vunpack.c.l.b16 %v847
      %v3639 = vunpack.c.l.b16 %v848
      %v3640 = vunpack.c.l.b16 %v849
      %v3641 = vunpack.c.l.b16 %v850
      %v3642 = vunpack.c.l.b16 %v851
      %v3643 = vunpack.c.l.b16 %v852
      %v3644 = vunpack.c.l.b16 %v853
      %v3645 = vunpack.c.l.b16 %v854
      %v3646 = vunpack.c.l.b16 %v855
      %v3647 = vunpack.c.l.b16 %v856
      %v3648 = vunpack.c.l.b16 %v857
      %v3649 = vunpack.c.l.b16 %v858
      %v3650 = vunpack.c.l.b16 %v859
      %v3651 = vunpack.c.l.b16 %v860
      %v3652 = vunpack.c.l.b16 %v861
      %v3653 = vunpack.c.l.b16 %v862
      %v3654 = vunpack.c.l.b16 %v863
      %v3655 = vunpack.c.l.b16 %v864
      %v3656 = vunpack.c.l.b16 %v865
      %v3657 = vunpack.c.l.b16 %v866
      %v3658 = vunpack.c.l.b16 %v867
      %v3659 = vunpack.c.l.b16 %v868
      %v3660 = vunpack.c.l.b16 %v869
      %v3661 = vunpack.c.l.b16 %v870
      %v3662 = vunpack.c.l.b16 %v871
      %v3663 = vunpack.c.l.b16 %v872
      %v3664 = vunpack.c.l.b16 %v873
      %v3665 = vunpack.c.l.b16 %v874
      %v3666 = vunpack.c.l.b16 %v875
      %v3667 = vunpack.c.l.b16 %v876
      %v3668 = vunpack.c.l.b16 %v877
      %v3669 = vunpack.c.l.b16 %v878
      %v3670 = vunpack.c.l.b16 %v879
      %v3671 = vunpack.c.l.b16 %v880
      %v3672 = vunpack.c.l.b16 %v881
      %v3673 = vunpack.c.l.b16 %v882
      %v3674 = vunpack.c.l.b16 %v883
      %v3675 = vunpack.c.l.b16 %v884
      %v3676 = vunpack.c.l.b16 %v885
      %v3677 = vunpack.c.l.b16 %v886
      %v3678 = vunpack.c.l.b16 %v887
      %v3679 = vunpack.c.l.b16 %v888
      %v3680 = vunpack.c.l.b16 %v889
      %v3681 = vunpack.c.l.b16 %v890
      %v3682 = vunpack.c.l.b16 %v891
      %v3683 = vunpack.c.l.b16 %v892
      %v3684 = vunpack.c.l.b16 %v893
      %v3685 = vunpack.c.l.b16 %v894
      %v3686 = vunpack.c.l.b16 %v895
      %v3687 = vunpack.c.l.b16 %v896
      %v3688 = vunpack.c.l.b16 %v897
      %v3689 = vunpack.c.l.b16 %v898
      %v3690 = vunpack.c.l.b16 %v899
      %v3691 = vunpack.c.l.b16 %v900
      %v3692 = vunpack.c.l.b16 %v901
      %v3693 = vunpack.c.l.b16 %v902
      %v3694 = vunpack.c.l.b16 %v903
      %v3695 = vunpack.c.l.b16 %v904
      %v3696 = vunpack.c.l.b16 %v905
      %v3697 = vunpack.c.l.b16 %v906
      %v3698 = vunpack.c.l.b16 %v907
      %v3699 = vunpack.c.l.b16 %v908
      %v3700 = vunpack.c.l.b16 %v909
      %v3701 = vunpack.c.l.b16 %v910
      %v3702 = vunpack.c.l.b16 %v911
      %v3703 = vunpack.c.l.b16 %v912
      %v3704 = vunpack.c.l.b16 %v913
      %v3705 = vunpack.c.l.b16 %v914
      %v3706 = vunpack.c.l.b16 %v915
      %v3707 = vunpack.c.l.b16 %v916
      %v3708 = vunpack.c.l.b16 %v917
      %v3709 = vunpack.c.l.b16 %v918
      %v3710 = vunpack.c.l.b16 %v919
      %v3711 = vunpack.c.l.b16 %v920
      %v3712 = vunpack.c.l.b16 %v921
      %v3713 = vunpack.c.l.b16 %v922
      %v3714 = vunpack.c.l.b16 %v923
      %v3715 = vunpack.c.l.b16 %v924
      %v3716 = vunpack.c.l.b16 %v925
      %v3717 = vunpack.c.l.b16 %v926
      %v3718 = vunpack.c.l.b16 %v927
      %v3719 = vunpack.c.l.b16 %v928
      %v3720 = vunpack.c.l.b16 %v929
      %v3721 = vunpack.c.l.b16 %v930
      %v3722 = vunpack.c.l.b16 %v931
      %v3723 = vunpack.c.l.b16 %v932
      %v3724 = vunpack.c.l.b16 %v933
      %v3725 = vunpack.c.l.b16 %v934
      %v3726 = vunpack.c.l.b16 %v935
      %v3727 = vunpack.c.l.b16 %v936
      %v3728 = vunpack.c.l.b16 %v937
      %v3729 = vunpack.c.l.b16 %v938
      %v3730 = vunpack.c.l.b16 %v939
      %v3731 = vunpack.c.l.b16 %v940
      %v3732 = vunpack.c.l.b16 %v941
      %v3733 = vunpack.c.l.b16 %v942
      %v3734 = vunpack.c.l.b16 %v943
      %v3735 = vunpack.c.l.b16 %v944
      %v3736 = vunpack.c.l.b16 %v945
      %v3737 = vunpack.c.l.b16 %v946
      %v3738 = vunpack.c.l.b16 %v947
      %v3739 = vunpack.c.l.b16 %v948
      %v3740 = vunpack.c.l.b16 %v949
      %v3741 = vunpack.c.l.b16 %v950
      %v3742 = vunpack.c.l.b16 %v951
      %v3743 = vunpack.c.l.b16 %v952
      %v3744 = vunpack.c.l.b16 %v953
      %v3745 = vunpack.c.l.b16 %v954
      %v3746 = vunpack.c.l.b16 %v955
      %v3747 = vunpack.c.l.b16 %v956
      %v3748 = vunpack.c.l.b16 %v957
      %v3749 = vunpack.c.l.b16 %v958
      %v3750 = vunpack.c.l.b16 %v959
      %v3751 = vunpack.c.l.b16 %v960
      %v3752 = vunpack.c.l.b16 %v961
      %v3753 = vunpack.c.l.b16 %v962
      %v3754 = vunpack.c.l.b16 %v963
      %v3755 = vunpack.c.l.b16 %v964
      %v3756 = vunpack.c.l.b16 %v965
      %v3757 = vunpack.c.l.b16 %v966
      %v3758 = vunpack.c.l.b16 %v967
      %v3759 = vunpack.c.l.b16 %v968
      %v3760 = vunpack.c.l.b16 %v969
      %v3761 = vunpack.c.l.b16 %v970
      %v3762 = vunpack.c.l.b16 %v971
      %v3763 = vunpack.c.l.b16 %v972
      %v3764 = vunpack.c.l.b16 %v973
      %v3765 = vunpack.c.l.b16 %v974
      %v3766 = vunpack.c.l.b16 %v975
      %v3767 = vunpack.c.l.b16 %v976
      %v3768 = vunpack.c.l.b16 %v977
      %v3769 = vunpack.c.l.b16 %v978
      %v3770 = vunpack.c.l.b16 %v979
      %v3771 = vunpack.c.l.b16 %v980
      %v3772 = vunpack.c.l.b16 %v981
      %v3773 = vunpack.c.l.b16 %v982
      %v3774 = vunpack.c.l.b16 %v983
      %v3775 = vunpack.c.l.b16 %v984
      %v3776 = vunpack.c.l.b16 %v985
      %v3777 = vpack.c.b16 %v3386, %v3385
      %v3778 = vpack.c.b16 %v3388, %v3387
      %v3779 = vpack.c.b16 %v3390, %v3389
      %v3780 = vpack.c.b16 %v3392, %v3391
      %v3781 = vpack.c.b16 %v3394, %v3393
      %v3782 = vpack.c.b16 %v3396, %v3395
      %v3783 = vpack.c.b16 %v3398, %v3397
      %v3784 = vpack.c.b16 %v3400, %v3399
      %v3785 = vpack.c.b16 %v3402, %v3401
      %v3786 = vpack.c.b16 %v3404, %v3403
      %v3787 = vpack.c.b16 %v3406, %v3405
      %v3788 = vpack.c.b16 %v3408, %v3407
      %v3789 = vpack.c.b16 %v3410, %v3409
      %v3790 = vpack.c.b16 %v3412, %v3411
      %v3791 = vpack.c.b16 %v3414, %v3413
      %v3792 = vpack.c.b16 %v3416, %v3415
      %v3793 = vpack.c.b16 %v3418, %v3417
      %v3794 = vpack.c.b16 %v3420, %v3419
      %v3795 = vpack.c.b16 %v3422, %v3421
      %v3796 = vpack.c.b16 %v3424, %v3423
      %v3797 = vpack.c.b16 %v3426, %v3425
      %v3798 = vpack.c.b16 %v3428, %v3427
      %v3799 = vpack.c.b16 %v3430, %v3429
      %v3800 = vpack.c.b16 %v3432, %v3431
      %v3801 = vpack.c.b16 %v3434, %v3433
      %v3802 = vpack.c.b16 %v3436, %v3435
      %v3803 = vpack.c.b16 %v3438, %v3437
      %v3804 = vpack.c.b16 %v3440, %v3439
      %v3805 = vpack.c.b16 %v3442, %v3441
      %v3806 = vpack.c.b16 %v3444, %v3443
      %v3807 = vpack.c.b16 %v3446, %v3445
      %v3808 = vpack.c.b16 %v3448, %v3447
      %v3809 = vpack.c.b16 %v3450, %v3449
      %v3810 = vpack.c.b16 %v3452, %v3451
      %v3811 = vpack.c.b16 %v3454, %v3453
      %v3812 = vpack.c.b16 %v3456, %v3455
      %v3813 = vpack.c.b16 %v3458, %v3457
      %v3814 = vpack.c.b16 %v3460, %v3459
      %v3815 = vpack.c.b16 %v3462, %v3461
      %v3816 = vpack.c.b16 %v3464, %v3463
      %v3817 = vpack.c.b16 %v3466, %v3465
      %v3818 = vpack.c.b16 %v3468, %v3467
      %v3819 = vpack.c.b16 %v3470, %v3469
      %v3820 = vpack.c.b16 %v3472, %v3471
      %v3821 = vpack.c.b16 %v3474, %v3473
      %v3822 = vpack.c.b16 %v3476, %v3475
      %v3823 = vpack.c.b16 %v3478, %v3477
      %v3824 = vpack.c.b16 %v3480, %v3479
      %v3825 = vpack.c.b16 %v3482, %v3481
      %v3826 = vpack.c.b16 %v3484, %v3483
      %v3827 = vpack.c.b16 %v3486, %v3485
      %v3828 = vpack.c.b16 %v3488, %v3487
      %v3829 = vpack.c.b16 %v3490, %v3489
      %v3830 = vpack.c.b16 %v3492, %v3491
      %v3831 = vpack.c.b16 %v3494, %v3493
      %v3832 = vpack.c.b16 %v3496, %v3495
      %v3833 = vpack.c.b16 %v3498, %v3497
      %v3834 = vpack.c.b16 %v3500, %v3499
      %v3835 = vpack.c.b16 %v3502, %v3501
      %v3836 = vpack.c.b16 %v3504, %v3503
      %v3837 = vpack.c.b16 %v3506, %v3505
      %v3838 = vpack.c.b16 %v3508, %v3507
      %v3839 = vpack.c.b16 %v3510, %v3509
      %v3840 = vpack.c.b16 %v3512, %v3511
      %v3841 = vpack.c.b16 %v3514, %v3513
      %v3842 = vpack.c.b16 %v3516, %v3515
      %v3843 = vpack.c.b16 %v3518, %v3517
      %v3844 = vpack.c.b16 %v3520, %v3519
      %v3845 = vpack.c.b16 %v3522, %v3521
      %v3846 = vpack.c.b16 %v3524, %v3523
      %v3847 = vpack.c.b16 %v3526, %v3525
      %v3848 = vpack.c.b16 %v3528, %v3527
      %v3849 = vpack.c.b16 %v3530, %v3529
      %v3850 = vpack.c.b16 %v3532, %v3531
      %v3851 = vpack.c.b16 %v3534, %v3533
      %v3852 = vpack.c.b16 %v3536, %v3535
      %v3853 = vpack.c.b16 %v3538, %v3537
      %v3854 = vpack.c.b16 %v3540, %v3539
      %v3855 = vpack.c.b16 %v3542, %v3541
      %v3856 = vpack.c.b16 %v3544, %v3543
      %v3857 = vpack.c.b16 %v3546, %v3545
      %v3858 = vpack.c.b16 %v3548, %v3547
      %v3859 = vpack.c.b16 %v3550, %v3549
      %v3860 = vpack.c.b16 %v3552, %v3551
      %v3861 = vpack.c.b16 %v3554, %v3553
      %v3862 = vpack.c.b16 %v3556, %v3555
      %v3863 = vpack.c.b16 %v3558, %v3557
      %v3864 = vpack.c.b16 %v3560, %v3559
      %v3865 = vpack.c.b16 %v3562, %v3561
      %v3866 = vpack.c.b16 %v3564, %v3563
      %v3867 = vpack.c.b16 %v3566, %v3565
      %v3868 = vpack.c.b16 %v3568, %v3567
      %v3869 = vpack.c.b16 %v3570, %v3569
      %v3870 = vpack.c.b16 %v3572, %v3571
      %v3871 = vpack.c.b16 %v3574, %v3573
      %v3872 = vpack.c.b16 %v3576, %v3575
      %v3873 = vpack.c.b16 %v3578, %v3577
      %v3874 = vpack.c.b16 %v3580, %v3579
      %v3875 = vpack.c.b16 %v3582, %v3581
      %v3876 = vpack.c.b16 %v3584, %v3583
      %v3877 = vpack.c.b16 %v3586, %v3585
      %v3878 = vpack.c.b16 %v3588, %v3587
      %v3879 = vpack.c.b16 %v3590, %v3589
      %v3880 = vpack.c.b16 %v3592, %v3591
      %v3881 = vpack.c.b16 %v3594, %v3593
      %v3882 = vpack.c.b16 %v3596, %v3595
      %v3883 = vpack.c.b16 %v3598, %v3597
      %v3884 = vpack.c.b16 %v3600, %v3599
      %v3885 = vpack.c.b16 %v3602, %v3601
      %v3886 = vpack.c.b16 %v3604, %v3603
      %v3887 = vpack.c.b16 %v3606, %v3605
      %v3888 = vpack.c.b16 %v3608, %v3607
      %v3889 = vpack.c.b16 %v3610, %v3609
      %v3890 = vpack.c.b16 %v3612, %v3611
      %v3891 = vpack.c.b16 %v3614, %v3613
      %v3892 = vpack.c.b16 %v3616, %v3615
      %v3893 = vpack.c.b16 %v3618, %v3617
      %v3894 = vpack.c.b16 %v3620, %v3619
      %v3895 = vpack.c.b16 %v3622, %v3621
      %v3896 = vpack.c.b16 %v3624, %v3623
      %v3897 = vpack.c.b16 %v3626, %v3625
      %v3898 = vpack.c.b16 %v3628, %v3627
      %v3899 = vpack.c.b16 %v3630, %v3629
      %v3900 = vpack.c.b16 %v3632, %v3631
      %v3901 = vpack.c.b16 %v3634, %v3633
      %v3902 = vpack.c.b16 %v3636, %v3635
      %v3903 = vpack.c.b16 %v3638, %v3637
      %v3904 = vpack.c.b16 %v3640, %v3639
      %v3905 = vpack.c.b16 %v3642, %v3641
      %v3906 = vpack.c.b16 %v3644, %v3643
      %v3907 = vpack.c.b16 %v3646, %v3645
      %v3908 = vpack.c.b16 %v3648, %v3647
      %v3909 = vpack.c.b16 %v3650, %v3649
      %v3910 = vpack.c.b16 %v3652, %v3651
      %v3911 = vpack.c.b16 %v3654, %v3653
      %v3912 = vpack.c.b16 %v3656, %v3655
      %v3913 = vpack.c.b16 %v3658, %v3657
      %v3914 = vpack.c.b16 %v3660, %v3659
      %v3915 = vpack.c.b16 %v3662, %v3661
      %v3916 = vpack.c.b16 %v3664, %v3663
      %v3917 = vpack.c.b16 %v3666, %v3665
      %v3918 = vpack.c.b16 %v3668, %v3667
      %v3919 = vpack.c.b16 %v3670, %v3669
      %v3920 = vpack.c.b16 %v3672, %v3671
      %v3921 = vpack.c.b16 %v3674, %v3673
      %v3922 = vpack.c.b16 %v3676, %v3675
      %v3923 = vpack.c.b16 %v3678, %v3677
      %v3924 = vpack.c.b16 %v3680, %v3679
      %v3925 = vpack.c.b16 %v3682, %v3681
      %v3926 = vpack.c.b16 %v3684, %v3683
      %v3927 = vpack.c.b16 %v3686, %v3685
      %v3928 = vpack.c.b16 %v3688, %v3687
      %v3929 = vpack.c.b16 %v3690, %v3689
      %v3930 = vpack.c.b16 %v3692, %v3691
      %v3931 = vpack.c.b16 %v3694, %v3693
      %v3932 = vpack.c.b16 %v3696, %v3695
      %v3933 = vpack.c.b16 %v3698, %v3697
      %v3934 = vpack.c.b16 %v3700, %v3699
      %v3935 = vpack.c.b16 %v3702, %v3701
      %v3936 = vpack.c.b16 %v3704, %v3703
      %v3937 = vpack.c.b16 %v3706, %v3705
      %v3938 = vpack.c.b16 %v3708, %v3707
      %v3939 = vpack.c.b16 %v3710, %v3709
      %v3940 = vpack.c.b16 %v3712, %v3711
      %v3941 = vpack.c.b16 %v3714, %v3713
      %v3942 = vpack.c.b16 %v3716, %v3715
      %v3943 = vpack.c.b16 %v3718, %v3717
      %v3944 = vpack.c.b16 %v3720, %v3719
      %v3945 = vpack.c.b16 %v3722, %v3721
      %v3946 = vpack.c.b16 %v3724, %v3723
      %v3947 = vpack.c.b16 %v3726, %v3725
      %v3948 = vpack.c.b16 %v3728, %v3727
      %v3949 = vpack.c.b16 %v3730, %v3729
      %v3950 = vpack.c.b16 %v3732, %v3731
      %v3951 = vpack.c.b16 %v3734, %v3733
      %v3952 = vpack.c.b16 %v3736, %v3735
      %v3953 = vpack.c.b16 %v3738, %v3737
      %v3954 = vpack.c.b16 %v3740, %v3739
      %v3955 = vpack.c.b16 %v3742, %v3741
      %v3956 = vpack.c.b16 %v3744, %v3743
      %v3957 = vpack.c.b16 %v3746, %v3745
      %v3958 = vpack.c.b16 %v3748, %v3747
      %v3959 = vpack.c.b16 %v3750, %v3749
      %v3960 = vpack.c.b16 %v3752, %v3751
      %v3961 = vpack.c.b16 %v3754, %v3753
      %v3962 = vpack.c.b16 %v3756, %v3755
      %v3963 = vpack.c.b16 %v3758, %v3757
      %v3964 = vpack.c.b16 %v3760, %v3759
      %v3965 = vpack.c.b16 %v3762, %v3761
      %v3966 = vpack.c.b16 %v3764, %v3763
      %v3967 = vpack.c.b16 %v3766, %v3765
      %v3968 = vpack.c.b16 %v3768, %v3767
      %v3969 = vpack.c.b16 %v3770, %v3769
      %v3970 = vpack.c.b16 %v3772, %v3771
      %v3971 = vpack.c.b16 %v3774, %v3773
      %v3972 = vpack.c.b16 %v3776, %v3775
      %vm4169 = vcmask 523264
      %v4171 = vsel %vm4169, %v2233, 0
      %v4174 = vsel %vm4169, %v2258, 0
      %v4177 = vsel %vm4169, %v2283, 0
      %v4180 = vsel %vm4169, %v2308, 0
      %v4183 = vsel %vm4169, %v2333, 0
      %v4186 = vsel %vm4169, %v2358, 0
      %v4189 = vsel %vm4169, %v2383, 0
      %v4192 = vsel %vm4169, %v2408, 0
      %v4195 = vsel %vm4169, %v2433, 0
      %v4198 = vsel %vm4169, %v2458, 0
      %v4201 = vsel %vm4169, %v2483, 0
      %v4204 = vsel %vm4169, %v2508, 0
      %v4207 = vsel %vm4169, %v2533, 0
      %v4210 = vsel %vm4169, %v2558, 0
      %v4213 = vsel %vm4169, %v2583, 0
      %v4216 = vsel %vm4169, %v2608, 0
      %4218 = vmatprep.subr.bf16.mxu0 0
      %4219 = vmatpush1.bf16.msra.mxu0 %v3777
      %4220 = vmatprep.subr.bf16.mxu0 0
      %4221 = vmatpush1.bf16.msra.mxu0 %v3778
      %4222 = vmatprep.subr.bf16.mxu0 0
      %4223 = vmatpush1.bf16.msra.mxu0 %v3779
      %4224 = vmatprep.subr.bf16.mxu0 0
      %4225 = vmatpush1.bf16.msra.mxu0 %v3780
      %4226 = vmatprep.subr.bf16.mxu0 0
      %4227 = vmatpush1.bf16.msra.mxu0 %v3781
      %4228 = vmatprep.subr.bf16.mxu0 0
      %4229 = vmatpush1.bf16.msra.mxu0 %v3782
      %4230 = vmatprep.subr.bf16.mxu0 0
      %4231 = vmatpush1.bf16.msra.mxu0 %v3783
      %4232 = vmatprep.subr.bf16.mxu0 0
      %4233 = vmatpush1.bf16.msra.mxu0 %v3784
      %4234 = vmatprep.subr.bf16.mxu0 0
      %4235 = vmatpush1.bf16.msra.mxu0 %v3785
      %4236 = vmatprep.subr.bf16.mxu0 0
      %4237 = vmatpush1.bf16.msra.mxu0 %v3786
      %4238 = vmatprep.subr.bf16.mxu0 0
      %4239 = vmatpush1.bf16.msra.mxu0 %v3787
      %4240 = vmatprep.subr.bf16.mxu0 0
      %4241 = vmatpush1.bf16.msra.mxu0 %v3788
      %4242 = vmatprep.subr.bf16.mxu0 0
      %4243 = vmatpush1.bf16.msra.mxu0 %v3789
      %4244 = vmatprep.subr.bf16.mxu0 0
      %4245 = vmatpush1.bf16.msra.mxu0 %v3790
      %4246 = vmatprep.subr.bf16.mxu0 0
      %4247 = vmatpush1.bf16.msra.mxu0 %v3791
      %4248 = vmatprep.subr.bf16.mxu0 0
      %4249 = vmatpush1.bf16.msra.mxu0 %v3792
      %4250 = vmatprep.mubr.bf16.mxu0 %v2210
      %4251 = vmatmul.mubr.bf16.gmra.mrb[0].mxu0 %v2209
      %v4252 = vpop.f32.mrb[0].mxu0
      %v4253 = vadd.f32 %v991, %v4252
      %v4254 = vpop.f32.mrb[0].mxu0
      %v4255 = vpop.f32.mrb[0].mxu0
      %v4256 = vadd.f32 %v991, %v4255
      %v4257 = vpop.f32.mrb[0].mxu0
      %4258 = vmatprep.mubr.bf16.mxu0 %v2235
      %4259 = vmatmul.mubr.bf16.gmra.mrb[0].mxu0 %v2234
      %v4260 = vpop.f32.mrb[0].mxu0
      %v4261 = vadd.f32 %v991, %v4260
      %v4262 = vpop.f32.mrb[0].mxu0
      %v4263 = vpop.f32.mrb[0].mxu0
      %v4264 = vadd.f32 %v991, %v4263
      %v4265 = vpop.f32.mrb[0].mxu0
      %4266 = vmatprep.mubr.bf16.mxu0 %v2260
      %4267 = vmatmul.mubr.bf16.gmra.mrb[0].mxu0 %v2259
      %v4268 = vpop.f32.mrb[0].mxu0
      %v4269 = vadd.f32 %v991, %v4268
      %v4270 = vpop.f32.mrb[0].mxu0
      %v4271 = vpop.f32.mrb[0].mxu0
      %v4272 = vadd.f32 %v991, %v4271
      %v4273 = vpop.f32.mrb[0].mxu0
      %4274 = vmatprep.mubr.bf16.mxu0 %v2285
      %4275 = vmatmul.mubr.bf16.gmra.mrb[0].mxu0 %v2284
      %v4276 = vpop.f32.mrb[0].mxu0
      %v4277 = vadd.f32 %v991, %v4276
      %v4278 = vpop.f32.mrb[0].mxu0
      %v4279 = vpop.f32.mrb[0].mxu0
      %v4280 = vadd.f32 %v991, %v4279
      %v4281 = vpop.f32.mrb[0].mxu0
      %4282 = vmatprep.mubr.bf16.mxu0 %v2310
      %4283 = vmatmul.mubr.bf16.gmra.mrb[0].mxu0 %v2309
      %v4284 = vpop.f32.mrb[0].mxu0
      %v4285 = vadd.f32 %v991, %v4284
      %v4286 = vpop.f32.mrb[0].mxu0
      %v4287 = vpop.f32.mrb[0].mxu0
      %v4288 = vadd.f32 %v991, %v4287
      %v4289 = vpop.f32.mrb[0].mxu0
      %4290 = vmatprep.mubr.bf16.mxu0 %v2335
      %4291 = vmatmul.mubr.bf16.gmra.mrb[0].mxu0 %v2334
      %v4292 = vpop.f32.mrb[0].mxu0
      %v4293 = vadd.f32 %v991, %v4292
      %v4294 = vpop.f32.mrb[0].mxu0
      %v4295 = vpop.f32.mrb[0].mxu0
      %v4296 = vadd.f32 %v991, %v4295
      %v4297 = vpop.f32.mrb[0].mxu0
      %4298 = vmatprep.mubr.bf16.mxu0 %v2360
      %4299 = vmatmul.mubr.bf16.gmra.mrb[0].mxu0 %v2359
      %v4300 = vpop.f32.mrb[0].mxu0
      %v4301 = vadd.f32 %v991, %v4300
      %v4302 = vpop.f32.mrb[0].mxu0
      %v4303 = vpop.f32.mrb[0].mxu0
      %v4304 = vadd.f32 %v991, %v4303
      %v4305 = vpop.f32.mrb[0].mxu0
      %4306 = vmatprep.mubr.bf16.mxu0 %v2385
      %4307 = vmatmul.mubr.bf16.gmra.mrb[0].mxu0 %v2384
      %v4308 = vpop.f32.mrb[0].mxu0
      %v4309 = vadd.f32 %v991, %v4308
      %v4310 = vpop.f32.mrb[0].mxu0
      %v4311 = vpop.f32.mrb[0].mxu0
      %v4312 = vadd.f32 %v991, %v4311
      %v4313 = vpop.f32.mrb[0].mxu0
      %4314 = vmatprep.mubr.bf16.mxu0 %v2410
      %4315 = vmatmul.mubr.bf16.gmra.mrb[0].mxu0 %v2409
      %v4316 = vpop.f32.mrb[0].mxu0
      %v4317 = vadd.f32 %v991, %v4316
      %v4318 = vpop.f32.mrb[0].mxu0
      %v4319 = vpop.f32.mrb[0].mxu0
      %v4320 = vadd.f32 %v991, %v4319
      %v4321 = vpop.f32.mrb[0].mxu0
      %4322 = vmatprep.mubr.bf16.mxu0 %v2435
      %4323 = vmatmul.mubr.bf16.gmra.mrb[0].mxu0 %v2434
      %v4324 = vpop.f32.mrb[0].mxu0
      %v4325 = vadd.f32 %v991, %v4324
      %v4326 = vpop.f32.mrb[0].mxu0
      %v4327 = vpop.f32.mrb[0].mxu0
      %v4328 = vadd.f32 %v991, %v4327
      %v4329 = vpop.f32.mrb[0].mxu0
      %4330 = vmatprep.mubr.bf16.mxu0 %v2460
      %4331 = vmatmul.mubr.bf16.gmra.mrb[0].mxu0 %v2459
      %v4332 = vpop.f32.mrb[0].mxu0
      %v4333 = vadd.f32 %v991, %v4332
      %v4334 = vpop.f32.mrb[0].mxu0
      %v4335 = vpop.f32.mrb[0].mxu0
      %v4336 = vadd.f32 %v991, %v4335
      %v4337 = vpop.f32.mrb[0].mxu0
      %4338 = vmatprep.mubr.bf16.mxu0 %v2485
      %4339 = vmatmul.mubr.bf16.gmra.mrb[0].mxu0 %v2484
      %v4340 = vpop.f32.mrb[0].mxu0
      %v4341 = vadd.f32 %v991, %v4340
      %v4342 = vpop.f32.mrb[0].mxu0
      %v4343 = vpop.f32.mrb[0].mxu0
      %v4344 = vadd.f32 %v991, %v4343
      %v4345 = vpop.f32.mrb[0].mxu0
      %4346 = vmatprep.mubr.bf16.mxu0 %v2510
      %4347 = vmatmul.mubr.bf16.gmra.mrb[0].mxu0 %v2509
      %v4348 = vpop.f32.mrb[0].mxu0
      %v4349 = vadd.f32 %v991, %v4348
      %v4350 = vpop.f32.mrb[0].mxu0
      %v4351 = vpop.f32.mrb[0].mxu0
      %v4352 = vadd.f32 %v991, %v4351
      %v4353 = vpop.f32.mrb[0].mxu0
      %4354 = vmatprep.mubr.bf16.mxu0 %v2535
      %4355 = vmatmul.mubr.bf16.gmra.mrb[0].mxu0 %v2534
      %v4356 = vpop.f32.mrb[0].mxu0
      %v4357 = vadd.f32 %v991, %v4356
      %v4358 = vpop.f32.mrb[0].mxu0
      %v4359 = vpop.f32.mrb[0].mxu0
      %v4360 = vadd.f32 %v991, %v4359
      %v4361 = vpop.f32.mrb[0].mxu0
      %4362 = vmatprep.mubr.bf16.mxu0 %v2560
      %4363 = vmatmul.mubr.bf16.gmra.mrb[0].mxu0 %v2559
      %v4364 = vpop.f32.mrb[0].mxu0
      %v4365 = vadd.f32 %v991, %v4364
      %v4366 = vpop.f32.mrb[0].mxu0
      %v4367 = vpop.f32.mrb[0].mxu0
      %v4368 = vadd.f32 %v991, %v4367
      %v4369 = vpop.f32.mrb[0].mxu0
      %4370 = vmatprep.mubr.bf16.mxu0 %v2585
      %4371 = vmatmul.mubr.bf16.gmra.mrb[0].mxu0 %v2584
      %v4372 = vpop.f32.mrb[0].mxu0
      %v4373 = vadd.f32 %v991, %v4372
      %v4374 = vpop.f32.mrb[0].mxu0
      %v4375 = vpop.f32.mrb[0].mxu0
      %v4376 = vadd.f32 %v991, %v4375
      %v4377 = vpop.f32.mrb[0].mxu0
      %4378 = vdwg.mxu0
      %4379 = vmatprep.subr.bf16.mxu0 0
      %4380 = vmatpush1.bf16.msra.mxu0 %v3793
      %4381 = vmatprep.subr.bf16.mxu0 0
      %4382 = vmatpush1.bf16.msra.mxu0 %v3794
      %4383 = vmatprep.subr.bf16.mxu0 0
      %4384 = vmatpush1.bf16.msra.mxu0 %v3795
      %4385 = vmatprep.subr.bf16.mxu0 0
      %4386 = vmatpush1.bf16.msra.mxu0 %v3796
      %4387 = vmatprep.subr.bf16.mxu0 0
      %4388 = vmatpush1.bf16.msra.mxu0 %v3797
      %4389 = vmatprep.subr.bf16.mxu0 0
      %4390 = vmatpush1.bf16.msra.mxu0 %v3798
      %4391 = vmatprep.subr.bf16.mxu0 0
      %4392 = vmatpush1.bf16.msra.mxu0 %v3799
      %4393 = vmatprep.subr.bf16.mxu0 0
      %4394 = vmatpush1.bf16.msra.mxu0 %v3800
      %4395 = vmatprep.subr.bf16.mxu0 0
      %4396 = vmatpush1.bf16.msra.mxu0 %v3801
      %4397 = vmatprep.subr.bf16.mxu0 0
      %4398 = vmatpush1.bf16.msra.mxu0 %v3802
      %4399 = vmatprep.subr.bf16.mxu0 0
      %4400 = vmatpush1.bf16.msra.mxu0 %v3803
      %4401 = vmatprep.subr.bf16.mxu0 0
      %4402 = vmatpush1.bf16.msra.mxu0 %v3804
      %4403 = vmatprep.subr.bf16.mxu0 0
      %4404 = vmatpush1.bf16.msra.mxu0 %v3805
      %4405 = vmatprep.subr.bf16.mxu0 0
      %4406 = vmatpush1.bf16.msra.mxu0 %v3806
      %4407 = vmatprep.subr.bf16.mxu0 0
      %4408 = vmatpush1.bf16.msra.mxu0 %v3807
      %4409 = vmatprep.subr.bf16.mxu0 0
      %4410 = vmatpush1.bf16.msra.mxu0 %v3808
      %4411 = vmatprep.mubr.bf16.mxu0 %v2212
      %4412 = vmatmul.mubr.bf16.gmra.mrb[0].mxu0 %v2211
      %v4413 = vpop.f32.mrb[0].mxu0
      %v4414 = vadd.f32 %v4253, %v4413
      %v4415 = vpop.f32.mrb[0].mxu0
      %v4416 = vpop.f32.mrb[0].mxu0
      %v4417 = vadd.f32 %v4256, %v4416
      %v4418 = vpop.f32.mrb[0].mxu0
      %4419 = vmatprep.mubr.bf16.mxu0 %v2237
      %4420 = vmatmul.mubr.bf16.gmra.mrb[0].mxu0 %v2236
      %v4421 = vpop.f32.mrb[0].mxu0
      %v4422 = vadd.f32 %v4261, %v4421
      %v4423 = vpop.f32.mrb[0].mxu0
      %v4424 = vpop.f32.mrb[0].mxu0
      %v4425 = vadd.f32 %v4264, %v4424
      %v4426 = vpop.f32.mrb[0].mxu0
      %4427 = vmatprep.mubr.bf16.mxu0 %v2262
      %4428 = vmatmul.mubr.bf16.gmra.mrb[0].mxu0 %v2261
      %v4429 = vpop.f32.mrb[0].mxu0
      %v4430 = vadd.f32 %v4269, %v4429
      %v4431 = vpop.f32.mrb[0].mxu0
      %v4432 = vpop.f32.mrb[0].mxu0
      %v4433 = vadd.f32 %v4272, %v4432
      %v4434 = vpop.f32.mrb[0].mxu0
      %4435 = vmatprep.mubr.bf16.mxu0 %v2287
      %4436 = vmatmul.mubr.bf16.gmra.mrb[0].mxu0 %v2286
      %v4437 = vpop.f32.mrb[0].mxu0
      %v4438 = vadd.f32 %v4277, %v4437
      %v4439 = vpop.f32.mrb[0].mxu0
      %v4440 = vpop.f32.mrb[0].mxu0
      %v4441 = vadd.f32 %v4280, %v4440
      %v4442 = vpop.f32.mrb[0].mxu0
      %4443 = vmatprep.mubr.bf16.mxu0 %v2312
      %4444 = vmatmul.mubr.bf16.gmra.mrb[0].mxu0 %v2311
      %v4445 = vpop.f32.mrb[0].mxu0
      %v4446 = vadd.f32 %v4285, %v4445
      %v4447 = vpop.f32.mrb[0].mxu0
      %v4448 = vpop.f32.mrb[0].mxu0
      %v4449 = vadd.f32 %v4288, %v4448
      %v4450 = vpop.f32.mrb[0].mxu0
      %4451 = vmatprep.mubr.bf16.mxu0 %v2337
      %4452 = vmatmul.mubr.bf16.gmra.mrb[0].mxu0 %v2336
      %v4453 = vpop.f32.mrb[0].mxu0
      %v4454 = vadd.f32 %v4293, %v4453
      %v4455 = vpop.f32.mrb[0].mxu0
      %v4456 = vpop.f32.mrb[0].mxu0
      %v4457 = vadd.f32 %v4296, %v4456
      %v4458 = vpop.f32.mrb[0].mxu0
      %4459 = vmatprep.mubr.bf16.mxu0 %v2362
      %4460 = vmatmul.mubr.bf16.gmra.mrb[0].mxu0 %v2361
      %v4461 = vpop.f32.mrb[0].mxu0
      %v4462 = vadd.f32 %v4301, %v4461
      %v4463 = vpop.f32.mrb[0].mxu0
      %v4464 = vpop.f32.mrb[0].mxu0
      %v4465 = vadd.f32 %v4304, %v4464
      %v4466 = vpop.f32.mrb[0].mxu0
      %4467 = vmatprep.mubr.bf16.mxu0 %v2387
      %4468 = vmatmul.mubr.bf16.gmra.mrb[0].mxu0 %v2386
      %v4469 = vpop.f32.mrb[0].mxu0
      %v4470 = vadd.f32 %v4309, %v4469
      %v4471 = vpop.f32.mrb[0].mxu0
      %v4472 = vpop.f32.mrb[0].mxu0
      %v4473 = vadd.f32 %v4312, %v4472
      %v4474 = vpop.f32.mrb[0].mxu0
      %4475 = vmatprep.mubr.bf16.mxu0 %v2412
      %4476 = vmatmul.mubr.bf16.gmra.mrb[0].mxu0 %v2411
      %v4477 = vpop.f32.mrb[0].mxu0
      %v4478 = vadd.f32 %v4317, %v4477
      %v4479 = vpop.f32.mrb[0].mxu0
      %v4480 = vpop.f32.mrb[0].mxu0
      %v4481 = vadd.f32 %v4320, %v4480
      %v4482 = vpop.f32.mrb[0].mxu0
      %4483 = vmatprep.mubr.bf16.mxu0 %v2437
      %4484 = vmatmul.mubr.bf16.gmra.mrb[0].mxu0 %v2436
      %v4485 = vpop.f32.mrb[0].mxu0
      %v4486 = vadd.f32 %v4325, %v4485
      %v4487 = vpop.f32.mrb[0].mxu0
      %v4488 = vpop.f32.mrb[0].mxu0
      %v4489 = vadd.f32 %v4328, %v4488
      %v4490 = vpop.f32.mrb[0].mxu0
      %4491 = vmatprep.mubr.bf16.mxu0 %v2462
      %4492 = vmatmul.mubr.bf16.gmra.mrb[0].mxu0 %v2461
      %v4493 = vpop.f32.mrb[0].mxu0
      %v4494 = vadd.f32 %v4333, %v4493
      %v4495 = vpop.f32.mrb[0].mxu0
      %v4496 = vpop.f32.mrb[0].mxu0
      %v4497 = vadd.f32 %v4336, %v4496
      %v4498 = vpop.f32.mrb[0].mxu0
      %4499 = vmatprep.mubr.bf16.mxu0 %v2487
      %4500 = vmatmul.mubr.bf16.gmra.mrb[0].mxu0 %v2486
      %v4501 = vpop.f32.mrb[0].mxu0
      %v4502 = vadd.f32 %v4341, %v4501
      %v4503 = vpop.f32.mrb[0].mxu0
      %v4504 = vpop.f32.mrb[0].mxu0
      %v4505 = vadd.f32 %v4344, %v4504
      %v4506 = vpop.f32.mrb[0].mxu0
      %4507 = vmatprep.mubr.bf16.mxu0 %v2512
      %4508 = vmatmul.mubr.bf16.gmra.mrb[0].mxu0 %v2511
      %v4509 = vpop.f32.mrb[0].mxu0
      %v4510 = vadd.f32 %v4349, %v4509
      %v4511 = vpop.f32.mrb[0].mxu0
      %v4512 = vpop.f32.mrb[0].mxu0
      %v4513 = vadd.f32 %v4352, %v4512
      %v4514 = vpop.f32.mrb[0].mxu0
      %4515 = vmatprep.mubr.bf16.mxu0 %v2537
      %4516 = vmatmul.mubr.bf16.gmra.mrb[0].mxu0 %v2536
      %v4517 = vpop.f32.mrb[0].mxu0
      %v4518 = vadd.f32 %v4357, %v4517
      %v4519 = vpop.f32.mrb[0].mxu0
      %v4520 = vpop.f32.mrb[0].mxu0
      %v4521 = vadd.f32 %v4360, %v4520
      %v4522 = vpop.f32.mrb[0].mxu0
      %4523 = vmatprep.mubr.bf16.mxu0 %v2562
      %4524 = vmatmul.mubr.bf16.gmra.mrb[0].mxu0 %v2561
      %v4525 = vpop.f32.mrb[0].mxu0
      %v4526 = vadd.f32 %v4365, %v4525
      %v4527 = vpop.f32.mrb[0].mxu0
      %v4528 = vpop.f32.mrb[0].mxu0
      %v4529 = vadd.f32 %v4368, %v4528
      %v4530 = vpop.f32.mrb[0].mxu0
      %4531 = vmatprep.mubr.bf16.mxu0 %v2587
      %4532 = vmatmul.mubr.bf16.gmra.mrb[0].mxu0 %v2586
      %v4533 = vpop.f32.mrb[0].mxu0
      %v4534 = vadd.f32 %v4373, %v4533
      %v4535 = vpop.f32.mrb[0].mxu0
      %v4536 = vpop.f32.mrb[0].mxu0
      %v4537 = vadd.f32 %v4376, %v4536
      %v4538 = vpop.f32.mrb[0].mxu0
      %4539 = vdwg.mxu0
      %4540 = vmatprep.subr.bf16.mxu0 0
      %4541 = vmatpush1.bf16.msra.mxu0 %v3809
      %4542 = vmatprep.subr.bf16.mxu0 0
      %4543 = vmatpush1.bf16.msra.mxu0 %v3810
      %4544 = vmatprep.subr.bf16.mxu0 0
      %4545 = vmatpush1.bf16.msra.mxu0 %v3811
      %4546 = vmatprep.subr.bf16.mxu0 0
      %4547 = vmatpush1.bf16.msra.mxu0 %v3812
      %4548 = vmatprep.subr.bf16.mxu0 0
      %4549 = vmatpush1.bf16.msra.mxu0 %v3813
      %4550 = vmatprep.subr.bf16.mxu0 0
      %4551 = vmatpush1.bf16.msra.mxu0 %v3814
      %4552 = vmatprep.subr.bf16.mxu0 0
      %4553 = vmatpush1.bf16.msra.mxu0 %v3815
      %4554 = vmatprep.subr.bf16.mxu0 0
      %4555 = vmatpush1.bf16.msra.mxu0 %v3816
      %4556 = vmatprep.subr.bf16.mxu0 0
      %4557 = vmatpush1.bf16.msra.mxu0 %v3817
      %4558 = vmatprep.subr.bf16.mxu0 0
      %4559 = vmatpush1.bf16.msra.mxu0 %v3818
      %4560 = vmatprep.subr.bf16.mxu0 0
      %4561 = vmatpush1.bf16.msra.mxu0 %v3819
      %4562 = vmatprep.subr.bf16.mxu0 0
      %4563 = vmatpush1.bf16.msra.mxu0 %v3820
      %4564 = vmatprep.subr.bf16.mxu0 0
      %4565 = vmatpush1.bf16.msra.mxu0 %v3821
      %4566 = vmatprep.subr.bf16.mxu0 0
      %4567 = vmatpush1.bf16.msra.mxu0 %v3822
      %4568 = vmatprep.subr.bf16.mxu0 0
      %4569 = vmatpush1.bf16.msra.mxu0 %v3823
      %4570 = vmatprep.subr.bf16.mxu0 0
      %4571 = vmatpush1.bf16.msra.mxu0 %v3824
      %4572 = vmatprep.mubr.bf16.mxu0 %v2214
      %4573 = vmatmul.mubr.bf16.gmra.mrb[0].mxu0 %v2213
      %v4574 = vpop.f32.mrb[0].mxu0
      %v4575 = vadd.f32 %v4414, %v4574
      %v4576 = vpop.f32.mrb[0].mxu0
      %v4577 = vpop.f32.mrb[0].mxu0
      %v4578 = vadd.f32 %v4417, %v4577
      %v4579 = vpop.f32.mrb[0].mxu0
      %4580 = vmatprep.mubr.bf16.mxu0 %v2239
      %4581 = vmatmul.mubr.bf16.gmra.mrb[0].mxu0 %v2238
      %v4582 = vpop.f32.mrb[0].mxu0
      %v4583 = vadd.f32 %v4422, %v4582
      %v4584 = vpop.f32.mrb[0].mxu0
      %v4585 = vpop.f32.mrb[0].mxu0
      %v4586 = vadd.f32 %v4425, %v4585
      %v4587 = vpop.f32.mrb[0].mxu0
      %4588 = vmatprep.mubr.bf16.mxu0 %v2264
      %4589 = vmatmul.mubr.bf16.gmra.mrb[0].mxu0 %v2263
      %v4590 = vpop.f32.mrb[0].mxu0
      %v4591 = vadd.f32 %v4430, %v4590
      %v4592 = vpop.f32.mrb[0].mxu0
      %v4593 = vpop.f32.mrb[0].mxu0
      %v4594 = vadd.f32 %v4433, %v4593
      %v4595 = vpop.f32.mrb[0].mxu0
      %4596 = vmatprep.mubr.bf16.mxu0 %v2289
      %4597 = vmatmul.mubr.bf16.gmra.mrb[0].mxu0 %v2288
      %v4598 = vpop.f32.mrb[0].mxu0
      %v4599 = vadd.f32 %v4438, %v4598
      %v4600 = vpop.f32.mrb[0].mxu0
      %v4601 = vpop.f32.mrb[0].mxu0
      %v4602 = vadd.f32 %v4441, %v4601
      %v4603 = vpop.f32.mrb[0].mxu0
      %4604 = vmatprep.mubr.bf16.mxu0 %v2314
      %4605 = vmatmul.mubr.bf16.gmra.mrb[0].mxu0 %v2313
      %v4606 = vpop.f32.mrb[0].mxu0
      %v4607 = vadd.f32 %v4446, %v4606
      %v4608 = vpop.f32.mrb[0].mxu0
      %v4609 = vpop.f32.mrb[0].mxu0
      %v4610 = vadd.f32 %v4449, %v4609
      %v4611 = vpop.f32.mrb[0].mxu0
      %4612 = vmatprep.mubr.bf16.mxu0 %v2339
      %4613 = vmatmul.mubr.bf16.gmra.mrb[0].mxu0 %v2338
      %v4614 = vpop.f32.mrb[0].mxu0
      %v4615 = vadd.f32 %v4454, %v4614
      %v4616 = vpop.f32.mrb[0].mxu0
      %v4617 = vpop.f32.mrb[0].mxu0
      %v4618 = vadd.f32 %v4457, %v4617
      %v4619 = vpop.f32.mrb[0].mxu0
      %4620 = vmatprep.mubr.bf16.mxu0 %v2364
      %4621 = vmatmul.mubr.bf16.gmra.mrb[0].mxu0 %v2363
      %v4622 = vpop.f32.mrb[0].mxu0
      %v4623 = vadd.f32 %v4462, %v4622
      %v4624 = vpop.f32.mrb[0].mxu0
      %v4625 = vpop.f32.mrb[0].mxu0
      %v4626 = vadd.f32 %v4465, %v4625
      %v4627 = vpop.f32.mrb[0].mxu0
      %4628 = vmatprep.mubr.bf16.mxu0 %v2389
      %4629 = vmatmul.mubr.bf16.gmra.mrb[0].mxu0 %v2388
      %v4630 = vpop.f32.mrb[0].mxu0
      %v4631 = vadd.f32 %v4470, %v4630
      %v4632 = vpop.f32.mrb[0].mxu0
      %v4633 = vpop.f32.mrb[0].mxu0
      %v4634 = vadd.f32 %v4473, %v4633
      %v4635 = vpop.f32.mrb[0].mxu0
      %4636 = vmatprep.mubr.bf16.mxu0 %v2414
      %4637 = vmatmul.mubr.bf16.gmra.mrb[0].mxu0 %v2413
      %v4638 = vpop.f32.mrb[0].mxu0
      %v4639 = vadd.f32 %v4478, %v4638
      %v4640 = vpop.f32.mrb[0].mxu0
      %v4641 = vpop.f32.mrb[0].mxu0
      %v4642 = vadd.f32 %v4481, %v4641
      %v4643 = vpop.f32.mrb[0].mxu0
      %4644 = vmatprep.mubr.bf16.mxu0 %v2439
      %4645 = vmatmul.mubr.bf16.gmra.mrb[0].mxu0 %v2438
      %v4646 = vpop.f32.mrb[0].mxu0
      %v4647 = vadd.f32 %v4486, %v4646
      %v4648 = vpop.f32.mrb[0].mxu0
      %v4649 = vpop.f32.mrb[0].mxu0
      %v4650 = vadd.f32 %v4489, %v4649
      %v4651 = vpop.f32.mrb[0].mxu0
      %4652 = vmatprep.mubr.bf16.mxu0 %v2464
      %4653 = vmatmul.mubr.bf16.gmra.mrb[0].mxu0 %v2463
      %v4654 = vpop.f32.mrb[0].mxu0
      %v4655 = vadd.f32 %v4494, %v4654
      %v4656 = vpop.f32.mrb[0].mxu0
      %v4657 = vpop.f32.mrb[0].mxu0
      %v4658 = vadd.f32 %v4497, %v4657
      %v4659 = vpop.f32.mrb[0].mxu0
      %4660 = vmatprep.mubr.bf16.mxu0 %v2489
      %4661 = vmatmul.mubr.bf16.gmra.mrb[0].mxu0 %v2488
      %v4662 = vpop.f32.mrb[0].mxu0
      %v4663 = vadd.f32 %v4502, %v4662
      %v4664 = vpop.f32.mrb[0].mxu0
      %v4665 = vpop.f32.mrb[0].mxu0
      %v4666 = vadd.f32 %v4505, %v4665
      %v4667 = vpop.f32.mrb[0].mxu0
      %4668 = vmatprep.mubr.bf16.mxu0 %v2514
      %4669 = vmatmul.mubr.bf16.gmra.mrb[0].mxu0 %v2513
      %v4670 = vpop.f32.mrb[0].mxu0
      %v4671 = vadd.f32 %v4510, %v4670
      %v4672 = vpop.f32.mrb[0].mxu0
      %v4673 = vpop.f32.mrb[0].mxu0
      %v4674 = vadd.f32 %v4513, %v4673
      %v4675 = vpop.f32.mrb[0].mxu0
      %4676 = vmatprep.mubr.bf16.mxu0 %v2539
      %4677 = vmatmul.mubr.bf16.gmra.mrb[0].mxu0 %v2538
      %v4678 = vpop.f32.mrb[0].mxu0
      %v4679 = vadd.f32 %v4518, %v4678
      %v4680 = vpop.f32.mrb[0].mxu0
      %v4681 = vpop.f32.mrb[0].mxu0
      %v4682 = vadd.f32 %v4521, %v4681
      %v4683 = vpop.f32.mrb[0].mxu0
      %4684 = vmatprep.mubr.bf16.mxu0 %v2564
      %4685 = vmatmul.mubr.bf16.gmra.mrb[0].mxu0 %v2563
      %v4686 = vpop.f32.mrb[0].mxu0
      %v4687 = vadd.f32 %v4526, %v4686
      %v4688 = vpop.f32.mrb[0].mxu0
      %v4689 = vpop.f32.mrb[0].mxu0
      %v4690 = vadd.f32 %v4529, %v4689
      %v4691 = vpop.f32.mrb[0].mxu0
      %4692 = vmatprep.mubr.bf16.mxu0 %v2589
      %4693 = vmatmul.mubr.bf16.gmra.mrb[0].mxu0 %v2588
      %v4694 = vpop.f32.mrb[0].mxu0
      %v4695 = vadd.f32 %v4534, %v4694
      %v4696 = vpop.f32.mrb[0].mxu0
      %v4697 = vpop.f32.mrb[0].mxu0
      %v4698 = vadd.f32 %v4537, %v4697
      %v4699 = vpop.f32.mrb[0].mxu0
      %4700 = vdwg.mxu0
      %4701 = vmatprep.subr.bf16.mxu0 0
      %4702 = vmatpush1.bf16.msra.mxu0 %v3825
      %4703 = vmatprep.subr.bf16.mxu0 0
      %4704 = vmatpush1.bf16.msra.mxu0 %v3826
      %4705 = vmatprep.subr.bf16.mxu0 0
      %4706 = vmatpush1.bf16.msra.mxu0 %v3827
      %4707 = vmatprep.subr.bf16.mxu0 0
      %4708 = vmatpush1.bf16.msra.mxu0 %v3828
      %4709 = vmatprep.subr.bf16.mxu0 0
      %4710 = vmatpush1.bf16.msra.mxu0 %v3829
      %4711 = vmatprep.subr.bf16.mxu0 0
      %4712 = vmatpush1.bf16.msra.mxu0 %v3830
      %4713 = vmatprep.subr.bf16.mxu0 0
      %4714 = vmatpush1.bf16.msra.mxu0 %v3831
      %4715 = vmatprep.subr.bf16.mxu0 0
      %4716 = vmatpush1.bf16.msra.mxu0 %v3832
      %4717 = vmatprep.subr.bf16.mxu0 0
      %4718 = vmatpush1.bf16.msra.mxu0 %v3833
      %4719 = vmatprep.subr.bf16.mxu0 0
      %4720 = vmatpush1.bf16.msra.mxu0 %v3834
      %4721 = vmatprep.subr.bf16.mxu0 0
      %4722 = vmatpush1.bf16.msra.mxu0 %v3835
      %4723 = vmatprep.subr.bf16.mxu0 0
      %4724 = vmatpush1.bf16.msra.mxu0 %v3836
      %4725 = vmatprep.subr.bf16.mxu0 0
      %4726 = vmatpush1.bf16.msra.mxu0 %v3837
      %4727 = vmatprep.subr.bf16.mxu0 0
      %4728 = vmatpush1.bf16.msra.mxu0 %v3838
      %4729 = vmatprep.subr.bf16.mxu0 0
      %4730 = vmatpush1.bf16.msra.mxu0 %v3839
      %4731 = vmatprep.subr.bf16.mxu0 0
      %4732 = vmatpush1.bf16.msra.mxu0 %v3840
      %4733 = vmatprep.mubr.bf16.mxu0 %v2216
      %4734 = vmatmul.mubr.bf16.gmra.mrb[0].mxu0 %v2215
      %v4735 = vpop.f32.mrb[0].mxu0
      %v4736 = vadd.f32 %v4575, %v4735
      %v4737 = vpop.f32.mrb[0].mxu0
      %v4738 = vpop.f32.mrb[0].mxu0
      %v4739 = vadd.f32 %v4578, %v4738
      %v4740 = vpop.f32.mrb[0].mxu0
      %4741 = vmatprep.mubr.bf16.mxu0 %v2241
      %4742 = vmatmul.mubr.bf16.gmra.mrb[0].mxu0 %v2240
      %v4743 = vpop.f32.mrb[0].mxu0
      %v4744 = vadd.f32 %v4583, %v4743
      %v4745 = vpop.f32.mrb[0].mxu0
      %v4746 = vpop.f32.mrb[0].mxu0
      %v4747 = vadd.f32 %v4586, %v4746
      %v4748 = vpop.f32.mrb[0].mxu0
      %4749 = vmatprep.mubr.bf16.mxu0 %v2266
      %4750 = vmatmul.mubr.bf16.gmra.mrb[0].mxu0 %v2265
      %v4751 = vpop.f32.mrb[0].mxu0
      %v4752 = vadd.f32 %v4591, %v4751
      %v4753 = vpop.f32.mrb[0].mxu0
      %v4754 = vpop.f32.mrb[0].mxu0
      %v4755 = vadd.f32 %v4594, %v4754
      %v4756 = vpop.f32.mrb[0].mxu0
      %4757 = vmatprep.mubr.bf16.mxu0 %v2291
      %4758 = vmatmul.mubr.bf16.gmra.mrb[0].mxu0 %v2290
      %v4759 = vpop.f32.mrb[0].mxu0
      %v4760 = vadd.f32 %v4599, %v4759
      %v4761 = vpop.f32.mrb[0].mxu0
      %v4762 = vpop.f32.mrb[0].mxu0
      %v4763 = vadd.f32 %v4602, %v4762
      %v4764 = vpop.f32.mrb[0].mxu0
      %4765 = vmatprep.mubr.bf16.mxu0 %v2316
      %4766 = vmatmul.mubr.bf16.gmra.mrb[0].mxu0 %v2315
      %v4767 = vpop.f32.mrb[0].mxu0
      %v4768 = vadd.f32 %v4607, %v4767
      %v4769 = vpop.f32.mrb[0].mxu0
      %v4770 = vpop.f32.mrb[0].mxu0
      %v4771 = vadd.f32 %v4610, %v4770
      %v4772 = vpop.f32.mrb[0].mxu0
      %4773 = vmatprep.mubr.bf16.mxu0 %v2341
      %4774 = vmatmul.mubr.bf16.gmra.mrb[0].mxu0 %v2340
      %v4775 = vpop.f32.mrb[0].mxu0
      %v4776 = vadd.f32 %v4615, %v4775
      %v4777 = vpop.f32.mrb[0].mxu0
      %v4778 = vpop.f32.mrb[0].mxu0
      %v4779 = vadd.f32 %v4618, %v4778
      %v4780 = vpop.f32.mrb[0].mxu0
      %4781 = vmatprep.mubr.bf16.mxu0 %v2366
      %4782 = vmatmul.mubr.bf16.gmra.mrb[0].mxu0 %v2365
      %v4783 = vpop.f32.mrb[0].mxu0
      %v4784 = vadd.f32 %v4623, %v4783
      %v4785 = vpop.f32.mrb[0].mxu0
      %v4786 = vpop.f32.mrb[0].mxu0
      %v4787 = vadd.f32 %v4626, %v4786
      %v4788 = vpop.f32.mrb[0].mxu0
      %4789 = vmatprep.mubr.bf16.mxu0 %v2391
      %4790 = vmatmul.mubr.bf16.gmra.mrb[0].mxu0 %v2390
      %v4791 = vpop.f32.mrb[0].mxu0
      %v4792 = vadd.f32 %v4631, %v4791
      %v4793 = vpop.f32.mrb[0].mxu0
      %v4794 = vpop.f32.mrb[0].mxu0
      %v4795 = vadd.f32 %v4634, %v4794
      %v4796 = vpop.f32.mrb[0].mxu0
      %4797 = vmatprep.mubr.bf16.mxu0 %v2416
      %4798 = vmatmul.mubr.bf16.gmra.mrb[0].mxu0 %v2415
      %v4799 = vpop.f32.mrb[0].mxu0
      %v4800 = vadd.f32 %v4639, %v4799
      %v4801 = vpop.f32.mrb[0].mxu0
      %v4802 = vpop.f32.mrb[0].mxu0
      %v4803 = vadd.f32 %v4642, %v4802
      %v4804 = vpop.f32.mrb[0].mxu0
      %4805 = vmatprep.mubr.bf16.mxu0 %v2441
      %4806 = vmatmul.mubr.bf16.gmra.mrb[0].mxu0 %v2440
      %v4807 = vpop.f32.mrb[0].mxu0
      %v4808 = vadd.f32 %v4647, %v4807
      %v4809 = vpop.f32.mrb[0].mxu0
      %v4810 = vpop.f32.mrb[0].mxu0
      %v4811 = vadd.f32 %v4650, %v4810
      %v4812 = vpop.f32.mrb[0].mxu0
      %4813 = vmatprep.mubr.bf16.mxu0 %v2466
      %4814 = vmatmul.mubr.bf16.gmra.mrb[0].mxu0 %v2465
      %v4815 = vpop.f32.mrb[0].mxu0
      %v4816 = vadd.f32 %v4655, %v4815
      %v4817 = vpop.f32.mrb[0].mxu0
      %v4818 = vpop.f32.mrb[0].mxu0
      %v4819 = vadd.f32 %v4658, %v4818
      %v4820 = vpop.f32.mrb[0].mxu0
      %4821 = vmatprep.mubr.bf16.mxu0 %v2491
      %4822 = vmatmul.mubr.bf16.gmra.mrb[0].mxu0 %v2490
      %v4823 = vpop.f32.mrb[0].mxu0
      %v4824 = vadd.f32 %v4663, %v4823
      %v4825 = vpop.f32.mrb[0].mxu0
      %v4826 = vpop.f32.mrb[0].mxu0
      %v4827 = vadd.f32 %v4666, %v4826
      %v4828 = vpop.f32.mrb[0].mxu0
      %4829 = vmatprep.mubr.bf16.mxu0 %v2516
      %4830 = vmatmul.mubr.bf16.gmra.mrb[0].mxu0 %v2515
      %v4831 = vpop.f32.mrb[0].mxu0
      %v4832 = vadd.f32 %v4671, %v4831
      %v4833 = vpop.f32.mrb[0].mxu0
      %v4834 = vpop.f32.mrb[0].mxu0
      %v4835 = vadd.f32 %v4674, %v4834
      %v4836 = vpop.f32.mrb[0].mxu0
      %4837 = vmatprep.mubr.bf16.mxu0 %v2541
      %4838 = vmatmul.mubr.bf16.gmra.mrb[0].mxu0 %v2540
      %v4839 = vpop.f32.mrb[0].mxu0
      %v4840 = vadd.f32 %v4679, %v4839
      %v4841 = vpop.f32.mrb[0].mxu0
      %v4842 = vpop.f32.mrb[0].mxu0
      %v4843 = vadd.f32 %v4682, %v4842
      %v4844 = vpop.f32.mrb[0].mxu0
      %4845 = vmatprep.mubr.bf16.mxu0 %v2566
      %4846 = vmatmul.mubr.bf16.gmra.mrb[0].mxu0 %v2565
      %v4847 = vpop.f32.mrb[0].mxu0
      %v4848 = vadd.f32 %v4687, %v4847
      %v4849 = vpop.f32.mrb[0].mxu0
      %v4850 = vpop.f32.mrb[0].mxu0
      %v4851 = vadd.f32 %v4690, %v4850
      %v4852 = vpop.f32.mrb[0].mxu0
      %4853 = vmatprep.mubr.bf16.mxu0 %v2591
      %4854 = vmatmul.mubr.bf16.gmra.mrb[0].mxu0 %v2590
      %v4855 = vpop.f32.mrb[0].mxu0
      %v4856 = vadd.f32 %v4695, %v4855
      %v4857 = vpop.f32.mrb[0].mxu0
      %v4858 = vpop.f32.mrb[0].mxu0
      %v4859 = vadd.f32 %v4698, %v4858
      %v4860 = vpop.f32.mrb[0].mxu0
      %4861 = vdwg.mxu0
      %4862 = vmatprep.subr.bf16.mxu0 0
      %4863 = vmatpush1.bf16.msra.mxu0 %v3841
      %4864 = vmatprep.subr.bf16.mxu0 0
      %4865 = vmatpush1.bf16.msra.mxu0 %v3842
      %4866 = vmatprep.subr.bf16.mxu0 0
      %4867 = vmatpush1.bf16.msra.mxu0 %v3843
      %4868 = vmatprep.subr.bf16.mxu0 0
      %4869 = vmatpush1.bf16.msra.mxu0 %v3844
      %4870 = vmatprep.subr.bf16.mxu0 0
      %4871 = vmatpush1.bf16.msra.mxu0 %v3845
      %4872 = vmatprep.subr.bf16.mxu0 0
      %4873 = vmatpush1.bf16.msra.mxu0 %v3846
      %4874 = vmatprep.subr.bf16.mxu0 0
      %4875 = vmatpush1.bf16.msra.mxu0 %v3847
      %4876 = vmatprep.subr.bf16.mxu0 0
      %4877 = vmatpush1.bf16.msra.mxu0 %v3848
      %4878 = vmatprep.subr.bf16.mxu0 0
      %4879 = vmatpush1.bf16.msra.mxu0 %v3849
      %4880 = vmatprep.subr.bf16.mxu0 0
      %4881 = vmatpush1.bf16.msra.mxu0 %v3850
      %4882 = vmatprep.subr.bf16.mxu0 0
      %4883 = vmatpush1.bf16.msra.mxu0 %v3851
      %4884 = vmatprep.subr.bf16.mxu0 0
      %4885 = vmatpush1.bf16.msra.mxu0 %v3852
      %4886 = vmatprep.subr.bf16.mxu0 0
      %4887 = vmatpush1.bf16.msra.mxu0 %v3853
      %4888 = vmatprep.subr.bf16.mxu0 0
      %4889 = vmatpush1.bf16.msra.mxu0 %v3854
      %4890 = vmatprep.subr.bf16.mxu0 0
      %4891 = vmatpush1.bf16.msra.mxu0 %v3855
      %4892 = vmatprep.subr.bf16.mxu0 0
      %4893 = vmatpush1.bf16.msra.mxu0 %v3856
      %4894 = vmatprep.mubr.bf16.mxu0 %v2218
      %4895 = vmatmul.mubr.bf16.gmra.mrb[0].mxu0 %v2217
      %v4896 = vpop.f32.mrb[0].mxu0
      %v4897 = vadd.f32 %v4736, %v4896
      %v4898 = vpop.f32.mrb[0].mxu0
      %v4899 = vpop.f32.mrb[0].mxu0
      %v4900 = vadd.f32 %v4739, %v4899
      %v4901 = vpop.f32.mrb[0].mxu0
      %4902 = vmatprep.mubr.bf16.mxu0 %v2243
      %4903 = vmatmul.mubr.bf16.gmra.mrb[0].mxu0 %v2242
      %v4904 = vpop.f32.mrb[0].mxu0
      %v4905 = vadd.f32 %v4744, %v4904
      %v4906 = vpop.f32.mrb[0].mxu0
      %v4907 = vpop.f32.mrb[0].mxu0
      %v4908 = vadd.f32 %v4747, %v4907
      %v4909 = vpop.f32.mrb[0].mxu0
      %4910 = vmatprep.mubr.bf16.mxu0 %v2268
      %4911 = vmatmul.mubr.bf16.gmra.mrb[0].mxu0 %v2267
      %v4912 = vpop.f32.mrb[0].mxu0
      %v4913 = vadd.f32 %v4752, %v4912
      %v4914 = vpop.f32.mrb[0].mxu0
      %v4915 = vpop.f32.mrb[0].mxu0
      %v4916 = vadd.f32 %v4755, %v4915
      %v4917 = vpop.f32.mrb[0].mxu0
      %4918 = vmatprep.mubr.bf16.mxu0 %v2293
      %4919 = vmatmul.mubr.bf16.gmra.mrb[0].mxu0 %v2292
      %v4920 = vpop.f32.mrb[0].mxu0
      %v4921 = vadd.f32 %v4760, %v4920
      %v4922 = vpop.f32.mrb[0].mxu0
      %v4923 = vpop.f32.mrb[0].mxu0
      %v4924 = vadd.f32 %v4763, %v4923
      %v4925 = vpop.f32.mrb[0].mxu0
      %4926 = vmatprep.mubr.bf16.mxu0 %v2318
      %4927 = vmatmul.mubr.bf16.gmra.mrb[0].mxu0 %v2317
      %v4928 = vpop.f32.mrb[0].mxu0
      %v4929 = vadd.f32 %v4768, %v4928
      %v4930 = vpop.f32.mrb[0].mxu0
      %v4931 = vpop.f32.mrb[0].mxu0
      %v4932 = vadd.f32 %v4771, %v4931
      %v4933 = vpop.f32.mrb[0].mxu0
      %4934 = vmatprep.mubr.bf16.mxu0 %v2343
      %4935 = vmatmul.mubr.bf16.gmra.mrb[0].mxu0 %v2342
      %v4936 = vpop.f32.mrb[0].mxu0
      %v4937 = vadd.f32 %v4776, %v4936
      %v4938 = vpop.f32.mrb[0].mxu0
      %v4939 = vpop.f32.mrb[0].mxu0
      %v4940 = vadd.f32 %v4779, %v4939
      %v4941 = vpop.f32.mrb[0].mxu0
      %4942 = vmatprep.mubr.bf16.mxu0 %v2368
      %4943 = vmatmul.mubr.bf16.gmra.mrb[0].mxu0 %v2367
      %v4944 = vpop.f32.mrb[0].mxu0
      %v4945 = vadd.f32 %v4784, %v4944
      %v4946 = vpop.f32.mrb[0].mxu0
      %v4947 = vpop.f32.mrb[0].mxu0
      %v4948 = vadd.f32 %v4787, %v4947
      %v4949 = vpop.f32.mrb[0].mxu0
      %4950 = vmatprep.mubr.bf16.mxu0 %v2393
      %4951 = vmatmul.mubr.bf16.gmra.mrb[0].mxu0 %v2392
      %v4952 = vpop.f32.mrb[0].mxu0
      %v4953 = vadd.f32 %v4792, %v4952
      %v4954 = vpop.f32.mrb[0].mxu0
      %v4955 = vpop.f32.mrb[0].mxu0
      %v4956 = vadd.f32 %v4795, %v4955
      %v4957 = vpop.f32.mrb[0].mxu0
      %4958 = vmatprep.mubr.bf16.mxu0 %v2418
      %4959 = vmatmul.mubr.bf16.gmra.mrb[0].mxu0 %v2417
      %v4960 = vpop.f32.mrb[0].mxu0
      %v4961 = vadd.f32 %v4800, %v4960
      %v4962 = vpop.f32.mrb[0].mxu0
      %v4963 = vpop.f32.mrb[0].mxu0
      %v4964 = vadd.f32 %v4803, %v4963
      %v4965 = vpop.f32.mrb[0].mxu0
      %4966 = vmatprep.mubr.bf16.mxu0 %v2443
      %4967 = vmatmul.mubr.bf16.gmra.mrb[0].mxu0 %v2442
      %v4968 = vpop.f32.mrb[0].mxu0
      %v4969 = vadd.f32 %v4808, %v4968
      %v4970 = vpop.f32.mrb[0].mxu0
      %v4971 = vpop.f32.mrb[0].mxu0
      %v4972 = vadd.f32 %v4811, %v4971
      %v4973 = vpop.f32.mrb[0].mxu0
      %4974 = vmatprep.mubr.bf16.mxu0 %v2468
      %4975 = vmatmul.mubr.bf16.gmra.mrb[0].mxu0 %v2467
      %v4976 = vpop.f32.mrb[0].mxu0
      %v4977 = vadd.f32 %v4816, %v4976
      %v4978 = vpop.f32.mrb[0].mxu0
      %v4979 = vpop.f32.mrb[0].mxu0
      %v4980 = vadd.f32 %v4819, %v4979
      %v4981 = vpop.f32.mrb[0].mxu0
      %4982 = vmatprep.mubr.bf16.mxu0 %v2493
      %4983 = vmatmul.mubr.bf16.gmra.mrb[0].mxu0 %v2492
      %v4984 = vpop.f32.mrb[0].mxu0
      %v4985 = vadd.f32 %v4824, %v4984
      %v4986 = vpop.f32.mrb[0].mxu0
      %v4987 = vpop.f32.mrb[0].mxu0
      %v4988 = vadd.f32 %v4827, %v4987
      %v4989 = vpop.f32.mrb[0].mxu0
      %4990 = vmatprep.mubr.bf16.mxu0 %v2518
      %4991 = vmatmul.mubr.bf16.gmra.mrb[0].mxu0 %v2517
      %v4992 = vpop.f32.mrb[0].mxu0
      %v4993 = vadd.f32 %v4832, %v4992
      %v4994 = vpop.f32.mrb[0].mxu0
      %v4995 = vpop.f32.mrb[0].mxu0
      %v4996 = vadd.f32 %v4835, %v4995
      %v4997 = vpop.f32.mrb[0].mxu0
      %4998 = vmatprep.mubr.bf16.mxu0 %v2543
      %4999 = vmatmul.mubr.bf16.gmra.mrb[0].mxu0 %v2542
      %v5000 = vpop.f32.mrb[0].mxu0
      %v5001 = vadd.f32 %v4840, %v5000
      %v5002 = vpop.f32.mrb[0].mxu0
      %v5003 = vpop.f32.mrb[0].mxu0
      %v5004 = vadd.f32 %v4843, %v5003
      %v5005 = vpop.f32.mrb[0].mxu0
      %5006 = vmatprep.mubr.bf16.mxu0 %v2568
      %5007 = vmatmul.mubr.bf16.gmra.mrb[0].mxu0 %v2567
      %v5008 = vpop.f32.mrb[0].mxu0
      %v5009 = vadd.f32 %v4848, %v5008
      %v5010 = vpop.f32.mrb[0].mxu0
      %v5011 = vpop.f32.mrb[0].mxu0
      %v5012 = vadd.f32 %v4851, %v5011
      %v5013 = vpop.f32.mrb[0].mxu0
      %5014 = vmatprep.mubr.bf16.mxu0 %v2593
      %5015 = vmatmul.mubr.bf16.gmra.mrb[0].mxu0 %v2592
      %v5016 = vpop.f32.mrb[0].mxu0
      %v5017 = vadd.f32 %v4856, %v5016
      %v5018 = vpop.f32.mrb[0].mxu0
      %v5019 = vpop.f32.mrb[0].mxu0
      %v5020 = vadd.f32 %v4859, %v5019
      %v5021 = vpop.f32.mrb[0].mxu0
      %5022 = vdwg.mxu0
      %5023 = vmatprep.subr.bf16.mxu0 0
      %5024 = vmatpush1.bf16.msra.mxu0 %v3857
      %5025 = vmatprep.subr.bf16.mxu0 0
      %5026 = vmatpush1.bf16.msra.mxu0 %v3858
      %5027 = vmatprep.subr.bf16.mxu0 0
      %5028 = vmatpush1.bf16.msra.mxu0 %v3859
      %5029 = vmatprep.subr.bf16.mxu0 0
      %5030 = vmatpush1.bf16.msra.mxu0 %v3860
      %5031 = vmatprep.subr.bf16.mxu0 0
      %5032 = vmatpush1.bf16.msra.mxu0 %v3861
      %5033 = vmatprep.subr.bf16.mxu0 0
      %5034 = vmatpush1.bf16.msra.mxu0 %v3862
      %5035 = vmatprep.subr.bf16.mxu0 0
      %5036 = vmatpush1.bf16.msra.mxu0 %v3863
      %5037 = vmatprep.subr.bf16.mxu0 0
      %5038 = vmatpush1.bf16.msra.mxu0 %v3864
      %5039 = vmatprep.subr.bf16.mxu0 0
      %5040 = vmatpush1.bf16.msra.mxu0 %v3865
      %5041 = vmatprep.subr.bf16.mxu0 0
      %5042 = vmatpush1.bf16.msra.mxu0 %v3866
      %5043 = vmatprep.subr.bf16.mxu0 0
      %5044 = vmatpush1.bf16.msra.mxu0 %v3867
      %5045 = vmatprep.subr.bf16.mxu0 0
      %5046 = vmatpush1.bf16.msra.mxu0 %v3868
      %5047 = vmatprep.subr.bf16.mxu0 0
      %5048 = vmatpush1.bf16.msra.mxu0 %v3869
      %5049 = vmatprep.subr.bf16.mxu0 0
      %5050 = vmatpush1.bf16.msra.mxu0 %v3870
      %5051 = vmatprep.subr.bf16.mxu0 0
      %5052 = vmatpush1.bf16.msra.mxu0 %v3871
      %5053 = vmatprep.subr.bf16.mxu0 0
      %5054 = vmatpush1.bf16.msra.mxu0 %v3872
      %5055 = vmatprep.mubr.bf16.mxu0 %v2220
      %5056 = vmatmul.mubr.bf16.gmra.mrb[0].mxu0 %v2219
      %v5057 = vpop.f32.mrb[0].mxu0
      %v5058 = vadd.f32 %v4897, %v5057
      %v5059 = vpop.f32.mrb[0].mxu0
      %v5060 = vpop.f32.mrb[0].mxu0
      %v5061 = vadd.f32 %v4900, %v5060
      %v5062 = vpop.f32.mrb[0].mxu0
      %5063 = vmatprep.mubr.bf16.mxu0 %v2245
      %5064 = vmatmul.mubr.bf16.gmra.mrb[0].mxu0 %v2244
      %v5065 = vpop.f32.mrb[0].mxu0
      %v5066 = vadd.f32 %v4905, %v5065
      %v5067 = vpop.f32.mrb[0].mxu0
      %v5068 = vpop.f32.mrb[0].mxu0
      %v5069 = vadd.f32 %v4908, %v5068
      %v5070 = vpop.f32.mrb[0].mxu0
      %5071 = vmatprep.mubr.bf16.mxu0 %v2270
      %5072 = vmatmul.mubr.bf16.gmra.mrb[0].mxu0 %v2269
      %v5073 = vpop.f32.mrb[0].mxu0
      %v5074 = vadd.f32 %v4913, %v5073
      %v5075 = vpop.f32.mrb[0].mxu0
      %v5076 = vpop.f32.mrb[0].mxu0
      %v5077 = vadd.f32 %v4916, %v5076
      %v5078 = vpop.f32.mrb[0].mxu0
      %5079 = vmatprep.mubr.bf16.mxu0 %v2295
      %5080 = vmatmul.mubr.bf16.gmra.mrb[0].mxu0 %v2294
      %v5081 = vpop.f32.mrb[0].mxu0
      %v5082 = vadd.f32 %v4921, %v5081
      %v5083 = vpop.f32.mrb[0].mxu0
      %v5084 = vpop.f32.mrb[0].mxu0
      %v5085 = vadd.f32 %v4924, %v5084
      %v5086 = vpop.f32.mrb[0].mxu0
      %5087 = vmatprep.mubr.bf16.mxu0 %v2320
      %5088 = vmatmul.mubr.bf16.gmra.mrb[0].mxu0 %v2319
      %v5089 = vpop.f32.mrb[0].mxu0
      %v5090 = vadd.f32 %v4929, %v5089
      %v5091 = vpop.f32.mrb[0].mxu0
      %v5092 = vpop.f32.mrb[0].mxu0
      %v5093 = vadd.f32 %v4932, %v5092
      %v5094 = vpop.f32.mrb[0].mxu0
      %5095 = vmatprep.mubr.bf16.mxu0 %v2345
      %5096 = vmatmul.mubr.bf16.gmra.mrb[0].mxu0 %v2344
      %v5097 = vpop.f32.mrb[0].mxu0
      %v5098 = vadd.f32 %v4937, %v5097
      %v5099 = vpop.f32.mrb[0].mxu0
      %v5100 = vpop.f32.mrb[0].mxu0
      %v5101 = vadd.f32 %v4940, %v5100
      %v5102 = vpop.f32.mrb[0].mxu0
      %5103 = vmatprep.mubr.bf16.mxu0 %v2370
      %5104 = vmatmul.mubr.bf16.gmra.mrb[0].mxu0 %v2369
      %v5105 = vpop.f32.mrb[0].mxu0
      %v5106 = vadd.f32 %v4945, %v5105
      %v5107 = vpop.f32.mrb[0].mxu0
      %v5108 = vpop.f32.mrb[0].mxu0
      %v5109 = vadd.f32 %v4948, %v5108
      %v5110 = vpop.f32.mrb[0].mxu0
      %5111 = vmatprep.mubr.bf16.mxu0 %v2395
      %5112 = vmatmul.mubr.bf16.gmra.mrb[0].mxu0 %v2394
      %v5113 = vpop.f32.mrb[0].mxu0
      %v5114 = vadd.f32 %v4953, %v5113
      %v5115 = vpop.f32.mrb[0].mxu0
      %v5116 = vpop.f32.mrb[0].mxu0
      %v5117 = vadd.f32 %v4956, %v5116
      %v5118 = vpop.f32.mrb[0].mxu0
      %5119 = vmatprep.mubr.bf16.mxu0 %v2420
      %5120 = vmatmul.mubr.bf16.gmra.mrb[0].mxu0 %v2419
      %v5121 = vpop.f32.mrb[0].mxu0
      %v5122 = vadd.f32 %v4961, %v5121
      %v5123 = vpop.f32.mrb[0].mxu0
      %v5124 = vpop.f32.mrb[0].mxu0
      %v5125 = vadd.f32 %v4964, %v5124
      %v5126 = vpop.f32.mrb[0].mxu0
      %5127 = vmatprep.mubr.bf16.mxu0 %v2445
      %5128 = vmatmul.mubr.bf16.gmra.mrb[0].mxu0 %v2444
      %v5129 = vpop.f32.mrb[0].mxu0
      %v5130 = vadd.f32 %v4969, %v5129
      %v5131 = vpop.f32.mrb[0].mxu0
      %v5132 = vpop.f32.mrb[0].mxu0
      %v5133 = vadd.f32 %v4972, %v5132
      %v5134 = vpop.f32.mrb[0].mxu0
      %5135 = vmatprep.mubr.bf16.mxu0 %v2470
      %5136 = vmatmul.mubr.bf16.gmra.mrb[0].mxu0 %v2469
      %v5137 = vpop.f32.mrb[0].mxu0
      %v5138 = vadd.f32 %v4977, %v5137
      %v5139 = vpop.f32.mrb[0].mxu0
      %v5140 = vpop.f32.mrb[0].mxu0
      %v5141 = vadd.f32 %v4980, %v5140
      %v5142 = vpop.f32.mrb[0].mxu0
      %5143 = vmatprep.mubr.bf16.mxu0 %v2495
      %5144 = vmatmul.mubr.bf16.gmra.mrb[0].mxu0 %v2494
      %v5145 = vpop.f32.mrb[0].mxu0
      %v5146 = vadd.f32 %v4985, %v5145
      %v5147 = vpop.f32.mrb[0].mxu0
      %v5148 = vpop.f32.mrb[0].mxu0
      %v5149 = vadd.f32 %v4988, %v5148
      %v5150 = vpop.f32.mrb[0].mxu0
      %5151 = vmatprep.mubr.bf16.mxu0 %v2520
      %5152 = vmatmul.mubr.bf16.gmra.mrb[0].mxu0 %v2519
      %v5153 = vpop.f32.mrb[0].mxu0
      %v5154 = vadd.f32 %v4993, %v5153
      %v5155 = vpop.f32.mrb[0].mxu0
      %v5156 = vpop.f32.mrb[0].mxu0
      %v5157 = vadd.f32 %v4996, %v5156
      %v5158 = vpop.f32.mrb[0].mxu0
      %5159 = vmatprep.mubr.bf16.mxu0 %v2545
      %5160 = vmatmul.mubr.bf16.gmra.mrb[0].mxu0 %v2544
      %v5161 = vpop.f32.mrb[0].mxu0
      %v5162 = vadd.f32 %v5001, %v5161
      %v5163 = vpop.f32.mrb[0].mxu0
      %v5164 = vpop.f32.mrb[0].mxu0
      %v5165 = vadd.f32 %v5004, %v5164
      %v5166 = vpop.f32.mrb[0].mxu0
      %5167 = vmatprep.mubr.bf16.mxu0 %v2570
      %5168 = vmatmul.mubr.bf16.gmra.mrb[0].mxu0 %v2569
      %v5169 = vpop.f32.mrb[0].mxu0
      %v5170 = vadd.f32 %v5009, %v5169
      %v5171 = vpop.f32.mrb[0].mxu0
      %v5172 = vpop.f32.mrb[0].mxu0
      %v5173 = vadd.f32 %v5012, %v5172
      %v5174 = vpop.f32.mrb[0].mxu0
      %5175 = vmatprep.mubr.bf16.mxu0 %v2595
      %5176 = vmatmul.mubr.bf16.gmra.mrb[0].mxu0 %v2594
      %v5177 = vpop.f32.mrb[0].mxu0
      %v5178 = vadd.f32 %v5017, %v5177
      %v5179 = vpop.f32.mrb[0].mxu0
      %v5180 = vpop.f32.mrb[0].mxu0
      %v5181 = vadd.f32 %v5020, %v5180
      %v5182 = vpop.f32.mrb[0].mxu0
      %5183 = vdwg.mxu0
      %5184 = vmatprep.subr.bf16.mxu0 0
      %5185 = vmatpush1.bf16.msra.mxu0 %v3873
      %5186 = vmatprep.subr.bf16.mxu0 0
      %5187 = vmatpush1.bf16.msra.mxu0 %v3874
      %5188 = vmatprep.subr.bf16.mxu0 0
      %5189 = vmatpush1.bf16.msra.mxu0 %v3875
      %5190 = vmatprep.subr.bf16.mxu0 0
      %5191 = vmatpush1.bf16.msra.mxu0 %v3876
      %5192 = vmatprep.subr.bf16.mxu0 0
      %5193 = vmatpush1.bf16.msra.mxu0 %v3877
      %5194 = vmatprep.subr.bf16.mxu0 0
      %5195 = vmatpush1.bf16.msra.mxu0 %v3878
      %5196 = vmatprep.subr.bf16.mxu0 0
      %5197 = vmatpush1.bf16.msra.mxu0 %v3879
      %5198 = vmatprep.subr.bf16.mxu0 0
      %5199 = vmatpush1.bf16.msra.mxu0 %v3880
      %5200 = vmatprep.subr.bf16.mxu0 0
      %5201 = vmatpush1.bf16.msra.mxu0 %v3881
      %5202 = vmatprep.subr.bf16.mxu0 0
      %5203 = vmatpush1.bf16.msra.mxu0 %v3882
      %5204 = vmatprep.subr.bf16.mxu0 0
      %5205 = vmatpush1.bf16.msra.mxu0 %v3883
      %5206 = vmatprep.subr.bf16.mxu0 0
      %5207 = vmatpush1.bf16.msra.mxu0 %v3884
      %5208 = vmatprep.subr.bf16.mxu0 0
      %5209 = vmatpush1.bf16.msra.mxu0 %v3885
      %5210 = vmatprep.subr.bf16.mxu0 0
      %5211 = vmatpush1.bf16.msra.mxu0 %v3886
      %5212 = vmatprep.subr.bf16.mxu0 0
      %5213 = vmatpush1.bf16.msra.mxu0 %v3887
      %5214 = vmatprep.subr.bf16.mxu0 0
      %5215 = vmatpush1.bf16.msra.mxu0 %v3888
      %5216 = vmatprep.mubr.bf16.mxu0 %v2222
      %5217 = vmatmul.mubr.bf16.gmra.mrb[0].mxu0 %v2221
      %v5218 = vpop.f32.mrb[0].mxu0
      %v5219 = vadd.f32 %v5058, %v5218
      %v5220 = vpop.f32.mrb[0].mxu0
      %v5221 = vpop.f32.mrb[0].mxu0
      %v5222 = vadd.f32 %v5061, %v5221
      %v5223 = vpop.f32.mrb[0].mxu0
      %5224 = vmatprep.mubr.bf16.mxu0 %v2247
      %5225 = vmatmul.mubr.bf16.gmra.mrb[0].mxu0 %v2246
      %v5226 = vpop.f32.mrb[0].mxu0
      %v5227 = vadd.f32 %v5066, %v5226
      %v5228 = vpop.f32.mrb[0].mxu0
      %v5229 = vpop.f32.mrb[0].mxu0
      %v5230 = vadd.f32 %v5069, %v5229
      %v5231 = vpop.f32.mrb[0].mxu0
      %5232 = vmatprep.mubr.bf16.mxu0 %v2272
      %5233 = vmatmul.mubr.bf16.gmra.mrb[0].mxu0 %v2271
      %v5234 = vpop.f32.mrb[0].mxu0
      %v5235 = vadd.f32 %v5074, %v5234
      %v5236 = vpop.f32.mrb[0].mxu0
      %v5237 = vpop.f32.mrb[0].mxu0
      %v5238 = vadd.f32 %v5077, %v5237
      %v5239 = vpop.f32.mrb[0].mxu0
      %5240 = vmatprep.mubr.bf16.mxu0 %v2297
      %5241 = vmatmul.mubr.bf16.gmra.mrb[0].mxu0 %v2296
      %v5242 = vpop.f32.mrb[0].mxu0
      %v5243 = vadd.f32 %v5082, %v5242
      %v5244 = vpop.f32.mrb[0].mxu0
      %v5245 = vpop.f32.mrb[0].mxu0
      %v5246 = vadd.f32 %v5085, %v5245
      %v5247 = vpop.f32.mrb[0].mxu0
      %5248 = vmatprep.mubr.bf16.mxu0 %v2322
      %5249 = vmatmul.mubr.bf16.gmra.mrb[0].mxu0 %v2321
      %v5250 = vpop.f32.mrb[0].mxu0
      %v5251 = vadd.f32 %v5090, %v5250
      %v5252 = vpop.f32.mrb[0].mxu0
      %v5253 = vpop.f32.mrb[0].mxu0
      %v5254 = vadd.f32 %v5093, %v5253
      %v5255 = vpop.f32.mrb[0].mxu0
      %5256 = vmatprep.mubr.bf16.mxu0 %v2347
      %5257 = vmatmul.mubr.bf16.gmra.mrb[0].mxu0 %v2346
      %v5258 = vpop.f32.mrb[0].mxu0
      %v5259 = vadd.f32 %v5098, %v5258
      %v5260 = vpop.f32.mrb[0].mxu0
      %v5261 = vpop.f32.mrb[0].mxu0
      %v5262 = vadd.f32 %v5101, %v5261
      %v5263 = vpop.f32.mrb[0].mxu0
      %5264 = vmatprep.mubr.bf16.mxu0 %v2372
      %5265 = vmatmul.mubr.bf16.gmra.mrb[0].mxu0 %v2371
      %v5266 = vpop.f32.mrb[0].mxu0
      %v5267 = vadd.f32 %v5106, %v5266
      %v5268 = vpop.f32.mrb[0].mxu0
      %v5269 = vpop.f32.mrb[0].mxu0
      %v5270 = vadd.f32 %v5109, %v5269
      %v5271 = vpop.f32.mrb[0].mxu0
      %5272 = vmatprep.mubr.bf16.mxu0 %v2397
      %5273 = vmatmul.mubr.bf16.gmra.mrb[0].mxu0 %v2396
      %v5274 = vpop.f32.mrb[0].mxu0
      %v5275 = vadd.f32 %v5114, %v5274
      %v5276 = vpop.f32.mrb[0].mxu0
      %v5277 = vpop.f32.mrb[0].mxu0
      %v5278 = vadd.f32 %v5117, %v5277
      %v5279 = vpop.f32.mrb[0].mxu0
      %5280 = vmatprep.mubr.bf16.mxu0 %v2422
      %5281 = vmatmul.mubr.bf16.gmra.mrb[0].mxu0 %v2421
      %v5282 = vpop.f32.mrb[0].mxu0
      %v5283 = vadd.f32 %v5122, %v5282
      %v5284 = vpop.f32.mrb[0].mxu0
      %v5285 = vpop.f32.mrb[0].mxu0
      %v5286 = vadd.f32 %v5125, %v5285
      %v5287 = vpop.f32.mrb[0].mxu0
      %5288 = vmatprep.mubr.bf16.mxu0 %v2447
      %5289 = vmatmul.mubr.bf16.gmra.mrb[0].mxu0 %v2446
      %v5290 = vpop.f32.mrb[0].mxu0
      %v5291 = vadd.f32 %v5130, %v5290
      %v5292 = vpop.f32.mrb[0].mxu0
      %v5293 = vpop.f32.mrb[0].mxu0
      %v5294 = vadd.f32 %v5133, %v5293
      %v5295 = vpop.f32.mrb[0].mxu0
      %5296 = vmatprep.mubr.bf16.mxu0 %v2472
      %5297 = vmatmul.mubr.bf16.gmra.mrb[0].mxu0 %v2471
      %v5298 = vpop.f32.mrb[0].mxu0
      %v5299 = vadd.f32 %v5138, %v5298
      %v5300 = vpop.f32.mrb[0].mxu0
      %v5301 = vpop.f32.mrb[0].mxu0
      %v5302 = vadd.f32 %v5141, %v5301
      %v5303 = vpop.f32.mrb[0].mxu0
      %5304 = vmatprep.mubr.bf16.mxu0 %v2497
      %5305 = vmatmul.mubr.bf16.gmra.mrb[0].mxu0 %v2496
      %v5306 = vpop.f32.mrb[0].mxu0
      %v5307 = vadd.f32 %v5146, %v5306
      %v5308 = vpop.f32.mrb[0].mxu0
      %v5309 = vpop.f32.mrb[0].mxu0
      %v5310 = vadd.f32 %v5149, %v5309
      %v5311 = vpop.f32.mrb[0].mxu0
      %5312 = vmatprep.mubr.bf16.mxu0 %v2522
      %5313 = vmatmul.mubr.bf16.gmra.mrb[0].mxu0 %v2521
      %v5314 = vpop.f32.mrb[0].mxu0
      %v5315 = vadd.f32 %v5154, %v5314
      %v5316 = vpop.f32.mrb[0].mxu0
      %v5317 = vpop.f32.mrb[0].mxu0
      %v5318 = vadd.f32 %v5157, %v5317
      %v5319 = vpop.f32.mrb[0].mxu0
      %5320 = vmatprep.mubr.bf16.mxu0 %v2547
      %5321 = vmatmul.mubr.bf16.gmra.mrb[0].mxu0 %v2546
      %v5322 = vpop.f32.mrb[0].mxu0
      %v5323 = vadd.f32 %v5162, %v5322
      %v5324 = vpop.f32.mrb[0].mxu0
      %v5325 = vpop.f32.mrb[0].mxu0
      %v5326 = vadd.f32 %v5165, %v5325
      %v5327 = vpop.f32.mrb[0].mxu0
      %5328 = vmatprep.mubr.bf16.mxu0 %v2572
      %5329 = vmatmul.mubr.bf16.gmra.mrb[0].mxu0 %v2571
      %v5330 = vpop.f32.mrb[0].mxu0
      %v5331 = vadd.f32 %v5170, %v5330
      %v5332 = vpop.f32.mrb[0].mxu0
      %v5333 = vpop.f32.mrb[0].mxu0
      %v5334 = vadd.f32 %v5173, %v5333
      %v5335 = vpop.f32.mrb[0].mxu0
      %5336 = vmatprep.mubr.bf16.mxu0 %v2597
      %5337 = vmatmul.mubr.bf16.gmra.mrb[0].mxu0 %v2596
      %v5338 = vpop.f32.mrb[0].mxu0
      %v5339 = vadd.f32 %v5178, %v5338
      %v5340 = vpop.f32.mrb[0].mxu0
      %v5341 = vpop.f32.mrb[0].mxu0
      %v5342 = vadd.f32 %v5181, %v5341
      %v5343 = vpop.f32.mrb[0].mxu0
      %5344 = vdwg.mxu0
      %5345 = vmatprep.subr.bf16.mxu0 0
      %5346 = vmatpush1.bf16.msra.mxu0 %v3889
      %5347 = vmatprep.subr.bf16.mxu0 0
      %5348 = vmatpush1.bf16.msra.mxu0 %v3890
      %5349 = vmatprep.subr.bf16.mxu0 0
      %5350 = vmatpush1.bf16.msra.mxu0 %v3891
      %5351 = vmatprep.subr.bf16.mxu0 0
      %5352 = vmatpush1.bf16.msra.mxu0 %v3892
      %5353 = vmatprep.subr.bf16.mxu0 0
      %5354 = vmatpush1.bf16.msra.mxu0 %v3893
      %5355 = vmatprep.subr.bf16.mxu0 0
      %5356 = vmatpush1.bf16.msra.mxu0 %v3894
      %5357 = vmatprep.subr.bf16.mxu0 0
      %5358 = vmatpush1.bf16.msra.mxu0 %v3895
      %5359 = vmatprep.subr.bf16.mxu0 0
      %5360 = vmatpush1.bf16.msra.mxu0 %v3896
      %5361 = vmatprep.subr.bf16.mxu0 0
      %5362 = vmatpush1.bf16.msra.mxu0 %v3897
      %5363 = vmatprep.subr.bf16.mxu0 0
      %5364 = vmatpush1.bf16.msra.mxu0 %v3898
      %5365 = vmatprep.subr.bf16.mxu0 0
      %5366 = vmatpush1.bf16.msra.mxu0 %v3899
      %5367 = vmatprep.subr.bf16.mxu0 0
      %5368 = vmatpush1.bf16.msra.mxu0 %v3900
      %5369 = vmatprep.subr.bf16.mxu0 0
      %5370 = vmatpush1.bf16.msra.mxu0 %v3901
      %5371 = vmatprep.subr.bf16.mxu0 0
      %5372 = vmatpush1.bf16.msra.mxu0 %v3902
      %5373 = vmatprep.subr.bf16.mxu0 0
      %5374 = vmatpush1.bf16.msra.mxu0 %v3903
      %5375 = vmatprep.subr.bf16.mxu0 0
      %5376 = vmatpush1.bf16.msra.mxu0 %v3904
      %5377 = vmatprep.mubr.bf16.mxu0 %v2224
      %5378 = vmatmul.mubr.bf16.gmra.mrb[0].mxu0 %v2223
      %v5379 = vpop.f32.mrb[0].mxu0
      %v5380 = vadd.f32 %v5219, %v5379
      %v5381 = vpop.f32.mrb[0].mxu0
      %v5382 = vpop.f32.mrb[0].mxu0
      %v5383 = vadd.f32 %v5222, %v5382
      %v5384 = vpop.f32.mrb[0].mxu0
      %5385 = vmatprep.mubr.bf16.mxu0 %v2249
      %5386 = vmatmul.mubr.bf16.gmra.mrb[0].mxu0 %v2248
      %v5387 = vpop.f32.mrb[0].mxu0
      %v5388 = vadd.f32 %v5227, %v5387
      %v5389 = vpop.f32.mrb[0].mxu0
      %v5390 = vpop.f32.mrb[0].mxu0
      %v5391 = vadd.f32 %v5230, %v5390
      %v5392 = vpop.f32.mrb[0].mxu0
      %5393 = vmatprep.mubr.bf16.mxu0 %v2274
      %5394 = vmatmul.mubr.bf16.gmra.mrb[0].mxu0 %v2273
      %v5395 = vpop.f32.mrb[0].mxu0
      %v5396 = vadd.f32 %v5235, %v5395
      %v5397 = vpop.f32.mrb[0].mxu0
      %v5398 = vpop.f32.mrb[0].mxu0
      %v5399 = vadd.f32 %v5238, %v5398
      %v5400 = vpop.f32.mrb[0].mxu0
      %5401 = vmatprep.mubr.bf16.mxu0 %v2299
      %5402 = vmatmul.mubr.bf16.gmra.mrb[0].mxu0 %v2298
      %v5403 = vpop.f32.mrb[0].mxu0
      %v5404 = vadd.f32 %v5243, %v5403
      %v5405 = vpop.f32.mrb[0].mxu0
      %v5406 = vpop.f32.mrb[0].mxu0
      %v5407 = vadd.f32 %v5246, %v5406
      %v5408 = vpop.f32.mrb[0].mxu0
      %5409 = vmatprep.mubr.bf16.mxu0 %v2324
      %5410 = vmatmul.mubr.bf16.gmra.mrb[0].mxu0 %v2323
      %v5411 = vpop.f32.mrb[0].mxu0
      %v5412 = vadd.f32 %v5251, %v5411
      %v5413 = vpop.f32.mrb[0].mxu0
      %v5414 = vpop.f32.mrb[0].mxu0
      %v5415 = vadd.f32 %v5254, %v5414
      %v5416 = vpop.f32.mrb[0].mxu0
      %5417 = vmatprep.mubr.bf16.mxu0 %v2349
      %5418 = vmatmul.mubr.bf16.gmra.mrb[0].mxu0 %v2348
      %v5419 = vpop.f32.mrb[0].mxu0
      %v5420 = vadd.f32 %v5259, %v5419
      %v5421 = vpop.f32.mrb[0].mxu0
      %v5422 = vpop.f32.mrb[0].mxu0
      %v5423 = vadd.f32 %v5262, %v5422
      %v5424 = vpop.f32.mrb[0].mxu0
      %5425 = vmatprep.mubr.bf16.mxu0 %v2374
      %5426 = vmatmul.mubr.bf16.gmra.mrb[0].mxu0 %v2373
      %v5427 = vpop.f32.mrb[0].mxu0
      %v5428 = vadd.f32 %v5267, %v5427
      %v5429 = vpop.f32.mrb[0].mxu0
      %v5430 = vpop.f32.mrb[0].mxu0
      %v5431 = vadd.f32 %v5270, %v5430
      %v5432 = vpop.f32.mrb[0].mxu0
      %5433 = vmatprep.mubr.bf16.mxu0 %v2399
      %5434 = vmatmul.mubr.bf16.gmra.mrb[0].mxu0 %v2398
      %v5435 = vpop.f32.mrb[0].mxu0
      %v5436 = vadd.f32 %v5275, %v5435
      %v5437 = vpop.f32.mrb[0].mxu0
      %v5438 = vpop.f32.mrb[0].mxu0
      %v5439 = vadd.f32 %v5278, %v5438
      %v5440 = vpop.f32.mrb[0].mxu0
      %5441 = vmatprep.mubr.bf16.mxu0 %v2424
      %5442 = vmatmul.mubr.bf16.gmra.mrb[0].mxu0 %v2423
      %v5443 = vpop.f32.mrb[0].mxu0
      %v5444 = vadd.f32 %v5283, %v5443
      %v5445 = vpop.f32.mrb[0].mxu0
      %v5446 = vpop.f32.mrb[0].mxu0
      %v5447 = vadd.f32 %v5286, %v5446
      %v5448 = vpop.f32.mrb[0].mxu0
      %5449 = vmatprep.mubr.bf16.mxu0 %v2449
      %5450 = vmatmul.mubr.bf16.gmra.mrb[0].mxu0 %v2448
      %v5451 = vpop.f32.mrb[0].mxu0
      %v5452 = vadd.f32 %v5291, %v5451
      %v5453 = vpop.f32.mrb[0].mxu0
      %v5454 = vpop.f32.mrb[0].mxu0
      %v5455 = vadd.f32 %v5294, %v5454
      %v5456 = vpop.f32.mrb[0].mxu0
      %5457 = vmatprep.mubr.bf16.mxu0 %v2474
      %5458 = vmatmul.mubr.bf16.gmra.mrb[0].mxu0 %v2473
      %v5459 = vpop.f32.mrb[0].mxu0
      %v5460 = vadd.f32 %v5299, %v5459
      %v5461 = vpop.f32.mrb[0].mxu0
      %v5462 = vpop.f32.mrb[0].mxu0
      %v5463 = vadd.f32 %v5302, %v5462
      %v5464 = vpop.f32.mrb[0].mxu0
      %5465 = vmatprep.mubr.bf16.mxu0 %v2499
      %5466 = vmatmul.mubr.bf16.gmra.mrb[0].mxu0 %v2498
      %v5467 = vpop.f32.mrb[0].mxu0
      %v5468 = vadd.f32 %v5307, %v5467
      %v5469 = vpop.f32.mrb[0].mxu0
      %v5470 = vpop.f32.mrb[0].mxu0
      %v5471 = vadd.f32 %v5310, %v5470
      %v5472 = vpop.f32.mrb[0].mxu0
      %5473 = vmatprep.mubr.bf16.mxu0 %v2524
      %5474 = vmatmul.mubr.bf16.gmra.mrb[0].mxu0 %v2523
      %v5475 = vpop.f32.mrb[0].mxu0
      %v5476 = vadd.f32 %v5315, %v5475
      %v5477 = vpop.f32.mrb[0].mxu0
      %v5478 = vpop.f32.mrb[0].mxu0
      %v5479 = vadd.f32 %v5318, %v5478
      %v5480 = vpop.f32.mrb[0].mxu0
      %5481 = vmatprep.mubr.bf16.mxu0 %v2549
      %5482 = vmatmul.mubr.bf16.gmra.mrb[0].mxu0 %v2548
      %v5483 = vpop.f32.mrb[0].mxu0
      %v5484 = vadd.f32 %v5323, %v5483
      %v5485 = vpop.f32.mrb[0].mxu0
      %v5486 = vpop.f32.mrb[0].mxu0
      %v5487 = vadd.f32 %v5326, %v5486
      %v5488 = vpop.f32.mrb[0].mxu0
      %5489 = vmatprep.mubr.bf16.mxu0 %v2574
      %5490 = vmatmul.mubr.bf16.gmra.mrb[0].mxu0 %v2573
      %v5491 = vpop.f32.mrb[0].mxu0
      %v5492 = vadd.f32 %v5331, %v5491
      %v5493 = vpop.f32.mrb[0].mxu0
      %v5494 = vpop.f32.mrb[0].mxu0
      %v5495 = vadd.f32 %v5334, %v5494
      %v5496 = vpop.f32.mrb[0].mxu0
      %5497 = vmatprep.mubr.bf16.mxu0 %v2599
      %5498 = vmatmul.mubr.bf16.gmra.mrb[0].mxu0 %v2598
      %v5499 = vpop.f32.mrb[0].mxu0
      %v5500 = vadd.f32 %v5339, %v5499
      %v5501 = vpop.f32.mrb[0].mxu0
      %v5502 = vpop.f32.mrb[0].mxu0
      %v5503 = vadd.f32 %v5342, %v5502
      %v5504 = vpop.f32.mrb[0].mxu0
      %5505 = vdwg.mxu0
      %5506 = vmatprep.subr.bf16.mxu0 0
      %5507 = vmatpush1.bf16.msra.mxu0 %v3905
      %5508 = vmatprep.subr.bf16.mxu0 0
      %5509 = vmatpush1.bf16.msra.mxu0 %v3906
      %5510 = vmatprep.subr.bf16.mxu0 0
      %5511 = vmatpush1.bf16.msra.mxu0 %v3907
      %5512 = vmatprep.subr.bf16.mxu0 0
      %5513 = vmatpush1.bf16.msra.mxu0 %v3908
      %5514 = vmatprep.subr.bf16.mxu0 0
      %5515 = vmatpush1.bf16.msra.mxu0 %v3909
      %5516 = vmatprep.subr.bf16.mxu0 0
      %5517 = vmatpush1.bf16.msra.mxu0 %v3910
      %5518 = vmatprep.subr.bf16.mxu0 0
      %5519 = vmatpush1.bf16.msra.mxu0 %v3911
      %5520 = vmatprep.subr.bf16.mxu0 0
      %5521 = vmatpush1.bf16.msra.mxu0 %v3912
      %5522 = vmatprep.subr.bf16.mxu0 0
      %5523 = vmatpush1.bf16.msra.mxu0 %v3913
      %5524 = vmatprep.subr.bf16.mxu0 0
      %5525 = vmatpush1.bf16.msra.mxu0 %v3914
      %5526 = vmatprep.subr.bf16.mxu0 0
      %5527 = vmatpush1.bf16.msra.mxu0 %v3915
      %5528 = vmatprep.subr.bf16.mxu0 0
      %5529 = vmatpush1.bf16.msra.mxu0 %v3916
      %5530 = vmatprep.subr.bf16.mxu0 0
      %5531 = vmatpush1.bf16.msra.mxu0 %v3917
      %5532 = vmatprep.subr.bf16.mxu0 0
      %5533 = vmatpush1.bf16.msra.mxu0 %v3918
      %5534 = vmatprep.subr.bf16.mxu0 0
      %5535 = vmatpush1.bf16.msra.mxu0 %v3919
      %5536 = vmatprep.subr.bf16.mxu0 0
      %5537 = vmatpush1.bf16.msra.mxu0 %v3920
      %5538 = vmatprep.mubr.bf16.mxu0 %v2226
      %5539 = vmatmul.mubr.bf16.gmra.mrb[0].mxu0 %v2225
      %v5540 = vpop.f32.mrb[0].mxu0
      %v5541 = vadd.f32 %v5380, %v5540
      %v5542 = vpop.f32.mrb[0].mxu0
      %v5543 = vpop.f32.mrb[0].mxu0
      %v5544 = vadd.f32 %v5383, %v5543
      %v5545 = vpop.f32.mrb[0].mxu0
      %5546 = vmatprep.mubr.bf16.mxu0 %v2251
      %5547 = vmatmul.mubr.bf16.gmra.mrb[0].mxu0 %v2250
      %v5548 = vpop.f32.mrb[0].mxu0
      %v5549 = vadd.f32 %v5388, %v5548
      %v5550 = vpop.f32.mrb[0].mxu0
      %v5551 = vpop.f32.mrb[0].mxu0
      %v5552 = vadd.f32 %v5391, %v5551
      %v5553 = vpop.f32.mrb[0].mxu0
      %5554 = vmatprep.mubr.bf16.mxu0 %v2276
      %5555 = vmatmul.mubr.bf16.gmra.mrb[0].mxu0 %v2275
      %v5556 = vpop.f32.mrb[0].mxu0
      %v5557 = vadd.f32 %v5396, %v5556
      %v5558 = vpop.f32.mrb[0].mxu0
      %v5559 = vpop.f32.mrb[0].mxu0
      %v5560 = vadd.f32 %v5399, %v5559
      %v5561 = vpop.f32.mrb[0].mxu0
      %5562 = vmatprep.mubr.bf16.mxu0 %v2301
      %5563 = vmatmul.mubr.bf16.gmra.mrb[0].mxu0 %v2300
      %v5564 = vpop.f32.mrb[0].mxu0
      %v5565 = vadd.f32 %v5404, %v5564
      %v5566 = vpop.f32.mrb[0].mxu0
      %v5567 = vpop.f32.mrb[0].mxu0
      %v5568 = vadd.f32 %v5407, %v5567
      %v5569 = vpop.f32.mrb[0].mxu0
      %5570 = vmatprep.mubr.bf16.mxu0 %v2326
      %5571 = vmatmul.mubr.bf16.gmra.mrb[0].mxu0 %v2325
      %v5572 = vpop.f32.mrb[0].mxu0
      %v5573 = vadd.f32 %v5412, %v5572
      %v5574 = vpop.f32.mrb[0].mxu0
      %v5575 = vpop.f32.mrb[0].mxu0
      %v5576 = vadd.f32 %v5415, %v5575
      %v5577 = vpop.f32.mrb[0].mxu0
      %5578 = vmatprep.mubr.bf16.mxu0 %v2351
      %5579 = vmatmul.mubr.bf16.gmra.mrb[0].mxu0 %v2350
      %v5580 = vpop.f32.mrb[0].mxu0
      %v5581 = vadd.f32 %v5420, %v5580
      %v5582 = vpop.f32.mrb[0].mxu0
      %v5583 = vpop.f32.mrb[0].mxu0
      %v5584 = vadd.f32 %v5423, %v5583
      %v5585 = vpop.f32.mrb[0].mxu0
      %5586 = vmatprep.mubr.bf16.mxu0 %v2376
      %5587 = vmatmul.mubr.bf16.gmra.mrb[0].mxu0 %v2375
      %v5588 = vpop.f32.mrb[0].mxu0
      %v5589 = vadd.f32 %v5428, %v5588
      %v5590 = vpop.f32.mrb[0].mxu0
      %v5591 = vpop.f32.mrb[0].mxu0
      %v5592 = vadd.f32 %v5431, %v5591
      %v5593 = vpop.f32.mrb[0].mxu0
      %5594 = vmatprep.mubr.bf16.mxu0 %v2401
      %5595 = vmatmul.mubr.bf16.gmra.mrb[0].mxu0 %v2400
      %v5596 = vpop.f32.mrb[0].mxu0
      %v5597 = vadd.f32 %v5436, %v5596
      %v5598 = vpop.f32.mrb[0].mxu0
      %v5599 = vpop.f32.mrb[0].mxu0
      %v5600 = vadd.f32 %v5439, %v5599
      %v5601 = vpop.f32.mrb[0].mxu0
      %5602 = vmatprep.mubr.bf16.mxu0 %v2426
      %5603 = vmatmul.mubr.bf16.gmra.mrb[0].mxu0 %v2425
      %v5604 = vpop.f32.mrb[0].mxu0
      %v5605 = vadd.f32 %v5444, %v5604
      %v5606 = vpop.f32.mrb[0].mxu0
      %v5607 = vpop.f32.mrb[0].mxu0
      %v5608 = vadd.f32 %v5447, %v5607
      %v5609 = vpop.f32.mrb[0].mxu0
      %5610 = vmatprep.mubr.bf16.mxu0 %v2451
      %5611 = vmatmul.mubr.bf16.gmra.mrb[0].mxu0 %v2450
      %v5612 = vpop.f32.mrb[0].mxu0
      %v5613 = vadd.f32 %v5452, %v5612
      %v5614 = vpop.f32.mrb[0].mxu0
      %v5615 = vpop.f32.mrb[0].mxu0
      %v5616 = vadd.f32 %v5455, %v5615
      %v5617 = vpop.f32.mrb[0].mxu0
      %5618 = vmatprep.mubr.bf16.mxu0 %v2476
      %5619 = vmatmul.mubr.bf16.gmra.mrb[0].mxu0 %v2475
      %v5620 = vpop.f32.mrb[0].mxu0
      %v5621 = vadd.f32 %v5460, %v5620
      %v5622 = vpop.f32.mrb[0].mxu0
      %v5623 = vpop.f32.mrb[0].mxu0
      %v5624 = vadd.f32 %v5463, %v5623
      %v5625 = vpop.f32.mrb[0].mxu0
      %5626 = vmatprep.mubr.bf16.mxu0 %v2501
      %5627 = vmatmul.mubr.bf16.gmra.mrb[0].mxu0 %v2500
      %v5628 = vpop.f32.mrb[0].mxu0
      %v5629 = vadd.f32 %v5468, %v5628
      %v5630 = vpop.f32.mrb[0].mxu0
      %v5631 = vpop.f32.mrb[0].mxu0
      %v5632 = vadd.f32 %v5471, %v5631
      %v5633 = vpop.f32.mrb[0].mxu0
      %5634 = vmatprep.mubr.bf16.mxu0 %v2526
      %5635 = vmatmul.mubr.bf16.gmra.mrb[0].mxu0 %v2525
      %v5636 = vpop.f32.mrb[0].mxu0
      %v5637 = vadd.f32 %v5476, %v5636
      %v5638 = vpop.f32.mrb[0].mxu0
      %v5639 = vpop.f32.mrb[0].mxu0
      %v5640 = vadd.f32 %v5479, %v5639
      %v5641 = vpop.f32.mrb[0].mxu0
      %5642 = vmatprep.mubr.bf16.mxu0 %v2551
      %5643 = vmatmul.mubr.bf16.gmra.mrb[0].mxu0 %v2550
      %v5644 = vpop.f32.mrb[0].mxu0
      %v5645 = vadd.f32 %v5484, %v5644
      %v5646 = vpop.f32.mrb[0].mxu0
      %v5647 = vpop.f32.mrb[0].mxu0
      %v5648 = vadd.f32 %v5487, %v5647
      %v5649 = vpop.f32.mrb[0].mxu0
      %5650 = vmatprep.mubr.bf16.mxu0 %v2576
      %5651 = vmatmul.mubr.bf16.gmra.mrb[0].mxu0 %v2575
      %v5652 = vpop.f32.mrb[0].mxu0
      %v5653 = vadd.f32 %v5492, %v5652
      %v5654 = vpop.f32.mrb[0].mxu0
      %v5655 = vpop.f32.mrb[0].mxu0
      %v5656 = vadd.f32 %v5495, %v5655
      %v5657 = vpop.f32.mrb[0].mxu0
      %5658 = vmatprep.mubr.bf16.mxu0 %v2601
      %5659 = vmatmul.mubr.bf16.gmra.mrb[0].mxu0 %v2600
      %v5660 = vpop.f32.mrb[0].mxu0
      %v5661 = vadd.f32 %v5500, %v5660
      %v5662 = vpop.f32.mrb[0].mxu0
      %v5663 = vpop.f32.mrb[0].mxu0
      %v5664 = vadd.f32 %v5503, %v5663
      %v5665 = vpop.f32.mrb[0].mxu0
      %5666 = vdwg.mxu0
      %5667 = vmatprep.subr.bf16.mxu0 0
      %5668 = vmatpush1.bf16.msra.mxu0 %v3921
      %5669 = vmatprep.subr.bf16.mxu0 0
      %5670 = vmatpush1.bf16.msra.mxu0 %v3922
      %5671 = vmatprep.subr.bf16.mxu0 0
      %5672 = vmatpush1.bf16.msra.mxu0 %v3923
      %5673 = vmatprep.subr.bf16.mxu0 0
      %5674 = vmatpush1.bf16.msra.mxu0 %v3924
      %5675 = vmatprep.subr.bf16.mxu0 0
      %5676 = vmatpush1.bf16.msra.mxu0 %v3925
      %5677 = vmatprep.subr.bf16.mxu0 0
      %5678 = vmatpush1.bf16.msra.mxu0 %v3926
      %5679 = vmatprep.subr.bf16.mxu0 0
      %5680 = vmatpush1.bf16.msra.mxu0 %v3927
      %5681 = vmatprep.subr.bf16.mxu0 0
      %5682 = vmatpush1.bf16.msra.mxu0 %v3928
      %5683 = vmatprep.subr.bf16.mxu0 0
      %5684 = vmatpush1.bf16.msra.mxu0 %v3929
      %5685 = vmatprep.subr.bf16.mxu0 0
      %5686 = vmatpush1.bf16.msra.mxu0 %v3930
      %5687 = vmatprep.subr.bf16.mxu0 0
      %5688 = vmatpush1.bf16.msra.mxu0 %v3931
      %5689 = vmatprep.subr.bf16.mxu0 0
      %5690 = vmatpush1.bf16.msra.mxu0 %v3932
      %5691 = vmatprep.subr.bf16.mxu0 0
      %5692 = vmatpush1.bf16.msra.mxu0 %v3933
      %5693 = vmatprep.subr.bf16.mxu0 0
      %5694 = vmatpush1.bf16.msra.mxu0 %v3934
      %5695 = vmatprep.subr.bf16.mxu0 0
      %5696 = vmatpush1.bf16.msra.mxu0 %v3935
      %5697 = vmatprep.subr.bf16.mxu0 0
      %5698 = vmatpush1.bf16.msra.mxu0 %v3936
      %5699 = vmatprep.mubr.bf16.mxu0 %v2228
      %5700 = vmatmul.mubr.bf16.gmra.mrb[0].mxu0 %v2227
      %v5701 = vpop.f32.mrb[0].mxu0
      %v5702 = vadd.f32 %v5541, %v5701
      %v5703 = vpop.f32.mrb[0].mxu0
      %v5704 = vpop.f32.mrb[0].mxu0
      %v5705 = vadd.f32 %v5544, %v5704
      %v5706 = vpop.f32.mrb[0].mxu0
      %5707 = vmatprep.mubr.bf16.mxu0 %v2253
      %5708 = vmatmul.mubr.bf16.gmra.mrb[0].mxu0 %v2252
      %v5709 = vpop.f32.mrb[0].mxu0
      %v5710 = vadd.f32 %v5549, %v5709
      %v5711 = vpop.f32.mrb[0].mxu0
      %v5712 = vpop.f32.mrb[0].mxu0
      %v5713 = vadd.f32 %v5552, %v5712
      %v5714 = vpop.f32.mrb[0].mxu0
      %5715 = vmatprep.mubr.bf16.mxu0 %v2278
      %5716 = vmatmul.mubr.bf16.gmra.mrb[0].mxu0 %v2277
      %v5717 = vpop.f32.mrb[0].mxu0
      %v5718 = vadd.f32 %v5557, %v5717
      %v5719 = vpop.f32.mrb[0].mxu0
      %v5720 = vpop.f32.mrb[0].mxu0
      %v5721 = vadd.f32 %v5560, %v5720
      %v5722 = vpop.f32.mrb[0].mxu0
      %5723 = vmatprep.mubr.bf16.mxu0 %v2303
      %5724 = vmatmul.mubr.bf16.gmra.mrb[0].mxu0 %v2302
      %v5725 = vpop.f32.mrb[0].mxu0
      %v5726 = vadd.f32 %v5565, %v5725
      %v5727 = vpop.f32.mrb[0].mxu0
      %v5728 = vpop.f32.mrb[0].mxu0
      %v5729 = vadd.f32 %v5568, %v5728
      %v5730 = vpop.f32.mrb[0].mxu0
      %5731 = vmatprep.mubr.bf16.mxu0 %v2328
      %5732 = vmatmul.mubr.bf16.gmra.mrb[0].mxu0 %v2327
      %v5733 = vpop.f32.mrb[0].mxu0
      %v5734 = vadd.f32 %v5573, %v5733
      %v5735 = vpop.f32.mrb[0].mxu0
      %v5736 = vpop.f32.mrb[0].mxu0
      %v5737 = vadd.f32 %v5576, %v5736
      %v5738 = vpop.f32.mrb[0].mxu0
      %5739 = vmatprep.mubr.bf16.mxu0 %v2353
      %5740 = vmatmul.mubr.bf16.gmra.mrb[0].mxu0 %v2352
      %v5741 = vpop.f32.mrb[0].mxu0
      %v5742 = vadd.f32 %v5581, %v5741
      %v5743 = vpop.f32.mrb[0].mxu0
      %v5744 = vpop.f32.mrb[0].mxu0
      %v5745 = vadd.f32 %v5584, %v5744
      %v5746 = vpop.f32.mrb[0].mxu0
      %5747 = vmatprep.mubr.bf16.mxu0 %v2378
      %5748 = vmatmul.mubr.bf16.gmra.mrb[0].mxu0 %v2377
      %v5749 = vpop.f32.mrb[0].mxu0
      %v5750 = vadd.f32 %v5589, %v5749
      %v5751 = vpop.f32.mrb[0].mxu0
      %v5752 = vpop.f32.mrb[0].mxu0
      %v5753 = vadd.f32 %v5592, %v5752
      %v5754 = vpop.f32.mrb[0].mxu0
      %5755 = vmatprep.mubr.bf16.mxu0 %v2403
      %5756 = vmatmul.mubr.bf16.gmra.mrb[0].mxu0 %v2402
      %v5757 = vpop.f32.mrb[0].mxu0
      %v5758 = vadd.f32 %v5597, %v5757
      %v5759 = vpop.f32.mrb[0].mxu0
      %v5760 = vpop.f32.mrb[0].mxu0
      %v5761 = vadd.f32 %v5600, %v5760
      %v5762 = vpop.f32.mrb[0].mxu0
      %5763 = vmatprep.mubr.bf16.mxu0 %v2428
      %5764 = vmatmul.mubr.bf16.gmra.mrb[0].mxu0 %v2427
      %v5765 = vpop.f32.mrb[0].mxu0
      %v5766 = vadd.f32 %v5605, %v5765
      %v5767 = vpop.f32.mrb[0].mxu0
      %v5768 = vpop.f32.mrb[0].mxu0
      %v5769 = vadd.f32 %v5608, %v5768
      %v5770 = vpop.f32.mrb[0].mxu0
      %5771 = vmatprep.mubr.bf16.mxu0 %v2453
      %5772 = vmatmul.mubr.bf16.gmra.mrb[0].mxu0 %v2452
      %v5773 = vpop.f32.mrb[0].mxu0
      %v5774 = vadd.f32 %v5613, %v5773
      %v5775 = vpop.f32.mrb[0].mxu0
      %v5776 = vpop.f32.mrb[0].mxu0
      %v5777 = vadd.f32 %v5616, %v5776
      %v5778 = vpop.f32.mrb[0].mxu0
      %5779 = vmatprep.mubr.bf16.mxu0 %v2478
      %5780 = vmatmul.mubr.bf16.gmra.mrb[0].mxu0 %v2477
      %v5781 = vpop.f32.mrb[0].mxu0
      %v5782 = vadd.f32 %v5621, %v5781
      %v5783 = vpop.f32.mrb[0].mxu0
      %v5784 = vpop.f32.mrb[0].mxu0
      %v5785 = vadd.f32 %v5624, %v5784
      %v5786 = vpop.f32.mrb[0].mxu0
      %5787 = vmatprep.mubr.bf16.mxu0 %v2503
      %5788 = vmatmul.mubr.bf16.gmra.mrb[0].mxu0 %v2502
      %v5789 = vpop.f32.mrb[0].mxu0
      %v5790 = vadd.f32 %v5629, %v5789
      %v5791 = vpop.f32.mrb[0].mxu0
      %v5792 = vpop.f32.mrb[0].mxu0
      %v5793 = vadd.f32 %v5632, %v5792
      %v5794 = vpop.f32.mrb[0].mxu0
      %5795 = vmatprep.mubr.bf16.mxu0 %v2528
      %5796 = vmatmul.mubr.bf16.gmra.mrb[0].mxu0 %v2527
      %v5797 = vpop.f32.mrb[0].mxu0
      %v5798 = vadd.f32 %v5637, %v5797
      %v5799 = vpop.f32.mrb[0].mxu0
      %v5800 = vpop.f32.mrb[0].mxu0
      %v5801 = vadd.f32 %v5640, %v5800
      %v5802 = vpop.f32.mrb[0].mxu0
      %5803 = vmatprep.mubr.bf16.mxu0 %v2553
      %5804 = vmatmul.mubr.bf16.gmra.mrb[0].mxu0 %v2552
      %v5805 = vpop.f32.mrb[0].mxu0
      %v5806 = vadd.f32 %v5645, %v5805
      %v5807 = vpop.f32.mrb[0].mxu0
      %v5808 = vpop.f32.mrb[0].mxu0
      %v5809 = vadd.f32 %v5648, %v5808
      %v5810 = vpop.f32.mrb[0].mxu0
      %5811 = vmatprep.mubr.bf16.mxu0 %v2578
      %5812 = vmatmul.mubr.bf16.gmra.mrb[0].mxu0 %v2577
      %v5813 = vpop.f32.mrb[0].mxu0
      %v5814 = vadd.f32 %v5653, %v5813
      %v5815 = vpop.f32.mrb[0].mxu0
      %v5816 = vpop.f32.mrb[0].mxu0
      %v5817 = vadd.f32 %v5656, %v5816
      %v5818 = vpop.f32.mrb[0].mxu0
      %5819 = vmatprep.mubr.bf16.mxu0 %v2603
      %5820 = vmatmul.mubr.bf16.gmra.mrb[0].mxu0 %v2602
      %v5821 = vpop.f32.mrb[0].mxu0
      %v5822 = vadd.f32 %v5661, %v5821
      %v5823 = vpop.f32.mrb[0].mxu0
      %v5824 = vpop.f32.mrb[0].mxu0
      %v5825 = vadd.f32 %v5664, %v5824
      %v5826 = vpop.f32.mrb[0].mxu0
      %5827 = vdwg.mxu0
      %5828 = vmatprep.subr.bf16.mxu0 0
      %5829 = vmatpush1.bf16.msra.mxu0 %v3937
      %5830 = vmatprep.subr.bf16.mxu0 0
      %5831 = vmatpush1.bf16.msra.mxu0 %v3938
      %5832 = vmatprep.subr.bf16.mxu0 0
      %5833 = vmatpush1.bf16.msra.mxu0 %v3939
      %5834 = vmatprep.subr.bf16.mxu0 0
      %5835 = vmatpush1.bf16.msra.mxu0 %v3940
      %5836 = vmatprep.subr.bf16.mxu0 0
      %5837 = vmatpush1.bf16.msra.mxu0 %v3941
      %5838 = vmatprep.subr.bf16.mxu0 0
      %5839 = vmatpush1.bf16.msra.mxu0 %v3942
      %5840 = vmatprep.subr.bf16.mxu0 0
      %5841 = vmatpush1.bf16.msra.mxu0 %v3943
      %5842 = vmatprep.subr.bf16.mxu0 0
      %5843 = vmatpush1.bf16.msra.mxu0 %v3944
      %5844 = vmatprep.subr.bf16.mxu0 0
      %5845 = vmatpush1.bf16.msra.mxu0 %v3945
      %5846 = vmatprep.subr.bf16.mxu0 0
      %5847 = vmatpush1.bf16.msra.mxu0 %v3946
      %5848 = vmatprep.subr.bf16.mxu0 0
      %5849 = vmatpush1.bf16.msra.mxu0 %v3947
      %5850 = vmatprep.subr.bf16.mxu0 0
      %5851 = vmatpush1.bf16.msra.mxu0 %v3948
      %5852 = vmatprep.subr.bf16.mxu0 0
      %5853 = vmatpush1.bf16.msra.mxu0 %v3949
      %5854 = vmatprep.subr.bf16.mxu0 0
      %5855 = vmatpush1.bf16.msra.mxu0 %v3950
      %5856 = vmatprep.subr.bf16.mxu0 0
      %5857 = vmatpush1.bf16.msra.mxu0 %v3951
      %5858 = vmatprep.subr.bf16.mxu0 0
      %5859 = vmatpush1.bf16.msra.mxu0 %v3952
      %5860 = vmatprep.mubr.bf16.mxu0 %v2230
      %5861 = vmatmul.mubr.bf16.gmra.mrb[0].mxu0 %v2229
      %v5862 = vpop.f32.mrb[0].mxu0
      %v5863 = vadd.f32 %v5702, %v5862
      %v5864 = vpop.f32.mrb[0].mxu0
      %v5865 = vpop.f32.mrb[0].mxu0
      %v5866 = vadd.f32 %v5705, %v5865
      %v5867 = vpop.f32.mrb[0].mxu0
      %5868 = vmatprep.mubr.bf16.mxu0 %v2255
      %5869 = vmatmul.mubr.bf16.gmra.mrb[0].mxu0 %v2254
      %v5870 = vpop.f32.mrb[0].mxu0
      %v5871 = vadd.f32 %v5710, %v5870
      %v5872 = vpop.f32.mrb[0].mxu0
      %v5873 = vpop.f32.mrb[0].mxu0
      %v5874 = vadd.f32 %v5713, %v5873
      %v5875 = vpop.f32.mrb[0].mxu0
      %5876 = vmatprep.mubr.bf16.mxu0 %v2280
      %5877 = vmatmul.mubr.bf16.gmra.mrb[0].mxu0 %v2279
      %v5878 = vpop.f32.mrb[0].mxu0
      %v5879 = vadd.f32 %v5718, %v5878
      %v5880 = vpop.f32.mrb[0].mxu0
      %v5881 = vpop.f32.mrb[0].mxu0
      %v5882 = vadd.f32 %v5721, %v5881
      %v5883 = vpop.f32.mrb[0].mxu0
      %5884 = vmatprep.mubr.bf16.mxu0 %v2305
      %5885 = vmatmul.mubr.bf16.gmra.mrb[0].mxu0 %v2304
      %v5886 = vpop.f32.mrb[0].mxu0
      %v5887 = vadd.f32 %v5726, %v5886
      %v5888 = vpop.f32.mrb[0].mxu0
      %v5889 = vpop.f32.mrb[0].mxu0
      %v5890 = vadd.f32 %v5729, %v5889
      %v5891 = vpop.f32.mrb[0].mxu0
      %5892 = vmatprep.mubr.bf16.mxu0 %v2330
      %5893 = vmatmul.mubr.bf16.gmra.mrb[0].mxu0 %v2329
      %v5894 = vpop.f32.mrb[0].mxu0
      %v5895 = vadd.f32 %v5734, %v5894
      %v5896 = vpop.f32.mrb[0].mxu0
      %v5897 = vpop.f32.mrb[0].mxu0
      %v5898 = vadd.f32 %v5737, %v5897
      %v5899 = vpop.f32.mrb[0].mxu0
      %5900 = vmatprep.mubr.bf16.mxu0 %v2355
      %5901 = vmatmul.mubr.bf16.gmra.mrb[0].mxu0 %v2354
      %v5902 = vpop.f32.mrb[0].mxu0
      %v5903 = vadd.f32 %v5742, %v5902
      %v5904 = vpop.f32.mrb[0].mxu0
      %v5905 = vpop.f32.mrb[0].mxu0
      %v5906 = vadd.f32 %v5745, %v5905
      %v5907 = vpop.f32.mrb[0].mxu0
      %5908 = vmatprep.mubr.bf16.mxu0 %v2380
      %5909 = vmatmul.mubr.bf16.gmra.mrb[0].mxu0 %v2379
      %v5910 = vpop.f32.mrb[0].mxu0
      %v5911 = vadd.f32 %v5750, %v5910
      %v5912 = vpop.f32.mrb[0].mxu0
      %v5913 = vpop.f32.mrb[0].mxu0
      %v5914 = vadd.f32 %v5753, %v5913
      %v5915 = vpop.f32.mrb[0].mxu0
      %5916 = vmatprep.mubr.bf16.mxu0 %v2405
      %5917 = vmatmul.mubr.bf16.gmra.mrb[0].mxu0 %v2404
      %v5918 = vpop.f32.mrb[0].mxu0
      %v5919 = vadd.f32 %v5758, %v5918
      %v5920 = vpop.f32.mrb[0].mxu0
      %v5921 = vpop.f32.mrb[0].mxu0
      %v5922 = vadd.f32 %v5761, %v5921
      %v5923 = vpop.f32.mrb[0].mxu0
      %5924 = vmatprep.mubr.bf16.mxu0 %v2430
      %5925 = vmatmul.mubr.bf16.gmra.mrb[0].mxu0 %v2429
      %v5926 = vpop.f32.mrb[0].mxu0
      %v5927 = vadd.f32 %v5766, %v5926
      %v5928 = vpop.f32.mrb[0].mxu0
      %v5929 = vpop.f32.mrb[0].mxu0
      %v5930 = vadd.f32 %v5769, %v5929
      %v5931 = vpop.f32.mrb[0].mxu0
      %5932 = vmatprep.mubr.bf16.mxu0 %v2455
      %5933 = vmatmul.mubr.bf16.gmra.mrb[0].mxu0 %v2454
      %v5934 = vpop.f32.mrb[0].mxu0
      %v5935 = vadd.f32 %v5774, %v5934
      %v5936 = vpop.f32.mrb[0].mxu0
      %v5937 = vpop.f32.mrb[0].mxu0
      %v5938 = vadd.f32 %v5777, %v5937
      %v5939 = vpop.f32.mrb[0].mxu0
      %5940 = vmatprep.mubr.bf16.mxu0 %v2480
      %5941 = vmatmul.mubr.bf16.gmra.mrb[0].mxu0 %v2479
      %v5942 = vpop.f32.mrb[0].mxu0
      %v5943 = vadd.f32 %v5782, %v5942
      %v5944 = vpop.f32.mrb[0].mxu0
      %v5945 = vpop.f32.mrb[0].mxu0
      %v5946 = vadd.f32 %v5785, %v5945
      %v5947 = vpop.f32.mrb[0].mxu0
      %5948 = vmatprep.mubr.bf16.mxu0 %v2505
      %5949 = vmatmul.mubr.bf16.gmra.mrb[0].mxu0 %v2504
      %v5950 = vpop.f32.mrb[0].mxu0
      %v5951 = vadd.f32 %v5790, %v5950
      %v5952 = vpop.f32.mrb[0].mxu0
      %v5953 = vpop.f32.mrb[0].mxu0
      %v5954 = vadd.f32 %v5793, %v5953
      %v5955 = vpop.f32.mrb[0].mxu0
      %5956 = vmatprep.mubr.bf16.mxu0 %v2530
      %5957 = vmatmul.mubr.bf16.gmra.mrb[0].mxu0 %v2529
      %v5958 = vpop.f32.mrb[0].mxu0
      %v5959 = vadd.f32 %v5798, %v5958
      %v5960 = vpop.f32.mrb[0].mxu0
      %v5961 = vpop.f32.mrb[0].mxu0
      %v5962 = vadd.f32 %v5801, %v5961
      %v5963 = vpop.f32.mrb[0].mxu0
      %5964 = vmatprep.mubr.bf16.mxu0 %v2555
      %5965 = vmatmul.mubr.bf16.gmra.mrb[0].mxu0 %v2554
      %v5966 = vpop.f32.mrb[0].mxu0
      %v5967 = vadd.f32 %v5806, %v5966
      %v5968 = vpop.f32.mrb[0].mxu0
      %v5969 = vpop.f32.mrb[0].mxu0
      %v5970 = vadd.f32 %v5809, %v5969
      %v5971 = vpop.f32.mrb[0].mxu0
      %5972 = vmatprep.mubr.bf16.mxu0 %v2580
      %5973 = vmatmul.mubr.bf16.gmra.mrb[0].mxu0 %v2579
      %v5974 = vpop.f32.mrb[0].mxu0
      %v5975 = vadd.f32 %v5814, %v5974
      %v5976 = vpop.f32.mrb[0].mxu0
      %v5977 = vpop.f32.mrb[0].mxu0
      %v5978 = vadd.f32 %v5817, %v5977
      %v5979 = vpop.f32.mrb[0].mxu0
      %5980 = vmatprep.mubr.bf16.mxu0 %v2605
      %5981 = vmatmul.mubr.bf16.gmra.mrb[0].mxu0 %v2604
      %v5982 = vpop.f32.mrb[0].mxu0
      %v5983 = vadd.f32 %v5822, %v5982
      %v5984 = vpop.f32.mrb[0].mxu0
      %v5985 = vpop.f32.mrb[0].mxu0
      %v5986 = vadd.f32 %v5825, %v5985
      %v5987 = vpop.f32.mrb[0].mxu0
      %5988 = vdwg.mxu0
      %5989 = vmatprep.subr.bf16.mxu0 0
      %5990 = vmatpush1.bf16.msra.mxu0 %v3953
      %5991 = vmatprep.subr.bf16.mxu0 0
      %5992 = vmatpush1.bf16.msra.mxu0 %v3954
      %5993 = vmatprep.subr.bf16.mxu0 0
      %5994 = vmatpush1.bf16.msra.mxu0 %v3955
      %5995 = vmatprep.subr.bf16.mxu0 0
      %5996 = vmatpush1.bf16.msra.mxu0 %v3956
      %5997 = vmatprep.subr.bf16.mxu0 0
      %5998 = vmatpush1.bf16.msra.mxu0 %v3957
      %5999 = vmatprep.subr.bf16.mxu0 0
      %6000 = vmatpush1.bf16.msra.mxu0 %v3958
      %6001 = vmatprep.subr.bf16.mxu0 0
      %6002 = vmatpush1.bf16.msra.mxu0 %v3959
      %6003 = vmatprep.subr.bf16.mxu0 0
      %6004 = vmatpush1.bf16.msra.mxu0 %v3960
      %6005 = vmatprep.subr.bf16.mxu0 0
      %6006 = vmatpush1.bf16.msra.mxu0 %v3961
      %6007 = vmatprep.subr.bf16.mxu0 0
      %6008 = vmatpush1.bf16.msra.mxu0 %v3962
      %6009 = vmatprep.subr.bf16.mxu0 0
      %6010 = vmatpush1.bf16.msra.mxu0 %v3963
      %6011 = vmatprep.subr.bf16.mxu0 0
      %6012 = vmatpush1.bf16.msra.mxu0 %v3964
      %6013 = vmatprep.subr.bf16.mxu0 0
      %6014 = vmatpush1.bf16.msra.mxu0 %v3965
      %6015 = vmatprep.subr.bf16.mxu0 0
      %6016 = vmatpush1.bf16.msra.mxu0 %v3966
      %6017 = vmatprep.subr.bf16.mxu0 0
      %6018 = vmatpush1.bf16.msra.mxu0 %v3967
      %6019 = vmatprep.subr.bf16.mxu0 0
      %6020 = vmatpush1.bf16.msra.mxu0 %v3968
      %6021 = vmatprep.mubr.bf16.mxu0 %v2232
      %6022 = vmatmul.mubr.bf16.gmra.mrb[0].mxu0 %v2231
      %v6023 = vpop.f32.mrb[0].mxu0
      %v6024 = vadd.f32 %v5863, %v6023
      %v6025 = vpop.f32.mrb[0].mxu0
      %v6026 = vpop.f32.mrb[0].mxu0
      %v6027 = vadd.f32 %v5866, %v6026
      %v6028 = vpop.f32.mrb[0].mxu0
      %6029 = vmatprep.mubr.bf16.mxu0 %v2257
      %6030 = vmatmul.mubr.bf16.gmra.mrb[0].mxu0 %v2256
      %v6031 = vpop.f32.mrb[0].mxu0
      %v6032 = vadd.f32 %v5871, %v6031
      %v6033 = vpop.f32.mrb[0].mxu0
      %v6034 = vpop.f32.mrb[0].mxu0
      %v6035 = vadd.f32 %v5874, %v6034
      %v6036 = vpop.f32.mrb[0].mxu0
      %6037 = vmatprep.mubr.bf16.mxu0 %v2282
      %6038 = vmatmul.mubr.bf16.gmra.mrb[0].mxu0 %v2281
      %v6039 = vpop.f32.mrb[0].mxu0
      %v6040 = vadd.f32 %v5879, %v6039
      %v6041 = vpop.f32.mrb[0].mxu0
      %v6042 = vpop.f32.mrb[0].mxu0
      %v6043 = vadd.f32 %v5882, %v6042
      %v6044 = vpop.f32.mrb[0].mxu0
      %6045 = vmatprep.mubr.bf16.mxu0 %v2307
      %6046 = vmatmul.mubr.bf16.gmra.mrb[0].mxu0 %v2306
      %v6047 = vpop.f32.mrb[0].mxu0
      %v6048 = vadd.f32 %v5887, %v6047
      %v6049 = vpop.f32.mrb[0].mxu0
      %v6050 = vpop.f32.mrb[0].mxu0
      %v6051 = vadd.f32 %v5890, %v6050
      %v6052 = vpop.f32.mrb[0].mxu0
      %6053 = vmatprep.mubr.bf16.mxu0 %v2332
      %6054 = vmatmul.mubr.bf16.gmra.mrb[0].mxu0 %v2331
      %v6055 = vpop.f32.mrb[0].mxu0
      %v6056 = vadd.f32 %v5895, %v6055
      %v6057 = vpop.f32.mrb[0].mxu0
      %v6058 = vpop.f32.mrb[0].mxu0
      %v6059 = vadd.f32 %v5898, %v6058
      %v6060 = vpop.f32.mrb[0].mxu0
      %6061 = vmatprep.mubr.bf16.mxu0 %v2357
      %6062 = vmatmul.mubr.bf16.gmra.mrb[0].mxu0 %v2356
      %v6063 = vpop.f32.mrb[0].mxu0
      %v6064 = vadd.f32 %v5903, %v6063
      %v6065 = vpop.f32.mrb[0].mxu0
      %v6066 = vpop.f32.mrb[0].mxu0
      %v6067 = vadd.f32 %v5906, %v6066
      %v6068 = vpop.f32.mrb[0].mxu0
      %6069 = vmatprep.mubr.bf16.mxu0 %v2382
      %6070 = vmatmul.mubr.bf16.gmra.mrb[0].mxu0 %v2381
      %v6071 = vpop.f32.mrb[0].mxu0
      %v6072 = vadd.f32 %v5911, %v6071
      %v6073 = vpop.f32.mrb[0].mxu0
      %v6074 = vpop.f32.mrb[0].mxu0
      %v6075 = vadd.f32 %v5914, %v6074
      %v6076 = vpop.f32.mrb[0].mxu0
      %6077 = vmatprep.mubr.bf16.mxu0 %v2407
      %6078 = vmatmul.mubr.bf16.gmra.mrb[0].mxu0 %v2406
      %v6079 = vpop.f32.mrb[0].mxu0
      %v6080 = vadd.f32 %v5919, %v6079
      %v6081 = vpop.f32.mrb[0].mxu0
      %v6082 = vpop.f32.mrb[0].mxu0
      %v6083 = vadd.f32 %v5922, %v6082
      %v6084 = vpop.f32.mrb[0].mxu0
      %6085 = vmatprep.mubr.bf16.mxu0 %v2432
      %6086 = vmatmul.mubr.bf16.gmra.mrb[0].mxu0 %v2431
      %v6087 = vpop.f32.mrb[0].mxu0
      %v6088 = vadd.f32 %v5927, %v6087
      %v6089 = vpop.f32.mrb[0].mxu0
      %v6090 = vpop.f32.mrb[0].mxu0
      %v6091 = vadd.f32 %v5930, %v6090
      %v6092 = vpop.f32.mrb[0].mxu0
      %6093 = vmatprep.mubr.bf16.mxu0 %v2457
      %6094 = vmatmul.mubr.bf16.gmra.mrb[0].mxu0 %v2456
      %v6095 = vpop.f32.mrb[0].mxu0
      %v6096 = vadd.f32 %v5935, %v6095
      %v6097 = vpop.f32.mrb[0].mxu0
      %v6098 = vpop.f32.mrb[0].mxu0
      %v6099 = vadd.f32 %v5938, %v6098
      %v6100 = vpop.f32.mrb[0].mxu0
      %6101 = vmatprep.mubr.bf16.mxu0 %v2482
      %6102 = vmatmul.mubr.bf16.gmra.mrb[0].mxu0 %v2481
      %v6103 = vpop.f32.mrb[0].mxu0
      %v6104 = vadd.f32 %v5943, %v6103
      %v6105 = vpop.f32.mrb[0].mxu0
      %v6106 = vpop.f32.mrb[0].mxu0
      %v6107 = vadd.f32 %v5946, %v6106
      %v6108 = vpop.f32.mrb[0].mxu0
      %6109 = vmatprep.mubr.bf16.mxu0 %v2507
      %6110 = vmatmul.mubr.bf16.gmra.mrb[0].mxu0 %v2506
      %v6111 = vpop.f32.mrb[0].mxu0
      %v6112 = vadd.f32 %v5951, %v6111
      %v6113 = vpop.f32.mrb[0].mxu0
      %v6114 = vpop.f32.mrb[0].mxu0
      %v6115 = vadd.f32 %v5954, %v6114
      %v6116 = vpop.f32.mrb[0].mxu0
      %6117 = vmatprep.mubr.bf16.mxu0 %v2532
      %6118 = vmatmul.mubr.bf16.gmra.mrb[0].mxu0 %v2531
      %v6119 = vpop.f32.mrb[0].mxu0
      %v6120 = vadd.f32 %v5959, %v6119
      %v6121 = vpop.f32.mrb[0].mxu0
      %v6122 = vpop.f32.mrb[0].mxu0
      %v6123 = vadd.f32 %v5962, %v6122
      %v6124 = vpop.f32.mrb[0].mxu0
      %6125 = vmatprep.mubr.bf16.mxu0 %v2557
      %6126 = vmatmul.mubr.bf16.gmra.mrb[0].mxu0 %v2556
      %v6127 = vpop.f32.mrb[0].mxu0
      %v6128 = vadd.f32 %v5967, %v6127
      %v6129 = vpop.f32.mrb[0].mxu0
      %v6130 = vpop.f32.mrb[0].mxu0
      %v6131 = vadd.f32 %v5970, %v6130
      %v6132 = vpop.f32.mrb[0].mxu0
      %6133 = vmatprep.mubr.bf16.mxu0 %v2582
      %6134 = vmatmul.mubr.bf16.gmra.mrb[0].mxu0 %v2581
      %v6135 = vpop.f32.mrb[0].mxu0
      %v6136 = vadd.f32 %v5975, %v6135
      %v6137 = vpop.f32.mrb[0].mxu0
      %v6138 = vpop.f32.mrb[0].mxu0
      %v6139 = vadd.f32 %v5978, %v6138
      %v6140 = vpop.f32.mrb[0].mxu0
      %6141 = vmatprep.mubr.bf16.mxu0 %v2607
      %6142 = vmatmul.mubr.bf16.gmra.mrb[0].mxu0 %v2606
      %v6143 = vpop.f32.mrb[0].mxu0
      %v6144 = vadd.f32 %v5983, %v6143
      %v6145 = vpop.f32.mrb[0].mxu0
      %v6146 = vpop.f32.mrb[0].mxu0
      %v6147 = vadd.f32 %v5986, %v6146
      %v6148 = vpop.f32.mrb[0].mxu0
      %6149 = vdwg.mxu0
      %6150 = vmatprep.subr.bf16.mxu0 0
      %6151 = vmatpush1.bf16.msra.mxu0 %v3969
      %6152 = vmatprep.subr.bf16.mxu0 0
      %6153 = vmatpush1.bf16.msra.mxu0 %v3970
      %6154 = vmatprep.subr.bf16.mxu0 0
      %6155 = vmatpush1.bf16.msra.mxu0 %v3971
      %6156 = vmatprep.subr.bf16.mxu0 0
      %6157 = vmatpush1.bf16.msra.mxu0 %v3972
      %6158 = vmatprep.subr.bf16.mxu0 0
      %6159 = vmatpush1.bf16.msra.mxu0 0
      %6160 = vmatprep.subr.bf16.mxu0 0
      %6161 = vmatpush1.bf16.msra.mxu0 0
      %6162 = vmatprep.subr.bf16.mxu0 0
      %6163 = vmatpush1.bf16.msra.mxu0 0
      %6164 = vmatprep.subr.bf16.mxu0 0
      %6165 = vmatpush1.bf16.msra.mxu0 0
      %6166 = vmatprep.subr.bf16.mxu0 0
      %6167 = vmatpush1.bf16.msra.mxu0 0
      %6168 = vmatprep.subr.bf16.mxu0 0
      %6169 = vmatpush1.bf16.msra.mxu0 0
      %6170 = vmatprep.subr.bf16.mxu0 0
      %6171 = vmatpush1.bf16.msra.mxu0 0
      %6172 = vmatprep.subr.bf16.mxu0 0
      %6173 = vmatpush1.bf16.msra.mxu0 0
      %6174 = vmatprep.subr.bf16.mxu0 0
      %6175 = vmatpush1.bf16.msra.mxu0 0
      %6176 = vmatprep.subr.bf16.mxu0 0
      %6177 = vmatpush1.bf16.msra.mxu0 0
      %6178 = vmatprep.subr.bf16.mxu0 0
      %6179 = vmatpush1.bf16.msra.mxu0 0
      %6180 = vmatprep.subr.bf16.mxu0 0
      %6181 = vmatpush1.bf16.msra.mxu0 0
      %6182 = vmatprep.mubr.bf16.mxu0 0
      %6183 = vmatmul.mubr.bf16.gmra.mrb[0].mxu0 %v4171
      %v6184 = vpop.f32.mrb[0].mxu0
      %v6185 = vadd.f32 %v6024, %v6184
      %v6186 = vpop.f32.mrb[0].mxu0
      %v6187 = vpop.f32.mrb[0].mxu0
      %v6188 = vadd.f32 %v6027, %v6187
      %v6189 = vpop.f32.mrb[0].mxu0
      %6190 = vmatprep.mubr.bf16.mxu0 0
      %6191 = vmatmul.mubr.bf16.gmra.mrb[0].mxu0 %v4174
      %v6192 = vpop.f32.mrb[0].mxu0
      %v6193 = vadd.f32 %v6032, %v6192
      %v6194 = vpop.f32.mrb[0].mxu0
      %v6195 = vpop.f32.mrb[0].mxu0
      %v6196 = vadd.f32 %v6035, %v6195
      %v6197 = vpop.f32.mrb[0].mxu0
      %6198 = vmatprep.mubr.bf16.mxu0 0
      %6199 = vmatmul.mubr.bf16.gmra.mrb[0].mxu0 %v4177
      %v6200 = vpop.f32.mrb[0].mxu0
      %v6201 = vadd.f32 %v6040, %v6200
      %v6202 = vpop.f32.mrb[0].mxu0
      %v6203 = vpop.f32.mrb[0].mxu0
      %v6204 = vadd.f32 %v6043, %v6203
      %v6205 = vpop.f32.mrb[0].mxu0
      %6206 = vmatprep.mubr.bf16.mxu0 0
      %6207 = vmatmul.mubr.bf16.gmra.mrb[0].mxu0 %v4180
      %v6208 = vpop.f32.mrb[0].mxu0
      %v6209 = vadd.f32 %v6048, %v6208
      %v6210 = vpop.f32.mrb[0].mxu0
      %v6211 = vpop.f32.mrb[0].mxu0
      %v6212 = vadd.f32 %v6051, %v6211
      %v6213 = vpop.f32.mrb[0].mxu0
      %6214 = vmatprep.mubr.bf16.mxu0 0
      %6215 = vmatmul.mubr.bf16.gmra.mrb[0].mxu0 %v4183
      %v6216 = vpop.f32.mrb[0].mxu0
      %v6217 = vadd.f32 %v6056, %v6216
      %v6218 = vpop.f32.mrb[0].mxu0
      %v6219 = vpop.f32.mrb[0].mxu0
      %v6220 = vadd.f32 %v6059, %v6219
      %v6221 = vpop.f32.mrb[0].mxu0
      %6222 = vmatprep.mubr.bf16.mxu0 0
      %6223 = vmatmul.mubr.bf16.gmra.mrb[0].mxu0 %v4186
      %v6224 = vpop.f32.mrb[0].mxu0
      %v6225 = vadd.f32 %v6064, %v6224
      %v6226 = vpop.f32.mrb[0].mxu0
      %v6227 = vpop.f32.mrb[0].mxu0
      %v6228 = vadd.f32 %v6067, %v6227
      %v6229 = vpop.f32.mrb[0].mxu0
      %6230 = vmatprep.mubr.bf16.mxu0 0
      %6231 = vmatmul.mubr.bf16.gmra.mrb[0].mxu0 %v4189
      %v6232 = vpop.f32.mrb[0].mxu0
      %v6233 = vadd.f32 %v6072, %v6232
      %v6234 = vpop.f32.mrb[0].mxu0
      %v6235 = vpop.f32.mrb[0].mxu0
      %v6236 = vadd.f32 %v6075, %v6235
      %v6237 = vpop.f32.mrb[0].mxu0
      %6238 = vmatprep.mubr.bf16.mxu0 0
      %6239 = vmatmul.mubr.bf16.gmra.mrb[0].mxu0 %v4192
      %v6240 = vpop.f32.mrb[0].mxu0
      %v6241 = vadd.f32 %v6080, %v6240
      %v6242 = vpop.f32.mrb[0].mxu0
      %v6243 = vpop.f32.mrb[0].mxu0
      %v6244 = vadd.f32 %v6083, %v6243
      %v6245 = vpop.f32.mrb[0].mxu0
      %6246 = vmatprep.mubr.bf16.mxu0 0
      %6247 = vmatmul.mubr.bf16.gmra.mrb[0].mxu0 %v4195
      %v6248 = vpop.f32.mrb[0].mxu0
      %v6249 = vadd.f32 %v6088, %v6248
      %v6250 = vpop.f32.mrb[0].mxu0
      %v6251 = vpop.f32.mrb[0].mxu0
      %v6252 = vadd.f32 %v6091, %v6251
      %v6253 = vpop.f32.mrb[0].mxu0
      %6254 = vmatprep.mubr.bf16.mxu0 0
      %6255 = vmatmul.mubr.bf16.gmra.mrb[0].mxu0 %v4198
      %v6256 = vpop.f32.mrb[0].mxu0
      %v6257 = vadd.f32 %v6096, %v6256
      %v6258 = vpop.f32.mrb[0].mxu0
      %v6259 = vpop.f32.mrb[0].mxu0
      %v6260 = vadd.f32 %v6099, %v6259
      %v6261 = vpop.f32.mrb[0].mxu0
      %6262 = vmatprep.mubr.bf16.mxu0 0
      %6263 = vmatmul.mubr.bf16.gmra.mrb[0].mxu0 %v4201
      %v6264 = vpop.f32.mrb[0].mxu0
      %v6265 = vadd.f32 %v6104, %v6264
      %v6266 = vpop.f32.mrb[0].mxu0
      %v6267 = vpop.f32.mrb[0].mxu0
      %v6268 = vadd.f32 %v6107, %v6267
      %v6269 = vpop.f32.mrb[0].mxu0
      %6270 = vmatprep.mubr.bf16.mxu0 0
      %6271 = vmatmul.mubr.bf16.gmra.mrb[0].mxu0 %v4204
      %v6272 = vpop.f32.mrb[0].mxu0
      %v6273 = vadd.f32 %v6112, %v6272
      %v6274 = vpop.f32.mrb[0].mxu0
      %v6275 = vpop.f32.mrb[0].mxu0
      %v6276 = vadd.f32 %v6115, %v6275
      %v6277 = vpop.f32.mrb[0].mxu0
      %6278 = vmatprep.mubr.bf16.mxu0 0
      %6279 = vmatmul.mubr.bf16.gmra.mrb[0].mxu0 %v4207
      %v6280 = vpop.f32.mrb[0].mxu0
      %v6281 = vadd.f32 %v6120, %v6280
      %v6282 = vpop.f32.mrb[0].mxu0
      %v6283 = vpop.f32.mrb[0].mxu0
      %v6284 = vadd.f32 %v6123, %v6283
      %v6285 = vpop.f32.mrb[0].mxu0
      %6286 = vmatprep.mubr.bf16.mxu0 0
      %6287 = vmatmul.mubr.bf16.gmra.mrb[0].mxu0 %v4210
      %v6288 = vpop.f32.mrb[0].mxu0
      %v6289 = vadd.f32 %v6128, %v6288
      %v6290 = vpop.f32.mrb[0].mxu0
      %v6291 = vpop.f32.mrb[0].mxu0
      %v6292 = vadd.f32 %v6131, %v6291
      %v6293 = vpop.f32.mrb[0].mxu0
      %6294 = vmatprep.mubr.bf16.mxu0 0
      %6295 = vmatmul.mubr.bf16.gmra.mrb[0].mxu0 %v4213
      %v6296 = vpop.f32.mrb[0].mxu0
      %v6297 = vadd.f32 %v6136, %v6296
      %v6298 = vpop.f32.mrb[0].mxu0
      %v6299 = vpop.f32.mrb[0].mxu0
      %v6300 = vadd.f32 %v6139, %v6299
      %v6301 = vpop.f32.mrb[0].mxu0
      %6302 = vmatprep.mubr.bf16.mxu0 0
      %6303 = vmatmul.mubr.bf16.gmra.mrb[0].mxu0 %v4216
      %v6304 = vpop.f32.mrb[0].mxu0
      %v6305 = vadd.f32 %v6144, %v6304
      %v6306 = vpop.f32.mrb[0].mxu0
      %v6307 = vpop.f32.mrb[0].mxu0
      %v6308 = vadd.f32 %v6147, %v6307
      %v6309 = vpop.f32.mrb[0].mxu0
      %6310 = vdwg.mxu0
      %vm6311 = vcmask 64512
      %6312 = vst.msk [vmem:[%s175] sm:$0xff] %vm6311, %v6185
      %6313 = vst.msk [vmem:[%s175 + $0x8] sm:$0xff] %vm6311, %v6188
      %6314 = vst.msk [vmem:[%s175 + $0x10] sm:$0xff] %vm6311, %v6193
      %6315 = vst.msk [vmem:[%s175 + $0x18] sm:$0xff] %vm6311, %v6196
      %6316 = vst.msk [vmem:[%s175 + $0x20] sm:$0xff] %vm6311, %v6201
      %6317 = vst.msk [vmem:[%s175 + $0x28] sm:$0xff] %vm6311, %v6204
      %6318 = vst.msk [vmem:[%s175 + $0x30] sm:$0xff] %vm6311, %v6209
      %6319 = vst.msk [vmem:[%s175 + $0x38] sm:$0xff] %vm6311, %v6212
      %6320 = vst.msk [vmem:[%s175 + $0x40] sm:$0xff] %vm6311, %v6217
      %6321 = vst.msk [vmem:[%s175 + $0x48] sm:$0xff] %vm6311, %v6220
      %6322 = vst.msk [vmem:[%s175 + $0x50] sm:$0xff] %vm6311, %v6225
      %6323 = vst.msk [vmem:[%s175 + $0x58] sm:$0xff] %vm6311, %v6228
      %6324 = vst.msk [vmem:[%s175 + $0x60] sm:$0xff] %vm6311, %v6233
      %6325 = vst.msk [vmem:[%s175 + $0x68] sm:$0xff] %vm6311, %v6236
      %6326 = vst.msk [vmem:[%s175 + $0x70] sm:$0xff] %vm6311, %v6241
      %6327 = vst.msk [vmem:[%s175 + $0x78] sm:$0xff] %vm6311, %v6244
      %6328 = vst.msk [vmem:[%s175 + $0x80] sm:$0xff] %vm6311, %v6249
      %6329 = vst.msk [vmem:[%s175 + $0x88] sm:$0xff] %vm6311, %v6252
      %6330 = vst.msk [vmem:[%s175 + $0x90] sm:$0xff] %vm6311, %v6257
      %6331 = vst.msk [vmem:[%s175 + $0x98] sm:$0xff] %vm6311, %v6260
      %6332 = vst.msk [vmem:[%s175 + $0xa0] sm:$0xff] %vm6311, %v6265
      %6333 = vst.msk [vmem:[%s175 + $0xa8] sm:$0xff] %vm6311, %v6268
      %6334 = vst.msk [vmem:[%s175 + $0xb0] sm:$0xff] %vm6311, %v6273
      %6335 = vst.msk [vmem:[%s175 + $0xb8] sm:$0xff] %vm6311, %v6276
      %6336 = vst.msk [vmem:[%s175 + $0xc0] sm:$0xff] %vm6311, %v6281
      %6337 = vst.msk [vmem:[%s175 + $0xc8] sm:$0xff] %vm6311, %v6284
      %6338 = vst.msk [vmem:[%s175 + $0xd0] sm:$0xff] %vm6311, %v6289
      %6339 = vst.msk [vmem:[%s175 + $0xd8] sm:$0xff] %vm6311, %v6292
      %6340 = vst.msk [vmem:[%s175 + $0xe0] sm:$0xff] %vm6311, %v6297
      %6341 = vst.msk [vmem:[%s175 + $0xe8] sm:$0xff] %vm6311, %v6300
      %6342 = vst.msk [vmem:[%s175 + $0xf0] sm:$0xff] %vm6311, %v6305
      %6343 = vst.msk [vmem:[%s175 + $0xf8] sm:$0xff] %vm6311, %v6308
      %s6344 = smul.u32 32, %s14
      %p6345 = scmp.lt.s32.totalorder %s6344, 63
      %s6346 = scalar_select %p6345, %s6344, 63
      %s6347 = smul.addr %s6346, 8
      %s6348 = scalar_lea.vmem %s3, %s6347
      // Predicated region
      $region33: #{tpu_custom_call.1} parent=31 // pred_check
        %p6349 = pneg %p100
      $region34: #{tpu_custom_call.1} parent=31 // pred_check_branch
        %6351 = sbr.rel (%p6349) target = $region36
      $region35: #{tpu_custom_call.1} parent=31 // pred_region
        %s6352 = smul.u32 32, %s14
      $region36: #{tpu_custom_call.1} parent=31 // pred_fallthru
        _
    $region32: #{tpu_custom_call.1} parent=5 // pred_fallthru
      _
    %p6353 = scmp.le.s32.totalorder 2, %s9
    // Predicated region
    $region37: #{tpu_custom_call.1} parent=5 // pred_check
      %p6354 = pneg %p6353
    $region38: #{tpu_custom_call.1} parent=5 // pred_check_branch
      %6356 = sbr.rel (%p6354) target = $region40
    $region39: #{tpu_custom_call.1} parent=5 // pred_region
      %s6357 = ssub.s32 %s9, 2
      // Predicated region
      $region41: #{tpu_custom_call.1} parent=39 // pred_check
        %p6358 = pneg %p106
      $region42: #{tpu_custom_call.1} parent=39 // pred_check_branch
        %6360 = sbr.rel (%p6358) target = $region44
      $region43: #{tpu_custom_call.1} parent=39 // pred_region
        %s6361 = smul.u32 32, %s15
        %p6362 = scmp.lt.s32.totalorder %s6361, 63
        %s6363 = scalar_select %p6362, %s6361, 63
        %s6364 = smul.addr %s6363, 8
        %s6365 = scalar_lea.vmem %s3, %s6364
      $region44: #{tpu_custom_call.1} parent=39 // pred_fallthru
        _
    $region40: #{tpu_custom_call.1} parent=5 // pred_fallthru
      _
  $region6: #{tpu_custom_call.1} parent=0 // loop_footer
    %s13 = sadd.s32 1, %s9
  $region7: #{tpu_custom_call.1} parent=0 // loop_footer_branch
    %8 = sbr.rel target = $region3
  $region8: #{tpu_custom_call.1} parent=0 // loop_exit
    _

</llo_original>
